<compile_context>
chip_gen: v7x
topology: tpu7x:2x2x1
jax: 0.10.0
libtpu: 0.0.40
codegen_flags: <defaults>
</compile_context>

<pallas_src>
import jax
import jax.numpy as jnp
from jax import lax
from jax.experimental import pallas as pl
from jax.experimental.pallas import tpu as pltpu

EPS = 1e-5  # adaIN eps (added to the std, matching the reference)


# ---------------------------------------------------------------------------
# Fused Pallas kernel (one batch element per grid step)
# ---------------------------------------------------------------------------
def _make_block_kernel(H, W, C):
    HW = H * W

    def _reflect_pad1(a):  # (H, W, C) -> (H+2, W+2, C), PyTorch 'reflect'
        a = jnp.concatenate([a[1:2], a, a[H - 2:H - 1]], axis=0)        # major dim
        a = jnp.concatenate([a[:, 1:2], a, a[:, W - 2:W - 1]], axis=1)  # sublane dim
        return a

    def _conv3x3(v, w_ref, b_ref):
        # v: (HW, C) f32.  Reflect-pad once, cast to bf16 ONCE, then 9 shifted
        # (HW, Cin) x (Cin, Cout) MXU dots with f32 accumulation; accumulator
        # is seeded by the first tap (no zeros + add).
        xp = _reflect_pad1(v.reshape(H, W, C)).astype(jnp.bfloat16)
        acc = None
        for s in range(9):
            dy, dx = s // 3, s % 3
            win = xp[dy:dy + H, dx:dx + W, :].reshape(HW, C)
            d = jnp.dot(win, w_ref[s], preferred_element_type=jnp.float32)
            acc = d if acc is None else acc + d
        return acc + b_ref[...].astype(jnp.float32)      # bias: (1, C) row

    def _adain_rows(v, mean_sty, std_sty):
        # v: (HW, C); style params (1, C) rows; torch-style unbiased std,
        # eps added to std.  Divide hoisted to a per-channel EUP reciprocal.
        mean_f = jnp.mean(v, axis=0, keepdims=True)
        var_f = jnp.sum((v - mean_f) ** 2, axis=0, keepdims=True) / (HW - 1)
        std_f = jnp.sqrt(var_f) + EPS
        scale = std_sty * pl.reciprocal(std_f, approx=True)   # (1, C)
        shift = mean_sty - mean_f * scale
        return v * scale + shift

    def _adain_cols(v, mean_sty, std_sty):
        # v: (C, HW) lane-dense; style params (C, 1) columns.
        mean_f = jnp.mean(v, axis=1, keepdims=True)
        var_f = jnp.sum((v - mean_f) ** 2, axis=1, keepdims=True) / (HW - 1)
        std_f = jnp.sqrt(var_f) + EPS
        scale = std_sty * pl.reciprocal(std_f, approx=True)   # (C, 1)
        shift = mean_sty - mean_f * scale
        return v * scale + shift

    def kernel(x_ref, w1_ref, b1_ref, w2_ref, b2_ref,
               m1r_ref, s1r_ref, m1c_ref, s1c_ref, o_ref):
        m1_row = m1r_ref[0, :, :]                        # (1, C)
        s1_row = s1r_ref[0, :, :]
        m1_col = m1c_ref[0, :, :]                        # (C, 1)
        s1_col = s1c_ref[0, :, :]

        x_hwc = x_ref[0, :, :].astype(jnp.float32).T     # (HW, C)  transpose #1
        out = _conv3x3(x_hwc, w1_ref, b1_ref)            # conv1  -> (HW, C)
        out = jnp.maximum(_adain_rows(out, m1_row, s1_row), 0.0)   # adaIN + ReLU
        out = _conv3x3(out, w2_ref, b2_ref)              # conv2  -> (HW, C)
        out = out.T                                      # (C, HW) transpose #2
        out = _adain_cols(out, m1_col, s1_col)           # adaIN (reuses mean1/std1)
        out = out + x_ref[0, :, :].astype(jnp.float32)   # residual, lane-dense
        o_ref[0, :, :] = out.astype(o_ref.dtype)         # lane-dense store

    return kernel


def _prep_conv_weight(w):
    # (Cout, Cin, 3, 3) -> (9, Cin, Cout) bf16, slot s = dy*3 + dx to match the
    # kernel's shifted-window loop.
    cout, cin, kh, kw = w.shape
    return jnp.transpose(w, (2, 3, 1, 0)).reshape(kh * kw, cin, cout).astype(jnp.bfloat16)


def adaptive_residual_block(x, params, mean1, std1, mean2, std2):
    """x: (N, C, H, W) NCHW; mean*/std*: (N, C, 1) adaIN style params.

    mean2/std2 are accepted for API parity but unused: the reference forward
    applies adaIN(mean1, std1) after BOTH convolutions (and never calls
    self.in1 / self.in2)."""
    del mean2, std2
    N, C, H, W = x.shape
    HW = H * W
    assert H >= 2 and W >= 2 and HW > 1, "reflect pad / unbiased std need H,W >= 2"

    x2 = x.reshape(N, C, HW)                                  # free view, stays NCHW
    w1 = _prep_conv_weight(params["w1"])
    w2 = _prep_conv_weight(params["w2"])
    b1 = params["b1"].reshape(1, C).astype(jnp.float32)
    b2 = params["b2"].reshape(1, C).astype(jnp.float32)
    m1_row = mean1.reshape(N, 1, C).astype(jnp.float32)       # for adaIN on (HW, C)
    s1_row = std1.reshape(N, 1, C).astype(jnp.float32)
    m1_col = mean1.reshape(N, C, 1).astype(jnp.float32)       # for adaIN on (C, HW)
    s1_col = std1.reshape(N, C, 1).astype(jnp.float32)

    kernel = _make_block_kernel(H, W, C)
    out = pl.pallas_call(
        kernel,
        out_shape=jax.ShapeDtypeStruct((N, C, HW), x.dtype),
        grid=(N,),
        in_specs=[
            pl.BlockSpec((1, C, HW), lambda b: (b, 0, 0)),    # x (lane-dense)
            pl.BlockSpec((9, C, C), lambda b: (0, 0, 0)),     # w1
            pl.BlockSpec((1, C), lambda b: (0, 0)),           # b1
            pl.BlockSpec((9, C, C), lambda b: (0, 0, 0)),     # w2
            pl.BlockSpec((1, C), lambda b: (0, 0)),           # b2
            pl.BlockSpec((1, 1, C), lambda b: (b, 0, 0)),     # mean1 row form
            pl.BlockSpec((1, 1, C), lambda b: (b, 0, 0)),     # std1  row form
            pl.BlockSpec((1, C, 1), lambda b: (b, 0, 0)),     # mean1 col form
            pl.BlockSpec((1, C, 1), lambda b: (b, 0, 0)),     # std1  col form
        ],
        out_specs=pl.BlockSpec((1, C, HW), lambda b: (b, 0, 0)),
        compiler_params=pltpu.CompilerParams(dimension_semantics=("parallel",)),
    )(x2, w1, b1, w2, b2, m1_row, s1_row, m1_col, s1_col)
    return out.reshape(N, C, H, W)


# ---------------------------------------------------------------------------
# Parameter preprocessing + pure-JAX reference for self-verification
# ---------------------------------------------------------------------------
def spectral_normalize(w, key, n_iter=30, eps=1e-12):
    # NOTE: PyTorch's nn.utils.spectral_norm keeps a persistent `u` and does
    # one power iteration per forward; here the normalized (effective) weight
    # is precomputed once -- the conv math for a given effective weight is
    # identical, so kernel semantics are unaffected.
    cout = w.shape[0]
    w_mat = w.reshape(cout, -1)
    u = jax.random.normal(key, (cout,), w.dtype)
    u = u / (jnp.linalg.norm(u) + eps)
    v = None
    for _ in range(n_iter):
        v = w_mat.T @ u
        v = v / (jnp.linalg.norm(v) + eps)
        u = w_mat @ v
        u = u / (jnp.linalg.norm(u) + eps)
    sigma = u @ (w_mat @ v)
    return w / sigma


def adaptive_residual_block_ref(x, params, mean1, std1, mean2, std2):
    del mean2, std2

    def conv_ref(t, w, b):
        tp = jnp.pad(t, ((0, 0), (0, 0), (1, 1), (1, 1)), mode="reflect")
        out = lax.conv_general_dilated(
            tp, w, (1, 1), "VALID",
            dimension_numbers=("NCHW", "OIHW", "NCHW"),
            precision=lax.Precision.HIGHEST)
        return out + b.reshape(1, -1, 1, 1)

    def adain_ref(f, m, s):
        B, C, H, W = f.shape
        ff = f.reshape(B, C, H * W)
        mu = ff.mean(axis=2, keepdims=True)
        sd = jnp.sqrt(((ff - mu) ** 2).sum(axis=2, keepdims=True) / (H * W - 1)) + EPS
        return (s * (ff - mu) / sd + m).reshape(B, C, H, W)

    out = conv_ref(x, params["w1"], params["b1"])
    out = jnp.maximum(adain_ref(out, mean1, std1), 0.0)
    out = conv_ref(out, params["w2"], params["b2"])
    out = adain_ref(out, mean1, std1)   # reference forward reuses mean1/std1
    return out + x


if __name__ == "__main__":
    key = jax.random.PRNGKey(0)
    ks = jax.random.split(key, 12)
    N, C, H, W = 2, 8, 16, 16

    x = jax.random.normal(ks[0], (N, C, H, W), jnp.float32)
    w1 = spectral_normalize(0.2 * jax.random.normal(ks[1], (C, C, 3, 3), jnp.float32), ks[2])
    w2 = spectral_normalize(0.2 * jax.random.normal(ks[3], (C, C, 3, 3), jnp.float32), ks[4])
    params = {
        "w1": w1,
        "b1": 0.05 * jax.random.normal(ks[5], (C,), jnp.float32),
        "w2": w2,
        "b2": 0.05 * jax.random.normal(ks[6], (C,), jnp.float32),
    }
    mean1 = 0.2 * jax.random.normal(ks[7], (N, C, 1), jnp.float32)
    std1 = 1.0 + 0.2 * jax.random.normal(ks[8], (N, C, 1), jnp.float32)
    mean2 = 0.2 * jax.random.normal(ks[9], (N, C, 1), jnp.float32)    # unused by forward
    std2 = 1.0 + 0.2 * jax.random.normal(ks[10], (N, C, 1), jnp.float32)

    fwd = jax.jit(adaptive_residual_block)
    out = fwd(x, params, mean1, std1, mean2, std2)
    jax.block_until_ready(out)

    ref = adaptive_residual_block_ref(x, params, mean1, std1, mean2, std2)
    assert out.shape == (N, C, H, W), out.shape
    # Tolerance accounts for bf16 MXU feeds + the approx (EUP) adaIN reciprocal
    # vs the f32 HIGHEST-precision reference.
    max_err = float(jnp.max(jnp.abs(out - ref)))
    assert jnp.allclose(out, ref, atol=3e-2, rtol=3e-2), max_err

    print("KERNEL_OK")
</pallas_src>

<mosaic_0001>
module attributes {stable_mosaic.version = 11 : i64} {
  func.func @kernel(%arg0: i32, %arg1: memref<1x8x256xf32, #tpu.memory_space<vmem>>, %arg2: memref<9x8x8xbf16, #tpu.memory_space<vmem>>, %arg3: memref<1x8xf32, #tpu.memory_space<vmem>>, %arg4: memref<9x8x8xbf16, #tpu.memory_space<vmem>>, %arg5: memref<1x8xf32, #tpu.memory_space<vmem>>, %arg6: memref<1x1x8xf32, #tpu.memory_space<vmem>>, %arg7: memref<1x1x8xf32, #tpu.memory_space<vmem>>, %arg8: memref<1x8x1xf32, #tpu.memory_space<vmem>>, %arg9: memref<1x8x1xf32, #tpu.memory_space<vmem>>, %arg10: memref<1x8x256xf32, #tpu.memory_space<vmem>>) attributes {dimension_semantics = [#tpu.dimension_semantics<parallel>], iteration_bounds = array<i64: 2>, scalar_prefetch = 0 : i64, scratch_operands = 0 : i64, tpu.core_type = #tpu.core_type<tc>, window_params = [{transform_indices = @transform_0, window_bounds = array<i64: 1, 8, 256>}, {pipeline_mode = #tpu.pipeline_mode<synchronous>, transform_indices = @transform_1, window_bounds = array<i64: 9, 8, 8>}, {pipeline_mode = #tpu.pipeline_mode<synchronous>, transform_indices = @transform_2, window_bounds = array<i64: 1, 8>}, {pipeline_mode = #tpu.pipeline_mode<synchronous>, transform_indices = @transform_3, window_bounds = array<i64: 9, 8, 8>}, {pipeline_mode = #tpu.pipeline_mode<synchronous>, transform_indices = @transform_4, window_bounds = array<i64: 1, 8>}, {transform_indices = @transform_5, window_bounds = array<i64: 1, 1, 8>}, {transform_indices = @transform_6, window_bounds = array<i64: 1, 1, 8>}, {transform_indices = @transform_7, window_bounds = array<i64: 1, 8, 1>}, {transform_indices = @transform_8, window_bounds = array<i64: 1, 8, 1>}, {transform_indices = @transform_9, window_bounds = array<i64: 1, 8, 256>}]} {
    %c0 = arith.constant 0 : index
    %c0_0 = arith.constant 0 : index
    %c0_1 = arith.constant 0 : index
    %0 = vector.load %arg6[%c0, %c0_0, %c0_1] : memref<1x1x8xf32, #tpu.memory_space<vmem>>, vector<1x1x8xf32>
    %1 = vector.shape_cast %0 : vector<1x1x8xf32> to vector<1x8xf32>
    %c0_2 = arith.constant 0 : index
    %c0_3 = arith.constant 0 : index
    %c0_4 = arith.constant 0 : index
    %2 = vector.load %arg7[%c0_2, %c0_3, %c0_4] : memref<1x1x8xf32, #tpu.memory_space<vmem>>, vector<1x1x8xf32>
    %3 = vector.shape_cast %2 : vector<1x1x8xf32> to vector<1x8xf32>
    %c0_5 = arith.constant 0 : index
    %c0_6 = arith.constant 0 : index
    %c0_7 = arith.constant 0 : index
    %4 = vector.load %arg8[%c0_5, %c0_6, %c0_7] : memref<1x8x1xf32, #tpu.memory_space<vmem>>, vector<1x8x1xf32>
    %5 = vector.shape_cast %4 : vector<1x8x1xf32> to vector<8x1xf32>
    %c0_8 = arith.constant 0 : index
    %c0_9 = arith.constant 0 : index
    %c0_10 = arith.constant 0 : index
    %6 = vector.load %arg9[%c0_8, %c0_9, %c0_10] : memref<1x8x1xf32, #tpu.memory_space<vmem>>, vector<1x8x1xf32>
    %7 = vector.shape_cast %6 : vector<1x8x1xf32> to vector<8x1xf32>
    %c0_11 = arith.constant 0 : index
    %c0_12 = arith.constant 0 : index
    %c0_13 = arith.constant 0 : index
    %8 = vector.load %arg1[%c0_11, %c0_12, %c0_13] : memref<1x8x256xf32, #tpu.memory_space<vmem>>, vector<1x8x256xf32>
    %9 = vector.shape_cast %8 : vector<1x8x256xf32> to vector<8x256xf32>
    %10 = tpu.transpose %9, [1, 0] : vector<8x256xf32> -> vector<256x8xf32>
    %11 = vector.shape_cast %10 : vector<256x8xf32> to vector<16x16x8xf32>
    %12 = vector.extract_strided_slice %11 {offsets = [1, 0, 0], sizes = [1, 16, 8], strides = [1, 1, 1]} : vector<16x16x8xf32> to vector<1x16x8xf32>
    %13 = vector.extract_strided_slice %11 {offsets = [14, 0, 0], sizes = [1, 16, 8], strides = [1, 1, 1]} : vector<16x16x8xf32> to vector<1x16x8xf32>
    %14 = tpu.concatenate %12, %11, %13 in 0 : vector<1x16x8xf32>, vector<16x16x8xf32>, vector<1x16x8xf32> -> vector<18x16x8xf32>
    %15 = vector.extract_strided_slice %14 {offsets = [0, 1, 0], sizes = [18, 1, 8], strides = [1, 1, 1]} : vector<18x16x8xf32> to vector<18x1x8xf32>
    %16 = vector.extract_strided_slice %14 {offsets = [0, 14, 0], sizes = [18, 1, 8], strides = [1, 1, 1]} : vector<18x16x8xf32> to vector<18x1x8xf32>
    %17 = tpu.concatenate %15, %14, %16 in 1 : vector<18x1x8xf32>, vector<18x16x8xf32>, vector<18x1x8xf32> -> vector<18x18x8xf32>
    %18 = arith.truncf %17 : vector<18x18x8xf32> to vector<18x18x8xbf16>
    %19 = vector.extract_strided_slice %18 {offsets = [0, 0, 0], sizes = [16, 16, 8], strides = [1, 1, 1]} : vector<18x18x8xbf16> to vector<16x16x8xbf16>
    %20 = vector.shape_cast %19 : vector<16x16x8xbf16> to vector<256x8xbf16>
    %c0_14 = arith.constant 0 : index
    %c0_15 = arith.constant 0 : index
    %c0_16 = arith.constant 0 : index
    %21 = vector.load %arg2[%c0_14, %c0_15, %c0_16] : memref<9x8x8xbf16, #tpu.memory_space<vmem>>, vector<1x8x8xbf16>
    %22 = vector.shape_cast %21 : vector<1x8x8xbf16> to vector<8x8xbf16>
    %cst = arith.constant dense<0.000000e+00> : vector<256x8xf32>
    %23 = tpu.matmul %20, %22, %cst {dimension_numbers = #tpu.dot_dimension_numbers<[1], [0], [0], [1], [0, 0, 1, 1], [], []>} : vector<256x8xbf16>, vector<8x8xbf16>, vector<256x8xf32> -> vector<256x8xf32>
    %24 = vector.extract_strided_slice %18 {offsets = [0, 1, 0], sizes = [16, 16, 8], strides = [1, 1, 1]} : vector<18x18x8xbf16> to vector<16x16x8xbf16>
    %25 = vector.shape_cast %24 : vector<16x16x8xbf16> to vector<256x8xbf16>
    %c1 = arith.constant 1 : index
    %c0_17 = arith.constant 0 : index
    %c0_18 = arith.constant 0 : index
    %26 = vector.load %arg2[%c1, %c0_17, %c0_18] : memref<9x8x8xbf16, #tpu.memory_space<vmem>>, vector<1x8x8xbf16>
    %27 = vector.shape_cast %26 : vector<1x8x8xbf16> to vector<8x8xbf16>
    %cst_19 = arith.constant dense<0.000000e+00> : vector<256x8xf32>
    %28 = tpu.matmul %25, %27, %cst_19 {dimension_numbers = #tpu.dot_dimension_numbers<[1], [0], [0], [1], [0, 0, 1, 1], [], []>} : vector<256x8xbf16>, vector<8x8xbf16>, vector<256x8xf32> -> vector<256x8xf32>
    %29 = arith.addf %23, %28 : vector<256x8xf32>
    %30 = vector.extract_strided_slice %18 {offsets = [0, 2, 0], sizes = [16, 16, 8], strides = [1, 1, 1]} : vector<18x18x8xbf16> to vector<16x16x8xbf16>
    %31 = vector.shape_cast %30 : vector<16x16x8xbf16> to vector<256x8xbf16>
    %c2 = arith.constant 2 : index
    %c0_20 = arith.constant 0 : index
    %c0_21 = arith.constant 0 : index
    %32 = vector.load %arg2[%c2, %c0_20, %c0_21] : memref<9x8x8xbf16, #tpu.memory_space<vmem>>, vector<1x8x8xbf16>
    %33 = vector.shape_cast %32 : vector<1x8x8xbf16> to vector<8x8xbf16>
    %cst_22 = arith.constant dense<0.000000e+00> : vector<256x8xf32>
    %34 = tpu.matmul %31, %33, %cst_22 {dimension_numbers = #tpu.dot_dimension_numbers<[1], [0], [0], [1], [0, 0, 1, 1], [], []>} : vector<256x8xbf16>, vector<8x8xbf16>, vector<256x8xf32> -> vector<256x8xf32>
    %35 = arith.addf %29, %34 : vector<256x8xf32>
    %36 = vector.extract_strided_slice %18 {offsets = [1, 0, 0], sizes = [16, 16, 8], strides = [1, 1, 1]} : vector<18x18x8xbf16> to vector<16x16x8xbf16>
    %37 = vector.shape_cast %36 : vector<16x16x8xbf16> to vector<256x8xbf16>
    %c3 = arith.constant 3 : index
    %c0_23 = arith.constant 0 : index
    %c0_24 = arith.constant 0 : index
    %38 = vector.load %arg2[%c3, %c0_23, %c0_24] : memref<9x8x8xbf16, #tpu.memory_space<vmem>>, vector<1x8x8xbf16>
    %39 = vector.shape_cast %38 : vector<1x8x8xbf16> to vector<8x8xbf16>
    %cst_25 = arith.constant dense<0.000000e+00> : vector<256x8xf32>
    %40 = tpu.matmul %37, %39, %cst_25 {dimension_numbers = #tpu.dot_dimension_numbers<[1], [0], [0], [1], [0, 0, 1, 1], [], []>} : vector<256x8xbf16>, vector<8x8xbf16>, vector<256x8xf32> -> vector<256x8xf32>
    %41 = arith.addf %35, %40 : vector<256x8xf32>
    %42 = vector.extract_strided_slice %18 {offsets = [1, 1, 0], sizes = [16, 16, 8], strides = [1, 1, 1]} : vector<18x18x8xbf16> to vector<16x16x8xbf16>
    %43 = vector.shape_cast %42 : vector<16x16x8xbf16> to vector<256x8xbf16>
    %c4 = arith.constant 4 : index
    %c0_26 = arith.constant 0 : index
    %c0_27 = arith.constant 0 : index
    %44 = vector.load %arg2[%c4, %c0_26, %c0_27] : memref<9x8x8xbf16, #tpu.memory_space<vmem>>, vector<1x8x8xbf16>
    %45 = vector.shape_cast %44 : vector<1x8x8xbf16> to vector<8x8xbf16>
    %cst_28 = arith.constant dense<0.000000e+00> : vector<256x8xf32>
    %46 = tpu.matmul %43, %45, %cst_28 {dimension_numbers = #tpu.dot_dimension_numbers<[1], [0], [0], [1], [0, 0, 1, 1], [], []>} : vector<256x8xbf16>, vector<8x8xbf16>, vector<256x8xf32> -> vector<256x8xf32>
    %47 = arith.addf %41, %46 : vector<256x8xf32>
    %48 = vector.extract_strided_slice %18 {offsets = [1, 2, 0], sizes = [16, 16, 8], strides = [1, 1, 1]} : vector<18x18x8xbf16> to vector<16x16x8xbf16>
    %49 = vector.shape_cast %48 : vector<16x16x8xbf16> to vector<256x8xbf16>
    %c5 = arith.constant 5 : index
    %c0_29 = arith.constant 0 : index
    %c0_30 = arith.constant 0 : index
    %50 = vector.load %arg2[%c5, %c0_29, %c0_30] : memref<9x8x8xbf16, #tpu.memory_space<vmem>>, vector<1x8x8xbf16>
    %51 = vector.shape_cast %50 : vector<1x8x8xbf16> to vector<8x8xbf16>
    %cst_31 = arith.constant dense<0.000000e+00> : vector<256x8xf32>
    %52 = tpu.matmul %49, %51, %cst_31 {dimension_numbers = #tpu.dot_dimension_numbers<[1], [0], [0], [1], [0, 0, 1, 1], [], []>} : vector<256x8xbf16>, vector<8x8xbf16>, vector<256x8xf32> -> vector<256x8xf32>
    %53 = arith.addf %47, %52 : vector<256x8xf32>
    %54 = vector.extract_strided_slice %18 {offsets = [2, 0, 0], sizes = [16, 16, 8], strides = [1, 1, 1]} : vector<18x18x8xbf16> to vector<16x16x8xbf16>
    %55 = vector.shape_cast %54 : vector<16x16x8xbf16> to vector<256x8xbf16>
    %c6 = arith.constant 6 : index
    %c0_32 = arith.constant 0 : index
    %c0_33 = arith.constant 0 : index
    %56 = vector.load %arg2[%c6, %c0_32, %c0_33] : memref<9x8x8xbf16, #tpu.memory_space<vmem>>, vector<1x8x8xbf16>
    %57 = vector.shape_cast %56 : vector<1x8x8xbf16> to vector<8x8xbf16>
    %cst_34 = arith.constant dense<0.000000e+00> : vector<256x8xf32>
    %58 = tpu.matmul %55, %57, %cst_34 {dimension_numbers = #tpu.dot_dimension_numbers<[1], [0], [0], [1], [0, 0, 1, 1], [], []>} : vector<256x8xbf16>, vector<8x8xbf16>, vector<256x8xf32> -> vector<256x8xf32>
    %59 = arith.addf %53, %58 : vector<256x8xf32>
    %60 = vector.extract_strided_slice %18 {offsets = [2, 1, 0], sizes = [16, 16, 8], strides = [1, 1, 1]} : vector<18x18x8xbf16> to vector<16x16x8xbf16>
    %61 = vector.shape_cast %60 : vector<16x16x8xbf16> to vector<256x8xbf16>
    %c7 = arith.constant 7 : index
    %c0_35 = arith.constant 0 : index
    %c0_36 = arith.constant 0 : index
    %62 = vector.load %arg2[%c7, %c0_35, %c0_36] : memref<9x8x8xbf16, #tpu.memory_space<vmem>>, vector<1x8x8xbf16>
    %63 = vector.shape_cast %62 : vector<1x8x8xbf16> to vector<8x8xbf16>
    %cst_37 = arith.constant dense<0.000000e+00> : vector<256x8xf32>
    %64 = tpu.matmul %61, %63, %cst_37 {dimension_numbers = #tpu.dot_dimension_numbers<[1], [0], [0], [1], [0, 0, 1, 1], [], []>} : vector<256x8xbf16>, vector<8x8xbf16>, vector<256x8xf32> -> vector<256x8xf32>
    %65 = arith.addf %59, %64 : vector<256x8xf32>
    %66 = vector.extract_strided_slice %18 {offsets = [2, 2, 0], sizes = [16, 16, 8], strides = [1, 1, 1]} : vector<18x18x8xbf16> to vector<16x16x8xbf16>
    %67 = vector.shape_cast %66 : vector<16x16x8xbf16> to vector<256x8xbf16>
    %c8 = arith.constant 8 : index
    %c0_38 = arith.constant 0 : index
    %c0_39 = arith.constant 0 : index
    %68 = vector.load %arg2[%c8, %c0_38, %c0_39] : memref<9x8x8xbf16, #tpu.memory_space<vmem>>, vector<1x8x8xbf16>
    %69 = vector.shape_cast %68 : vector<1x8x8xbf16> to vector<8x8xbf16>
    %cst_40 = arith.constant dense<0.000000e+00> : vector<256x8xf32>
    %70 = tpu.matmul %67, %69, %cst_40 {dimension_numbers = #tpu.dot_dimension_numbers<[1], [0], [0], [1], [0, 0, 1, 1], [], []>} : vector<256x8xbf16>, vector<8x8xbf16>, vector<256x8xf32> -> vector<256x8xf32>
    %71 = arith.addf %65, %70 : vector<256x8xf32>
    %c0_41 = arith.constant 0 : index
    %c0_42 = arith.constant 0 : index
    %72 = vector.load %arg3[%c0_41, %c0_42] : memref<1x8xf32, #tpu.memory_space<vmem>>, vector<1x8xf32>
    %73 = vector.broadcast %72 : vector<1x8xf32> to vector<256x8xf32>
    %74 = arith.addf %71, %73 : vector<256x8xf32>
    %cst_43 = arith.constant dense<0.000000e+00> : vector<8xf32>
    %75 = vector.multi_reduction <add>, %74, %cst_43 [0] : vector<256x8xf32> to vector<8xf32>
    %76 = vector.shape_cast %75 : vector<8xf32> to vector<1x8xf32>
    %cst_44 = arith.constant 2.560000e+02 : f32
    %77 = vector.broadcast %cst_44 : f32 to vector<1x8xf32>
    %78 = arith.divf %76, %77 : vector<1x8xf32>
    %79 = vector.broadcast %78 : vector<1x8xf32> to vector<256x8xf32>
    %80 = arith.subf %74, %79 : vector<256x8xf32>
    %81 = arith.mulf %80, %80 : vector<256x8xf32>
    %cst_45 = arith.constant dense<0.000000e+00> : vector<8xf32>
    %82 = vector.multi_reduction <add>, %81, %cst_45 [0] : vector<256x8xf32> to vector<8xf32>
    %83 = vector.shape_cast %82 : vector<8xf32> to vector<1x8xf32>
    %cst_46 = arith.constant 2.550000e+02 : f32
    %84 = vector.broadcast %cst_46 : f32 to vector<1x8xf32>
    %85 = arith.divf %83, %84 : vector<1x8xf32>
    %86 = math.sqrt %85 : vector<1x8xf32>
    %cst_47 = arith.constant 9.99999974E-6 : f32
    %87 = vector.broadcast %cst_47 : f32 to vector<1x8xf32>
    %88 = arith.addf %86, %87 : vector<1x8xf32>
    %89 = tpu.reciprocal %88 {approx = true} : vector<1x8xf32> -> vector<1x8xf32>
    %90 = arith.mulf %3, %89 : vector<1x8xf32>
    %91 = arith.mulf %78, %90 : vector<1x8xf32>
    %92 = arith.subf %1, %91 : vector<1x8xf32>
    %93 = vector.broadcast %90 : vector<1x8xf32> to vector<256x8xf32>
    %94 = arith.mulf %74, %93 : vector<256x8xf32>
    %95 = vector.broadcast %92 : vector<1x8xf32> to vector<256x8xf32>
    %96 = arith.addf %94, %95 : vector<256x8xf32>
    %cst_48 = arith.constant 0.000000e+00 : f32
    %97 = vector.broadcast %cst_48 : f32 to vector<256x8xf32>
    %98 = arith.maximumf %96, %97 : vector<256x8xf32>
    %99 = vector.shape_cast %98 : vector<256x8xf32> to vector<16x16x8xf32>
    %100 = vector.extract_strided_slice %99 {offsets = [1, 0, 0], sizes = [1, 16, 8], strides = [1, 1, 1]} : vector<16x16x8xf32> to vector<1x16x8xf32>
    %101 = vector.extract_strided_slice %99 {offsets = [14, 0, 0], sizes = [1, 16, 8], strides = [1, 1, 1]} : vector<16x16x8xf32> to vector<1x16x8xf32>
    %102 = tpu.concatenate %100, %99, %101 in 0 : vector<1x16x8xf32>, vector<16x16x8xf32>, vector<1x16x8xf32> -> vector<18x16x8xf32>
    %103 = vector.extract_strided_slice %102 {offsets = [0, 1, 0], sizes = [18, 1, 8], strides = [1, 1, 1]} : vector<18x16x8xf32> to vector<18x1x8xf32>
    %104 = vector.extract_strided_slice %102 {offsets = [0, 14, 0], sizes = [18, 1, 8], strides = [1, 1, 1]} : vector<18x16x8xf32> to vector<18x1x8xf32>
    %105 = tpu.concatenate %103, %102, %104 in 1 : vector<18x1x8xf32>, vector<18x16x8xf32>, vector<18x1x8xf32> -> vector<18x18x8xf32>
    %106 = arith.truncf %105 : vector<18x18x8xf32> to vector<18x18x8xbf16>
    %107 = vector.extract_strided_slice %106 {offsets = [0, 0, 0], sizes = [16, 16, 8], strides = [1, 1, 1]} : vector<18x18x8xbf16> to vector<16x16x8xbf16>
    %108 = vector.shape_cast %107 : vector<16x16x8xbf16> to vector<256x8xbf16>
    %c0_49 = arith.constant 0 : index
    %c0_50 = arith.constant 0 : index
    %c0_51 = arith.constant 0 : index
    %109 = vector.load %arg4[%c0_49, %c0_50, %c0_51] : memref<9x8x8xbf16, #tpu.memory_space<vmem>>, vector<1x8x8xbf16>
    %110 = vector.shape_cast %109 : vector<1x8x8xbf16> to vector<8x8xbf16>
    %cst_52 = arith.constant dense<0.000000e+00> : vector<256x8xf32>
    %111 = tpu.matmul %108, %110, %cst_52 {dimension_numbers = #tpu.dot_dimension_numbers<[1], [0], [0], [1], [0, 0, 1, 1], [], []>} : vector<256x8xbf16>, vector<8x8xbf16>, vector<256x8xf32> -> vector<256x8xf32>
    %112 = vector.extract_strided_slice %106 {offsets = [0, 1, 0], sizes = [16, 16, 8], strides = [1, 1, 1]} : vector<18x18x8xbf16> to vector<16x16x8xbf16>
    %113 = vector.shape_cast %112 : vector<16x16x8xbf16> to vector<256x8xbf16>
    %c1_53 = arith.constant 1 : index
    %c0_54 = arith.constant 0 : index
    %c0_55 = arith.constant 0 : index
    %114 = vector.load %arg4[%c1_53, %c0_54, %c0_55] : memref<9x8x8xbf16, #tpu.memory_space<vmem>>, vector<1x8x8xbf16>
    %115 = vector.shape_cast %114 : vector<1x8x8xbf16> to vector<8x8xbf16>
    %cst_56 = arith.constant dense<0.000000e+00> : vector<256x8xf32>
    %116 = tpu.matmul %113, %115, %cst_56 {dimension_numbers = #tpu.dot_dimension_numbers<[1], [0], [0], [1], [0, 0, 1, 1], [], []>} : vector<256x8xbf16>, vector<8x8xbf16>, vector<256x8xf32> -> vector<256x8xf32>
    %117 = arith.addf %111, %116 : vector<256x8xf32>
    %118 = vector.extract_strided_slice %106 {offsets = [0, 2, 0], sizes = [16, 16, 8], strides = [1, 1, 1]} : vector<18x18x8xbf16> to vector<16x16x8xbf16>
    %119 = vector.shape_cast %118 : vector<16x16x8xbf16> to vector<256x8xbf16>
    %c2_57 = arith.constant 2 : index
    %c0_58 = arith.constant 0 : index
    %c0_59 = arith.constant 0 : index
    %120 = vector.load %arg4[%c2_57, %c0_58, %c0_59] : memref<9x8x8xbf16, #tpu.memory_space<vmem>>, vector<1x8x8xbf16>
    %121 = vector.shape_cast %120 : vector<1x8x8xbf16> to vector<8x8xbf16>
    %cst_60 = arith.constant dense<0.000000e+00> : vector<256x8xf32>
    %122 = tpu.matmul %119, %121, %cst_60 {dimension_numbers = #tpu.dot_dimension_numbers<[1], [0], [0], [1], [0, 0, 1, 1], [], []>} : vector<256x8xbf16>, vector<8x8xbf16>, vector<256x8xf32> -> vector<256x8xf32>
    %123 = arith.addf %117, %122 : vector<256x8xf32>
    %124 = vector.extract_strided_slice %106 {offsets = [1, 0, 0], sizes = [16, 16, 8], strides = [1, 1, 1]} : vector<18x18x8xbf16> to vector<16x16x8xbf16>
    %125 = vector.shape_cast %124 : vector<16x16x8xbf16> to vector<256x8xbf16>
    %c3_61 = arith.constant 3 : index
    %c0_62 = arith.constant 0 : index
    %c0_63 = arith.constant 0 : index
    %126 = vector.load %arg4[%c3_61, %c0_62, %c0_63] : memref<9x8x8xbf16, #tpu.memory_space<vmem>>, vector<1x8x8xbf16>
    %127 = vector.shape_cast %126 : vector<1x8x8xbf16> to vector<8x8xbf16>
    %cst_64 = arith.constant dense<0.000000e+00> : vector<256x8xf32>
    %128 = tpu.matmul %125, %127, %cst_64 {dimension_numbers = #tpu.dot_dimension_numbers<[1], [0], [0], [1], [0, 0, 1, 1], [], []>} : vector<256x8xbf16>, vector<8x8xbf16>, vector<256x8xf32> -> vector<256x8xf32>
    %129 = arith.addf %123, %128 : vector<256x8xf32>
    %130 = vector.extract_strided_slice %106 {offsets = [1, 1, 0], sizes = [16, 16, 8], strides = [1, 1, 1]} : vector<18x18x8xbf16> to vector<16x16x8xbf16>
    %131 = vector.shape_cast %130 : vector<16x16x8xbf16> to vector<256x8xbf16>
    %c4_65 = arith.constant 4 : index
    %c0_66 = arith.constant 0 : index
    %c0_67 = arith.constant 0 : index
    %132 = vector.load %arg4[%c4_65, %c0_66, %c0_67] : memref<9x8x8xbf16, #tpu.memory_space<vmem>>, vector<1x8x8xbf16>
    %133 = vector.shape_cast %132 : vector<1x8x8xbf16> to vector<8x8xbf16>
    %cst_68 = arith.constant dense<0.000000e+00> : vector<256x8xf32>
    %134 = tpu.matmul %131, %133, %cst_68 {dimension_numbers = #tpu.dot_dimension_numbers<[1], [0], [0], [1], [0, 0, 1, 1], [], []>} : vector<256x8xbf16>, vector<8x8xbf16>, vector<256x8xf32> -> vector<256x8xf32>
    %135 = arith.addf %129, %134 : vector<256x8xf32>
    %136 = vector.extract_strided_slice %106 {offsets = [1, 2, 0], sizes = [16, 16, 8], strides = [1, 1, 1]} : vector<18x18x8xbf16> to vector<16x16x8xbf16>
    %137 = vector.shape_cast %136 : vector<16x16x8xbf16> to vector<256x8xbf16>
    %c5_69 = arith.constant 5 : index
    %c0_70 = arith.constant 0 : index
    %c0_71 = arith.constant 0 : index
    %138 = vector.load %arg4[%c5_69, %c0_70, %c0_71] : memref<9x8x8xbf16, #tpu.memory_space<vmem>>, vector<1x8x8xbf16>
    %139 = vector.shape_cast %138 : vector<1x8x8xbf16> to vector<8x8xbf16>
    %cst_72 = arith.constant dense<0.000000e+00> : vector<256x8xf32>
    %140 = tpu.matmul %137, %139, %cst_72 {dimension_numbers = #tpu.dot_dimension_numbers<[1], [0], [0], [1], [0, 0, 1, 1], [], []>} : vector<256x8xbf16>, vector<8x8xbf16>, vector<256x8xf32> -> vector<256x8xf32>
    %141 = arith.addf %135, %140 : vector<256x8xf32>
    %142 = vector.extract_strided_slice %106 {offsets = [2, 0, 0], sizes = [16, 16, 8], strides = [1, 1, 1]} : vector<18x18x8xbf16> to vector<16x16x8xbf16>
    %143 = vector.shape_cast %142 : vector<16x16x8xbf16> to vector<256x8xbf16>
    %c6_73 = arith.constant 6 : index
    %c0_74 = arith.constant 0 : index
    %c0_75 = arith.constant 0 : index
    %144 = vector.load %arg4[%c6_73, %c0_74, %c0_75] : memref<9x8x8xbf16, #tpu.memory_space<vmem>>, vector<1x8x8xbf16>
    %145 = vector.shape_cast %144 : vector<1x8x8xbf16> to vector<8x8xbf16>
    %cst_76 = arith.constant dense<0.000000e+00> : vector<256x8xf32>
    %146 = tpu.matmul %143, %145, %cst_76 {dimension_numbers = #tpu.dot_dimension_numbers<[1], [0], [0], [1], [0, 0, 1, 1], [], []>} : vector<256x8xbf16>, vector<8x8xbf16>, vector<256x8xf32> -> vector<256x8xf32>
    %147 = arith.addf %141, %146 : vector<256x8xf32>
    %148 = vector.extract_strided_slice %106 {offsets = [2, 1, 0], sizes = [16, 16, 8], strides = [1, 1, 1]} : vector<18x18x8xbf16> to vector<16x16x8xbf16>
    %149 = vector.shape_cast %148 : vector<16x16x8xbf16> to vector<256x8xbf16>
    %c7_77 = arith.constant 7 : index
    %c0_78 = arith.constant 0 : index
    %c0_79 = arith.constant 0 : index
    %150 = vector.load %arg4[%c7_77, %c0_78, %c0_79] : memref<9x8x8xbf16, #tpu.memory_space<vmem>>, vector<1x8x8xbf16>
    %151 = vector.shape_cast %150 : vector<1x8x8xbf16> to vector<8x8xbf16>
    %cst_80 = arith.constant dense<0.000000e+00> : vector<256x8xf32>
    %152 = tpu.matmul %149, %151, %cst_80 {dimension_numbers = #tpu.dot_dimension_numbers<[1], [0], [0], [1], [0, 0, 1, 1], [], []>} : vector<256x8xbf16>, vector<8x8xbf16>, vector<256x8xf32> -> vector<256x8xf32>
    %153 = arith.addf %147, %152 : vector<256x8xf32>
    %154 = vector.extract_strided_slice %106 {offsets = [2, 2, 0], sizes = [16, 16, 8], strides = [1, 1, 1]} : vector<18x18x8xbf16> to vector<16x16x8xbf16>
    %155 = vector.shape_cast %154 : vector<16x16x8xbf16> to vector<256x8xbf16>
    %c8_81 = arith.constant 8 : index
    %c0_82 = arith.constant 0 : index
    %c0_83 = arith.constant 0 : index
    %156 = vector.load %arg4[%c8_81, %c0_82, %c0_83] : memref<9x8x8xbf16, #tpu.memory_space<vmem>>, vector<1x8x8xbf16>
    %157 = vector.shape_cast %156 : vector<1x8x8xbf16> to vector<8x8xbf16>
    %cst_84 = arith.constant dense<0.000000e+00> : vector<256x8xf32>
    %158 = tpu.matmul %155, %157, %cst_84 {dimension_numbers = #tpu.dot_dimension_numbers<[1], [0], [0], [1], [0, 0, 1, 1], [], []>} : vector<256x8xbf16>, vector<8x8xbf16>, vector<256x8xf32> -> vector<256x8xf32>
    %159 = arith.addf %153, %158 : vector<256x8xf32>
    %c0_85 = arith.constant 0 : index
    %c0_86 = arith.constant 0 : index
    %160 = vector.load %arg5[%c0_85, %c0_86] : memref<1x8xf32, #tpu.memory_space<vmem>>, vector<1x8xf32>
    %161 = vector.broadcast %160 : vector<1x8xf32> to vector<256x8xf32>
    %162 = arith.addf %159, %161 : vector<256x8xf32>
    %163 = tpu.transpose %162, [1, 0] : vector<256x8xf32> -> vector<8x256xf32>
    %cst_87 = arith.constant dense<0.000000e+00> : vector<8xf32>
    %164 = vector.multi_reduction <add>, %163, %cst_87 [1] : vector<8x256xf32> to vector<8xf32>
    %165 = vector.shape_cast %164 : vector<8xf32> to vector<8x1xf32>
    %cst_88 = arith.constant 2.560000e+02 : f32
    %166 = vector.broadcast %cst_88 : f32 to vector<8x1xf32>
    %167 = arith.divf %165, %166 : vector<8x1xf32>
    %168 = vector.broadcast %167 : vector<8x1xf32> to vector<8x256xf32>
    %169 = arith.subf %163, %168 : vector<8x256xf32>
    %170 = arith.mulf %169, %169 : vector<8x256xf32>
    %cst_89 = arith.constant dense<0.000000e+00> : vector<8xf32>
    %171 = vector.multi_reduction <add>, %170, %cst_89 [1] : vector<8x256xf32> to vector<8xf32>
    %172 = vector.shape_cast %171 : vector<8xf32> to vector<8x1xf32>
    %cst_90 = arith.constant 2.550000e+02 : f32
    %173 = vector.broadcast %cst_90 : f32 to vector<8x1xf32>
    %174 = arith.divf %172, %173 : vector<8x1xf32>
    %175 = math.sqrt %174 : vector<8x1xf32>
    %cst_91 = arith.constant 9.99999974E-6 : f32
    %176 = vector.broadcast %cst_91 : f32 to vector<8x1xf32>
    %177 = arith.addf %175, %176 : vector<8x1xf32>
    %178 = tpu.reciprocal %177 {approx = true} : vector<8x1xf32> -> vector<8x1xf32>
    %179 = arith.mulf %7, %178 : vector<8x1xf32>
    %180 = arith.mulf %167, %179 : vector<8x1xf32>
    %181 = arith.subf %5, %180 : vector<8x1xf32>
    %182 = vector.broadcast %179 : vector<8x1xf32> to vector<8x256xf32>
    %183 = arith.mulf %163, %182 : vector<8x256xf32>
    %184 = vector.broadcast %181 : vector<8x1xf32> to vector<8x256xf32>
    %185 = arith.addf %183, %184 : vector<8x256xf32>
    %c0_92 = arith.constant 0 : index
    %c0_93 = arith.constant 0 : index
    %c0_94 = arith.constant 0 : index
    %186 = vector.load %arg1[%c0_92, %c0_93, %c0_94] : memref<1x8x256xf32, #tpu.memory_space<vmem>>, vector<1x8x256xf32>
    %187 = vector.shape_cast %186 : vector<1x8x256xf32> to vector<8x256xf32>
    %188 = arith.addf %185, %187 : vector<8x256xf32>
    %c0_95 = arith.constant 0 : index
    %c0_96 = arith.constant 0 : index
    %c0_97 = arith.constant 0 : index
    %189 = vector.load %arg10[%c0_95, %c0_96, %c0_97] : memref<1x8x256xf32, #tpu.memory_space<vmem>>, vector<1x8x256xf32>
    %190 = vector.shape_cast %189 : vector<1x8x256xf32> to vector<8x256xf32>
    %191 = vector.shape_cast %188 : vector<8x256xf32> to vector<1x8x256xf32>
    tpu.vector_store %arg10[%c0_95, %c0_96, %c0_97], %191 {strides = array<i32>} : memref<1x8x256xf32, #tpu.memory_space<vmem>>, vector<1x8x256xf32>,
    return
  }
  func.func @transform_0(%arg0: i32) -> (i32, i32, i32) {
    %c0_i32 = arith.constant 0 : i32
    %c0_i32_0 = arith.constant 0 : i32
    %c0_i32_1 = arith.constant 0 : i32
    return %arg0, %c0_i32, %c0_i32_0 : i32, i32, i32
  }
  func.func @transform_1(%arg0: i32) -> (i32, i32, i32) {
    %c0_i32 = arith.constant 0 : i32
    %c0_i32_0 = arith.constant 0 : i32
    %c0_i32_1 = arith.constant 0 : i32
    %c0_i32_2 = arith.constant 0 : i32
    return %c0_i32, %c0_i32_0, %c0_i32_1 : i32, i32, i32
  }
  func.func @transform_2(%arg0: i32) -> (i32, i32) {
    %c0_i32 = arith.constant 0 : i32
    %c0_i32_0 = arith.constant 0 : i32
    %c0_i32_1 = arith.constant 0 : i32
    return %c0_i32, %c0_i32_0 : i32, i32
  }
  func.func @transform_3(%arg0: i32) -> (i32, i32, i32) {
    %c0_i32 = arith.constant 0 : i32
    %c0_i32_0 = arith.constant 0 : i32
    %c0_i32_1 = arith.constant 0 : i32
    %c0_i32_2 = arith.constant 0 : i32
    return %c0_i32, %c0_i32_0, %c0_i32_1 : i32, i32, i32
  }
  func.func @transform_4(%arg0: i32) -> (i32, i32) {
    %c0_i32 = arith.constant 0 : i32
    %c0_i32_0 = arith.constant 0 : i32
    %c0_i32_1 = arith.constant 0 : i32
    return %c0_i32, %c0_i32_0 : i32, i32
  }
  func.func @transform_5(%arg0: i32) -> (i32, i32, i32) {
    %c0_i32 = arith.constant 0 : i32
    %c0_i32_0 = arith.constant 0 : i32
    %c0_i32_1 = arith.constant 0 : i32
    return %arg0, %c0_i32, %c0_i32_0 : i32, i32, i32
  }
  func.func @transform_6(%arg0: i32) -> (i32, i32, i32) {
    %c0_i32 = arith.constant 0 : i32
    %c0_i32_0 = arith.constant 0 : i32
    %c0_i32_1 = arith.constant 0 : i32
    return %arg0, %c0_i32, %c0_i32_0 : i32, i32, i32
  }
  func.func @transform_7(%arg0: i32) -> (i32, i32, i32) {
    %c0_i32 = arith.constant 0 : i32
    %c0_i32_0 = arith.constant 0 : i32
    %c0_i32_1 = arith.constant 0 : i32
    return %arg0, %c0_i32, %c0_i32_0 : i32, i32, i32
  }
  func.func @transform_8(%arg0: i32) -> (i32, i32, i32) {
    %c0_i32 = arith.constant 0 : i32
    %c0_i32_0 = arith.constant 0 : i32
    %c0_i32_1 = arith.constant 0 : i32
    return %arg0, %c0_i32, %c0_i32_0 : i32, i32, i32
  }
  func.func @transform_9(%arg0: i32) -> (i32, i32, i32) {
    %c0_i32 = arith.constant 0 : i32
    %c0_i32_0 = arith.constant 0 : i32
    %c0_i32_1 = arith.constant 0 : i32
    return %arg0, %c0_i32, %c0_i32_0 : i32, i32, i32
  }
}

</mosaic_0001>

<llo_original>
// kernel: adaptive_residual_block.1
$region0: #{adaptive_residual_block.1}
  #allocation0 [shape = 'u32[]', space=smem, size = 0x4, offset = 0x4, fixed_abs, tag = 'smem constant byte address 0x4 - core index']
  #allocation1 [shape = 'u32[144,128]{1,0:T(1,128)}', space=vmem, size = 0x12000, scoped, tag = 'internal scratch']
  %s0 = inlined_call_operand.vmem [shape: f32[2,8,256], index: 0, kind: input, shape index: {}]
  %s1 = inlined_call_operand.vmem [shape: bf16[9,8,8], index: 1, kind: input, shape index: {}]
  %s2 = inlined_call_operand.vmem [shape: f32[1,8], index: 2, kind: input, shape index: {}]
  %s3 = inlined_call_operand.vmem [shape: bf16[9,8,8], index: 3, kind: input, shape index: {}]
  %s4 = inlined_call_operand.vmem [shape: f32[1,8], index: 4, kind: input, shape index: {}]
  %s5 = inlined_call_operand.vmem [shape: f32[2,1,8], index: 5, kind: input, shape index: {}]
  %s6 = inlined_call_operand.vmem [shape: f32[2,1,8], index: 6, kind: input, shape index: {}]
  %s7 = inlined_call_operand.vmem [shape: f32[2,8,1], index: 7, kind: input, shape index: {}]
  %s8 = inlined_call_operand.vmem [shape: f32[2,8,1], index: 8, kind: input, shape index: {}]
  %s9 = inlined_call_operand.vmem [shape: f32[2,8,256], index: 9, kind: output, shape index: {}]
  %s10 = sld [smem:[#allocation0]]
  $region69: #{adaptive_residual_block.1} parent=0
    _
  %s12 = ssub.s32 1, %s10
  %s13 = scalar_select 0, %s12, %s10
  loop: start=0, step=1, limit=4
  $region2: #{adaptive_residual_block.1} parent=0 // loop_pre_header
    _
  $region3: #{adaptive_residual_block.1} parent=0 // loop_header
    %s15 = sphi 0, %s19
    %p16 = scmp.ge.s32.totalorder %s15, 4
    %s25 = sphi 0, %s27
    %s28 = sphi 0, %s25
    %s29 = sphi 0, %s28
    %s45 = sphi 0, %s29
    %s49 = sphi 0, %s49
    %s51 = sphi 0, %s49
    %s52 = sphi 0, %s51
    %s66 = sphi 0, %s52
    %s70 = sphi 0, %s70
    %s72 = sphi 0, %s70
    %s73 = sphi 0, %s72
    %s87 = sphi 0, %s73
    %s91 = sphi 0, %s91
    %s93 = sphi 0, %s91
    %s94 = sphi 0, %s93
    %s108 = sphi 0, %s94
    %s112 = sphi 0, %s112
    %s114 = sphi 0, %s112
    %s115 = sphi 0, %s114
    %s129 = sphi 0, %s115
    %s135 = sphi 0, %s137
    %s138 = sphi 0, %s135
    %s139 = sphi 0, %s138
    %s155 = sphi 0, %s139
    %s161 = sphi 0, %s163
    %s164 = sphi 0, %s161
    %s165 = sphi 0, %s164
    %s181 = sphi 0, %s165
    %s187 = sphi 0, %s189
    %s190 = sphi 0, %s187
    %s191 = sphi 0, %s190
    %s207 = sphi 0, %s191
    %s213 = sphi 0, %s215
    %s216 = sphi 0, %s213
    %s217 = sphi 0, %s216
    %s233 = sphi 0, %s217
    %s239 = sphi 0, %s241
    %s242 = sphi 0, %s239
    %s243 = sphi 0, %s242
    %s259 = sphi 0, %s243
  $region4: #{adaptive_residual_block.1} parent=0 // loop_header_branch
    %18 = sbr.rel (%p16) target = $region8
  $region5: #{adaptive_residual_block.1} parent=0 // loop_body
    %s20 = ssub.s32 %s15, 1
    %s21 = ssub.s32 %s15, 2
    %s22 = sadd.s32 %s15, 1
    %s23 = ssub.s32 %s15, %s22
    %p24 = scmp.eq.s32.totalorder %s23, 0
    %s26 = sadd.s32 %s25, 1
    %s27 = scalar_select %p24, %s25, %s26
    %p30 = pneg %p24
    %p31 = scmp.eq.s32.totalorder %s15, 1
    %p32 = por %p30, %p31
    %p33 = scmp.ne.s32.totalorder %s25, %s28
    %p34 = scmp.eq.s32.totalorder %s15, 0
    %p35 = por %p33, %p34
    %p36 = scmp.ne.s32.totalorder %s25, %s28
    %p37 = scmp.eq.s32.totalorder %s20, 1
    %p38 = por %p36, %p37
    %p39 = scmp.ne.s32.totalorder %s28, %s29
    %p40 = scmp.eq.s32.totalorder %s20, 0
    %p41 = por %p39, %p40
    %p42 = scmp.ne.s32.totalorder %s28, %s29
    %p43 = scmp.eq.s32.totalorder %s21, 1
    %p44 = por %p42, %p43
    %p46 = scmp.ne.s32.totalorder %s29, %s45
    %p47 = scmp.eq.s32.totalorder %s21, 0
    %p48 = por %p46, %p47
    %s50 = sadd.s32 %s49, 1
    %p53 = scmp.eq.s32.totalorder %s15, 1
    %p54 = scmp.ne.s32.totalorder %s49, %s51
    %p55 = scmp.eq.s32.totalorder %s15, 0
    %p56 = por %p54, %p55
    %p57 = scmp.ne.s32.totalorder %s49, %s51
    %p58 = scmp.eq.s32.totalorder %s20, 1
    %p59 = por %p57, %p58
    %p60 = scmp.ne.s32.totalorder %s51, %s52
    %p61 = scmp.eq.s32.totalorder %s20, 0
    %p62 = por %p60, %p61
    %p63 = scmp.ne.s32.totalorder %s51, %s52
    %p64 = scmp.eq.s32.totalorder %s21, 1
    %p65 = por %p63, %p64
    %p67 = scmp.ne.s32.totalorder %s52, %s66
    %p68 = scmp.eq.s32.totalorder %s21, 0
    %p69 = por %p67, %p68
    %s71 = sadd.s32 %s70, 1
    %p74 = scmp.eq.s32.totalorder %s15, 1
    %p75 = scmp.ne.s32.totalorder %s70, %s72
    %p76 = scmp.eq.s32.totalorder %s15, 0
    %p77 = por %p75, %p76
    %p78 = scmp.ne.s32.totalorder %s70, %s72
    %p79 = scmp.eq.s32.totalorder %s20, 1
    %p80 = por %p78, %p79
    %p81 = scmp.ne.s32.totalorder %s72, %s73
    %p82 = scmp.eq.s32.totalorder %s20, 0
    %p83 = por %p81, %p82
    %p84 = scmp.ne.s32.totalorder %s72, %s73
    %p85 = scmp.eq.s32.totalorder %s21, 1
    %p86 = por %p84, %p85
    %p88 = scmp.ne.s32.totalorder %s73, %s87
    %p89 = scmp.eq.s32.totalorder %s21, 0
    %p90 = por %p88, %p89
    %s92 = sadd.s32 %s91, 1
    %p95 = scmp.eq.s32.totalorder %s15, 1
    %p96 = scmp.ne.s32.totalorder %s91, %s93
    %p97 = scmp.eq.s32.totalorder %s15, 0
    %p98 = por %p96, %p97
    %p99 = scmp.ne.s32.totalorder %s91, %s93
    %p100 = scmp.eq.s32.totalorder %s20, 1
    %p101 = por %p99, %p100
    %p102 = scmp.ne.s32.totalorder %s93, %s94
    %p103 = scmp.eq.s32.totalorder %s20, 0
    %p104 = por %p102, %p103
    %p105 = scmp.ne.s32.totalorder %s93, %s94
    %p106 = scmp.eq.s32.totalorder %s21, 1
    %p107 = por %p105, %p106
    %p109 = scmp.ne.s32.totalorder %s94, %s108
    %p110 = scmp.eq.s32.totalorder %s21, 0
    %p111 = por %p109, %p110
    %s113 = sadd.s32 %s112, 1
    %p116 = scmp.eq.s32.totalorder %s15, 1
    %p117 = scmp.ne.s32.totalorder %s112, %s114
    %p118 = scmp.eq.s32.totalorder %s15, 0
    %p119 = por %p117, %p118
    %p120 = scmp.ne.s32.totalorder %s112, %s114
    %p121 = scmp.eq.s32.totalorder %s20, 1
    %p122 = por %p120, %p121
    %p123 = scmp.ne.s32.totalorder %s114, %s115
    %p124 = scmp.eq.s32.totalorder %s20, 0
    %p125 = por %p123, %p124
    %p126 = scmp.ne.s32.totalorder %s114, %s115
    %p127 = scmp.eq.s32.totalorder %s21, 1
    %p128 = por %p126, %p127
    %p130 = scmp.ne.s32.totalorder %s115, %s129
    %p131 = scmp.eq.s32.totalorder %s21, 0
    %p132 = por %p130, %p131
    %s133 = ssub.s32 %s15, %s22
    %p134 = scmp.eq.s32.totalorder %s133, 0
    %s136 = sadd.s32 %s135, 1
    %s137 = scalar_select %p134, %s135, %s136
    %p140 = pneg %p134
    %p141 = scmp.eq.s32.totalorder %s15, 1
    %p142 = por %p140, %p141
    %p143 = scmp.ne.s32.totalorder %s135, %s138
    %p144 = scmp.eq.s32.totalorder %s15, 0
    %p145 = por %p143, %p144
    %p146 = scmp.ne.s32.totalorder %s135, %s138
    %p147 = scmp.eq.s32.totalorder %s20, 1
    %p148 = por %p146, %p147
    %p149 = scmp.ne.s32.totalorder %s138, %s139
    %p150 = scmp.eq.s32.totalorder %s20, 0
    %p151 = por %p149, %p150
    %p152 = scmp.ne.s32.totalorder %s138, %s139
    %p153 = scmp.eq.s32.totalorder %s21, 1
    %p154 = por %p152, %p153
    %p156 = scmp.ne.s32.totalorder %s139, %s155
    %p157 = scmp.eq.s32.totalorder %s21, 0
    %p158 = por %p156, %p157
    %s159 = ssub.s32 %s15, %s22
    %p160 = scmp.eq.s32.totalorder %s159, 0
    %s162 = sadd.s32 %s161, 1
    %s163 = scalar_select %p160, %s161, %s162
    %p166 = pneg %p160
    %p167 = scmp.eq.s32.totalorder %s15, 1
    %p168 = por %p166, %p167
    %p169 = scmp.ne.s32.totalorder %s161, %s164
    %p170 = scmp.eq.s32.totalorder %s15, 0
    %p171 = por %p169, %p170
    %p172 = scmp.ne.s32.totalorder %s161, %s164
    %p173 = scmp.eq.s32.totalorder %s20, 1
    %p174 = por %p172, %p173
    %p175 = scmp.ne.s32.totalorder %s164, %s165
    %p176 = scmp.eq.s32.totalorder %s20, 0
    %p177 = por %p175, %p176
    %p178 = scmp.ne.s32.totalorder %s164, %s165
    %p179 = scmp.eq.s32.totalorder %s21, 1
    %p180 = por %p178, %p179
    %p182 = scmp.ne.s32.totalorder %s165, %s181
    %p183 = scmp.eq.s32.totalorder %s21, 0
    %p184 = por %p182, %p183
    %s185 = ssub.s32 %s15, %s22
    %p186 = scmp.eq.s32.totalorder %s185, 0
    %s188 = sadd.s32 %s187, 1
    %s189 = scalar_select %p186, %s187, %s188
    %p192 = pneg %p186
    %p193 = scmp.eq.s32.totalorder %s15, 1
    %p194 = por %p192, %p193
    %p195 = scmp.ne.s32.totalorder %s187, %s190
    %p196 = scmp.eq.s32.totalorder %s15, 0
    %p197 = por %p195, %p196
    %p198 = scmp.ne.s32.totalorder %s187, %s190
    %p199 = scmp.eq.s32.totalorder %s20, 1
    %p200 = por %p198, %p199
    %p201 = scmp.ne.s32.totalorder %s190, %s191
    %p202 = scmp.eq.s32.totalorder %s20, 0
    %p203 = por %p201, %p202
    %p204 = scmp.ne.s32.totalorder %s190, %s191
    %p205 = scmp.eq.s32.totalorder %s21, 1
    %p206 = por %p204, %p205
    %p208 = scmp.ne.s32.totalorder %s191, %s207
    %p209 = scmp.eq.s32.totalorder %s21, 0
    %p210 = por %p208, %p209
    %s211 = ssub.s32 %s15, %s22
    %p212 = scmp.eq.s32.totalorder %s211, 0
    %s214 = sadd.s32 %s213, 1
    %s215 = scalar_select %p212, %s213, %s214
    %p218 = pneg %p212
    %p219 = scmp.eq.s32.totalorder %s15, 1
    %p220 = por %p218, %p219
    %p221 = scmp.ne.s32.totalorder %s213, %s216
    %p222 = scmp.eq.s32.totalorder %s15, 0
    %p223 = por %p221, %p222
    %p224 = scmp.ne.s32.totalorder %s213, %s216
    %p225 = scmp.eq.s32.totalorder %s20, 1
    %p226 = por %p224, %p225
    %p227 = scmp.ne.s32.totalorder %s216, %s217
    %p228 = scmp.eq.s32.totalorder %s20, 0
    %p229 = por %p227, %p228
    %p230 = scmp.ne.s32.totalorder %s216, %s217
    %p231 = scmp.eq.s32.totalorder %s21, 1
    %p232 = por %p230, %p231
    %p234 = scmp.ne.s32.totalorder %s217, %s233
    %p235 = scmp.eq.s32.totalorder %s21, 0
    %p236 = por %p234, %p235
    %s237 = ssub.s32 %s15, %s22
    %p238 = scmp.eq.s32.totalorder %s237, 0
    %s240 = sadd.s32 %s239, 1
    %s241 = scalar_select %p238, %s239, %s240
    %p244 = pneg %p238
    %p245 = scmp.eq.s32.totalorder %s15, 1
    %p246 = por %p244, %p245
    %p247 = scmp.ne.s32.totalorder %s239, %s242
    %p248 = scmp.eq.s32.totalorder %s15, 0
    %p249 = por %p247, %p248
    %p250 = scmp.ne.s32.totalorder %s239, %s242
    %p251 = scmp.eq.s32.totalorder %s20, 1
    %p252 = por %p250, %p251
    %p253 = scmp.ne.s32.totalorder %s242, %s243
    %p254 = scmp.eq.s32.totalorder %s20, 0
    %p255 = por %p253, %p254
    %p256 = scmp.ne.s32.totalorder %s242, %s243
    %p257 = scmp.eq.s32.totalorder %s21, 1
    %p258 = por %p256, %p257
    %p260 = scmp.ne.s32.totalorder %s243, %s259
    %p261 = scmp.eq.s32.totalorder %s21, 0
    %p262 = por %p260, %p261
    %p263 = scmp.le.s32.totalorder 1, %s15
    %p264 = scmp.lt.s32.totalorder %s15, 3
    %p265 = pnand %p263, %p264
    %p266 = pneg %p265
    // Predicated region
    $region9: #{adaptive_residual_block.1} parent=5 // pred_check
      _
    $region10: #{adaptive_residual_block.1} parent=5 // pred_check_branch
      %268 = sbr.rel (%p265) target = $region12
    $region11: #{adaptive_residual_block.1} parent=5 // pred_region
      %s269 = ssub.s32 %s15, 1
      // Predicated region
      $region13: #{adaptive_residual_block.1} parent=11 // pred_check
        %p270 = pneg %p62
      $region14: #{adaptive_residual_block.1} parent=11 // pred_check_branch
        %272 = sbr.rel (%p270) target = $region16
      $region15: #{adaptive_residual_block.1} parent=11 // pred_region
        _
      $region16: #{adaptive_residual_block.1} parent=11 // pred_fallthru
        _
      // Predicated region
      $region17: #{adaptive_residual_block.1} parent=11 // pred_check
        %p273 = pneg %p83
      $region18: #{adaptive_residual_block.1} parent=11 // pred_check_branch
        %275 = sbr.rel (%p273) target = $region20
      $region19: #{adaptive_residual_block.1} parent=11 // pred_region
        _
      $region20: #{adaptive_residual_block.1} parent=11 // pred_fallthru
        _
      // Predicated region
      $region21: #{adaptive_residual_block.1} parent=11 // pred_check
        %p276 = pneg %p104
      $region22: #{adaptive_residual_block.1} parent=11 // pred_check_branch
        %278 = sbr.rel (%p276) target = $region24
      $region23: #{adaptive_residual_block.1} parent=11 // pred_region
        _
      $region24: #{adaptive_residual_block.1} parent=11 // pred_fallthru
        _
      // Predicated region
      $region25: #{adaptive_residual_block.1} parent=11 // pred_check
        %p279 = pneg %p125
      $region26: #{adaptive_residual_block.1} parent=11 // pred_check_branch
        %281 = sbr.rel (%p279) target = $region28
      $region27: #{adaptive_residual_block.1} parent=11 // pred_region
        _
      $region28: #{adaptive_residual_block.1} parent=11 // pred_fallthru
        _
    $region12: #{adaptive_residual_block.1} parent=5 // pred_fallthru
      _
    %p282 = scmp.lt.s32.totalorder %s15, 2
    // Predicated region
    $region29: #{adaptive_residual_block.1} parent=5 // pred_check
      %p283 = pneg %p282
    $region30: #{adaptive_residual_block.1} parent=5 // pred_check_branch
      %285 = sbr.rel (%p283) target = $region32
    $region31: #{adaptive_residual_block.1} parent=5 // pred_region
      // Predicated region
      $region33: #{adaptive_residual_block.1} parent=31 // pred_check
        %p286 = pneg %p35
      $region34: #{adaptive_residual_block.1} parent=31 // pred_check_branch
        %288 = sbr.rel (%p286) target = $region36
      $region35: #{adaptive_residual_block.1} parent=31 // pred_region
        %p289 = scmp.lt.s32.totalorder %s15, 1
        %s290 = scalar_select %p289, %s15, 1
        %s291 = smul.addr %s290, 2
        %s292 = smul.addr %s291, 8
        %s293 = scalar_lea.vmem %s0, %s292
      $region36: #{adaptive_residual_block.1} parent=31 // pred_fallthru
        _
      // Predicated region
      $region37: #{adaptive_residual_block.1} parent=31 // pred_check
        %p294 = pneg %p145
      $region38: #{adaptive_residual_block.1} parent=31 // pred_check_branch
        %296 = sbr.rel (%p294) target = $region40
      $region39: #{adaptive_residual_block.1} parent=31 // pred_region
        %p297 = scmp.lt.s32.totalorder %s15, 1
        %s298 = scalar_select %p297, %s15, 1
        %s299 = scalar_lea.vmem %s5, %s298
      $region40: #{adaptive_residual_block.1} parent=31 // pred_fallthru
        _
      // Predicated region
      $region41: #{adaptive_residual_block.1} parent=31 // pred_check
        %p300 = pneg %p171
      $region42: #{adaptive_residual_block.1} parent=31 // pred_check_branch
        %302 = sbr.rel (%p300) target = $region44
      $region43: #{adaptive_residual_block.1} parent=31 // pred_region
        %p303 = scmp.lt.s32.totalorder %s15, 1
        %s304 = scalar_select %p303, %s15, 1
        %s305 = scalar_lea.vmem %s6, %s304
      $region44: #{adaptive_residual_block.1} parent=31 // pred_fallthru
        _
      // Predicated region
      $region45: #{adaptive_residual_block.1} parent=31 // pred_check
        %p306 = pneg %p197
      $region46: #{adaptive_residual_block.1} parent=31 // pred_check_branch
        %308 = sbr.rel (%p306) target = $region48
      $region47: #{adaptive_residual_block.1} parent=31 // pred_region
        %p309 = scmp.lt.s32.totalorder %s15, 1
        %s310 = scalar_select %p309, %s15, 1
        %s311 = smul.addr %s310, 8
        %s312 = scalar_lea.vmem %s7, %s311
      $region48: #{adaptive_residual_block.1} parent=31 // pred_fallthru
        _
      // Predicated region
      $region49: #{adaptive_residual_block.1} parent=31 // pred_check
        %p313 = pneg %p223
      $region50: #{adaptive_residual_block.1} parent=31 // pred_check_branch
        %315 = sbr.rel (%p313) target = $region52
      $region51: #{adaptive_residual_block.1} parent=31 // pred_region
        %p316 = scmp.lt.s32.totalorder %s15, 1
        %s317 = scalar_select %p316, %s15, 1
        %s318 = smul.addr %s317, 8
        %s319 = scalar_lea.vmem %s8, %s318
      $region52: #{adaptive_residual_block.1} parent=31 // pred_fallthru
        _
    $region32: #{adaptive_residual_block.1} parent=5 // pred_fallthru
      _
    %p320 = scmp.le.s32.totalorder 1, %s15
    %p321 = scmp.lt.s32.totalorder %s15, 3
    %p322 = pnand %p320, %p321
    %p323 = pneg %p322
    // Predicated region
    $region53: #{adaptive_residual_block.1} parent=5 // pred_check
      _
    $region54: #{adaptive_residual_block.1} parent=5 // pred_check_branch
      %325 = sbr.rel (%p322) target = $region56
    $region55: #{adaptive_residual_block.1} parent=5 // pred_region
      %s326 = ssub.s32 %s15, 1
      %p327 = scmp.lt.s32.totalorder %s20, 1
      %s328 = scalar_select %p327, %s20, 1
      %s329 = smul.addr %s328, 2
      %s330 = smul.addr %s329, 8
      %s331 = scalar_lea.vmem %s0, %s330
      %p332 = pneg %p41
      %p333 = pneg %p38
      %p334 = pneg %p62
      %p335 = pneg %p59
      %p336 = pneg %p83
      %p337 = pneg %p80
      %p338 = pneg %p104
      %p339 = pneg %p101
      %p340 = pneg %p125
      %p341 = pneg %p122
      %p342 = scmp.lt.s32.totalorder %s20, 1
      %s343 = scalar_select %p342, %s20, 1
      %s344 = scalar_lea.vmem %s5, %s343
      %p345 = pneg %p151
      %p346 = pneg %p148
      %p347 = scmp.lt.s32.totalorder %s20, 1
      %s348 = scalar_select %p347, %s20, 1
      %s349 = scalar_lea.vmem %s6, %s348
      %p350 = pneg %p177
      %p351 = pneg %p174
      %p352 = scmp.lt.s32.totalorder %s20, 1
      %s353 = scalar_select %p352, %s20, 1
      %s354 = smul.addr %s353, 8
      %s355 = scalar_lea.vmem %s7, %s354
      %p356 = pneg %p203
      %p357 = pneg %p200
      %p358 = scmp.lt.s32.totalorder %s20, 1
      %s359 = scalar_select %p358, %s20, 1
      %s360 = smul.addr %s359, 8
      %s361 = scalar_lea.vmem %s8, %s360
      %p362 = pneg %p229
      %p363 = pneg %p226
      %p364 = pneg %p255
      %p365 = pneg %p252
      %p366 = scmp.lt.s32.totalorder %s20, 1
      %s367 = scalar_select %p366, %s20, 1
      %s368 = smul.addr %s367, 2
      %s369 = smul.addr %s368, 8
      %s370 = scalar_lea.vmem %s9, %s369
      %p371 = scmp.lt.s32.totalorder %s20, 1
      %s372 = scalar_select %p371, %s20, 1
      %s373 = smul.addr %s372, 2
      %s374 = smul.addr %s373, 8
      %s375 = scalar_lea.vmem %s0, %s374
      %p376 = scmp.lt.s32.totalorder %s20, 1
      %s377 = scalar_select %p376, %s20, 1
      %s378 = scalar_lea.vmem %s5, %s377
      %p379 = scmp.lt.s32.totalorder %s20, 1
      %s380 = scalar_select %p379, %s20, 1
      %s381 = scalar_lea.vmem %s6, %s380
      %p382 = scmp.lt.s32.totalorder %s20, 1
      %s383 = scalar_select %p382, %s20, 1
      %s384 = smul.addr %s383, 8
      %s385 = scalar_lea.vmem %s7, %s384
      %p386 = scmp.lt.s32.totalorder %s20, 1
      %s387 = scalar_select %p386, %s20, 1
      %s388 = smul.addr %s387, 8
      %s389 = scalar_lea.vmem %s8, %s388
      %p390 = scmp.lt.s32.totalorder %s20, 1
      %s391 = scalar_select %p390, %s20, 1
      %s392 = smul.addr %s391, 2
      %s393 = smul.addr %s392, 8
      %s394 = scalar_lea.vmem %s9, %s393
      %v396 = vld [vmem:[%s378] sm:$0x1]
      %v397 = vld [vmem:[%s381] sm:$0x1]
      %v398 = vld [vmem:[%s385] sm:$0xff]
      %v399 = vld [vmem:[%s389] sm:$0xff]
      %v400 = vld [vmem:[%s375] sm:$0xff]
      %v401 = vld [vmem:[%s375 + $0x8] sm:$0xff]
      %402 = vxpose.xlu0.b32.start [1/16] %v400, 128
      %403 = vxpose.xlu0.b32.cont [2/16] 0.0, 128
      %404 = vxpose.xlu0.b32.cont [3/16] 0.0, 128
      %405 = vxpose.xlu0.b32.cont [4/16] 0.0, 128
      %406 = vxpose.xlu0.b32.cont [5/16] 0.0, 128
      %407 = vxpose.xlu0.b32.cont [6/16] 0.0, 128
      %408 = vxpose.xlu0.b32.cont [7/16] 0.0, 128
      %409 = vxpose.xlu0.b32.cont [8/16] 0.0, 128
      %410 = vxpose.xlu0.b32.cont [9/16] 0.0, 128
      %411 = vxpose.xlu0.b32.cont [10/16] 0.0, 128
      %412 = vxpose.xlu0.b32.cont [11/16] 0.0, 128
      %413 = vxpose.xlu0.b32.cont [12/16] 0.0, 128
      %414 = vxpose.xlu0.b32.cont [13/16] 0.0, 128
      %415 = vxpose.xlu0.b32.cont [14/16] 0.0, 128
      %416 = vxpose.xlu0.b32.cont [15/16] 0.0, 128
      %417 = vxpose.xlu0.b32.end [16/16] 0.0, 128
      %v418 = vpop.trf.xlu0
      %v419 = vpop.trf.xlu0
      %v420 = vpop.trf.xlu0
      %v421 = vpop.trf.xlu0
      %v422 = vpop.trf.xlu0
      %v423 = vpop.trf.xlu0
      %v424 = vpop.trf.xlu0
      %v425 = vpop.trf.xlu0
      %v426 = vpop.trf.xlu0
      %v427 = vpop.trf.xlu0
      %v428 = vpop.trf.xlu0
      %v429 = vpop.trf.xlu0
      %v430 = vpop.trf.xlu0
      %v431 = vpop.trf.xlu0
      %v432 = vpop.trf.xlu0
      %v433 = vpop.trf.xlu0
      %434 = vxpose.xlu0.b32.start [1/16] %v401, 128
      %435 = vxpose.xlu0.b32.cont [2/16] 0.0, 128
      %436 = vxpose.xlu0.b32.cont [3/16] 0.0, 128
      %437 = vxpose.xlu0.b32.cont [4/16] 0.0, 128
      %438 = vxpose.xlu0.b32.cont [5/16] 0.0, 128
      %439 = vxpose.xlu0.b32.cont [6/16] 0.0, 128
      %440 = vxpose.xlu0.b32.cont [7/16] 0.0, 128
      %441 = vxpose.xlu0.b32.cont [8/16] 0.0, 128
      %442 = vxpose.xlu0.b32.cont [9/16] 0.0, 128
      %443 = vxpose.xlu0.b32.cont [10/16] 0.0, 128
      %444 = vxpose.xlu0.b32.cont [11/16] 0.0, 128
      %445 = vxpose.xlu0.b32.cont [12/16] 0.0, 128
      %446 = vxpose.xlu0.b32.cont [13/16] 0.0, 128
      %447 = vxpose.xlu0.b32.cont [14/16] 0.0, 128
      %448 = vxpose.xlu0.b32.cont [15/16] 0.0, 128
      %449 = vxpose.xlu0.b32.end [16/16] 0.0, 128
      %v450 = vpop.trf.xlu0
      %v451 = vpop.trf.xlu0
      %v452 = vpop.trf.xlu0
      %v453 = vpop.trf.xlu0
      %v454 = vpop.trf.xlu0
      %v455 = vpop.trf.xlu0
      %v456 = vpop.trf.xlu0
      %v457 = vpop.trf.xlu0
      %v458 = vpop.trf.xlu0
      %v459 = vpop.trf.xlu0
      %v460 = vpop.trf.xlu0
      %v461 = vpop.trf.xlu0
      %v462 = vpop.trf.xlu0
      %v463 = vpop.trf.xlu0
      %v464 = vpop.trf.xlu0
      %v465 = vpop.trf.xlu0
      %v482 = vrot.slane %v420, 1
      %v483 = vrot.slane %v418, 1
      %v484 = vrot.slane %v422, 1
      %v485 = vrot.slane %v424, 1
      %v486 = vrot.slane %v426, 1
      %v487 = vrot.slane %v428, 1
      %v488 = vrot.slane %v430, 1
      %v489 = vrot.slane %v432, 1
      %v490 = vrot.slane %v450, 1
      %v491 = vrot.slane %v452, 1
      %v492 = vrot.slane %v454, 1
      %v493 = vrot.slane %v456, 1
      %v494 = vrot.slane %v458, 1
      %v495 = vrot.slane %v460, 1
      %v496 = vrot.slane %v462, 1
      %v497 = vrot.slane %v464, 1
      %vm530 = vcmask 1040384
      %v531 = vrot.slane %v420, 7
      %v532 = vrot.slane %v421, 7
      %v533 = vsel %vm530, %v531, %v532
      %v534 = vrot.slane %v418, 7
      %v535 = vrot.slane %v419, 7
      %v536 = vsel %vm530, %v534, %v535
      %v537 = vrot.slane %v422, 7
      %v538 = vrot.slane %v423, 7
      %v539 = vsel %vm530, %v537, %v538
      %v540 = vrot.slane %v424, 7
      %v541 = vrot.slane %v425, 7
      %v542 = vsel %vm530, %v540, %v541
      %v543 = vrot.slane %v426, 7
      %v544 = vrot.slane %v427, 7
      %v545 = vsel %vm530, %v543, %v544
      %v546 = vrot.slane %v428, 7
      %v547 = vrot.slane %v429, 7
      %v548 = vsel %vm530, %v546, %v547
      %v549 = vrot.slane %v430, 7
      %v550 = vrot.slane %v431, 7
      %v551 = vsel %vm530, %v549, %v550
      %v552 = vrot.slane %v432, 7
      %v553 = vrot.slane %v433, 7
      %v554 = vsel %vm530, %v552, %v553
      %v555 = vrot.slane %v450, 7
      %v556 = vrot.slane %v451, 7
      %v557 = vsel %vm530, %v555, %v556
      %v558 = vrot.slane %v452, 7
      %v559 = vrot.slane %v453, 7
      %v560 = vsel %vm530, %v558, %v559
      %v561 = vrot.slane %v454, 7
      %v562 = vrot.slane %v455, 7
      %v563 = vsel %vm530, %v561, %v562
      %v564 = vrot.slane %v456, 7
      %v565 = vrot.slane %v457, 7
      %v566 = vsel %vm530, %v564, %v565
      %v567 = vrot.slane %v458, 7
      %v568 = vrot.slane %v459, 7
      %v569 = vsel %vm530, %v567, %v568
      %v570 = vrot.slane %v460, 7
      %v571 = vrot.slane %v461, 7
      %v572 = vsel %vm530, %v570, %v571
      %v573 = vrot.slane %v462, 7
      %v574 = vrot.slane %v463, 7
      %v575 = vsel %vm530, %v573, %v574
      %v576 = vrot.slane %v464, 7
      %v577 = vrot.slane %v465, 7
      %v578 = vsel %vm530, %v576, %v577
      %v627 = vrot.slane %v421, 5
      %v628 = vrot.slane %v419, 5
      %v629 = vrot.slane %v423, 5
      %v630 = vrot.slane %v425, 5
      %v631 = vrot.slane %v427, 5
      %v632 = vrot.slane %v429, 5
      %v633 = vrot.slane %v431, 5
      %v634 = vrot.slane %v433, 5
      %v635 = vrot.slane %v451, 5
      %v636 = vrot.slane %v453, 5
      %v637 = vrot.slane %v455, 5
      %v638 = vrot.slane %v457, 5
      %v639 = vrot.slane %v459, 5
      %v640 = vrot.slane %v461, 5
      %v641 = vrot.slane %v463, 5
      %v642 = vrot.slane %v465, 5
      %v659 = vsel %vm530, %v482, %v531
      %v660 = vsel %vm530, %v483, %v534
      %v661 = vsel %vm530, %v484, %v537
      %v662 = vsel %vm530, %v485, %v540
      %v663 = vsel %vm530, %v486, %v543
      %v664 = vsel %vm530, %v487, %v546
      %v665 = vsel %vm530, %v488, %v549
      %v666 = vsel %vm530, %v489, %v552
      %v667 = vsel %vm530, %v490, %v555
      %v668 = vsel %vm530, %v491, %v558
      %v669 = vsel %vm530, %v492, %v561
      %v670 = vsel %vm530, %v493, %v564
      %v671 = vsel %vm530, %v494, %v567
      %v672 = vsel %vm530, %v495, %v570
      %v673 = vsel %vm530, %v496, %v573
      %v674 = vsel %vm530, %v497, %v576
      %v675 = vsel %vm530, %v532, %v627
      %v676 = vsel %vm530, %v535, %v628
      %v677 = vsel %vm530, %v538, %v629
      %v678 = vsel %vm530, %v541, %v630
      %v679 = vsel %vm530, %v544, %v631
      %v680 = vsel %vm530, %v547, %v632
      %v681 = vsel %vm530, %v550, %v633
      %v682 = vsel %vm530, %v553, %v634
      %v683 = vsel %vm530, %v556, %v635
      %v684 = vsel %vm530, %v559, %v636
      %v685 = vsel %vm530, %v562, %v637
      %v686 = vsel %vm530, %v565, %v638
      %v687 = vsel %vm530, %v568, %v639
      %v688 = vsel %vm530, %v571, %v640
      %v689 = vsel %vm530, %v574, %v641
      %v690 = vsel %vm530, %v577, %v642
      %v691 = vpack.c.bf16 %v533, %v659
      %v692 = vpack.c.bf16 %v675, %v675
      %v693 = vpack.c.bf16 %v536, %v660
      %v694 = vpack.c.bf16 %v676, %v676
      %v695 = vpack.c.bf16 %v539, %v661
      %v696 = vpack.c.bf16 %v677, %v677
      %v697 = vpack.c.bf16 %v542, %v662
      %v698 = vpack.c.bf16 %v678, %v678
      %v699 = vpack.c.bf16 %v545, %v663
      %v700 = vpack.c.bf16 %v679, %v679
      %v701 = vpack.c.bf16 %v548, %v664
      %v702 = vpack.c.bf16 %v680, %v680
      %v703 = vpack.c.bf16 %v551, %v665
      %v704 = vpack.c.bf16 %v681, %v681
      %v705 = vpack.c.bf16 %v554, %v666
      %v706 = vpack.c.bf16 %v682, %v682
      %v707 = vpack.c.bf16 %v557, %v667
      %v708 = vpack.c.bf16 %v683, %v683
      %v709 = vpack.c.bf16 %v560, %v668
      %v710 = vpack.c.bf16 %v684, %v684
      %v711 = vpack.c.bf16 %v563, %v669
      %v712 = vpack.c.bf16 %v685, %v685
      %v713 = vpack.c.bf16 %v566, %v670
      %v714 = vpack.c.bf16 %v686, %v686
      %v715 = vpack.c.bf16 %v569, %v671
      %v716 = vpack.c.bf16 %v687, %v687
      %v717 = vpack.c.bf16 %v572, %v672
      %v718 = vpack.c.bf16 %v688, %v688
      %v719 = vpack.c.bf16 %v575, %v673
      %v720 = vpack.c.bf16 %v689, %v689
      %v721 = vpack.c.bf16 %v578, %v674
      %v722 = vpack.c.bf16 %v690, %v690
      %v723 = vld [vmem:[%s1] sm:$0xf]
      %vm724 = vsmask.f32 7424
      %v726 = vshrl.u32 %v691, 16
      %v728 = vshll.u32 %v691, 16
      %v730 = vrot.slane %v728, 1
      %v731 = vor.u32 %v726, %v730
      %v733 = vshll.u32 %v692, 16
      %v735 = vrot.slane %v733, 1
      %v736 = vsel %vm724, %v731, %v735
      %v738 = vshrl.u32 %v693, 16
      %v740 = vshll.u32 %v693, 16
      %v742 = vrot.slane %v740, 1
      %v743 = vor.u32 %v738, %v742
      %v745 = vshll.u32 %v694, 16
      %v747 = vrot.slane %v745, 1
      %v748 = vsel %vm724, %v743, %v747
      %v750 = vshrl.u32 %v695, 16
      %v752 = vshll.u32 %v695, 16
      %v754 = vrot.slane %v752, 1
      %v755 = vor.u32 %v750, %v754
      %v757 = vshll.u32 %v696, 16
      %v759 = vrot.slane %v757, 1
      %v760 = vsel %vm724, %v755, %v759
      %v762 = vshrl.u32 %v697, 16
      %v764 = vshll.u32 %v697, 16
      %v766 = vrot.slane %v764, 1
      %v767 = vor.u32 %v762, %v766
      %v769 = vshll.u32 %v698, 16
      %v771 = vrot.slane %v769, 1
      %v772 = vsel %vm724, %v767, %v771
      %v774 = vshrl.u32 %v699, 16
      %v776 = vshll.u32 %v699, 16
      %v778 = vrot.slane %v776, 1
      %v779 = vor.u32 %v774, %v778
      %v781 = vshll.u32 %v700, 16
      %v783 = vrot.slane %v781, 1
      %v784 = vsel %vm724, %v779, %v783
      %v786 = vshrl.u32 %v701, 16
      %v788 = vshll.u32 %v701, 16
      %v790 = vrot.slane %v788, 1
      %v791 = vor.u32 %v786, %v790
      %v793 = vshll.u32 %v702, 16
      %v795 = vrot.slane %v793, 1
      %v796 = vsel %vm724, %v791, %v795
      %v798 = vshrl.u32 %v703, 16
      %v800 = vshll.u32 %v703, 16
      %v802 = vrot.slane %v800, 1
      %v803 = vor.u32 %v798, %v802
      %v805 = vshll.u32 %v704, 16
      %v807 = vrot.slane %v805, 1
      %v808 = vsel %vm724, %v803, %v807
      %v810 = vshrl.u32 %v705, 16
      %v812 = vshll.u32 %v705, 16
      %v814 = vrot.slane %v812, 1
      %v815 = vor.u32 %v810, %v814
      %v817 = vshll.u32 %v706, 16
      %v819 = vrot.slane %v817, 1
      %v820 = vsel %vm724, %v815, %v819
      %v822 = vshrl.u32 %v707, 16
      %v824 = vshll.u32 %v707, 16
      %v826 = vrot.slane %v824, 1
      %v827 = vor.u32 %v822, %v826
      %v829 = vshll.u32 %v708, 16
      %v831 = vrot.slane %v829, 1
      %v832 = vsel %vm724, %v827, %v831
      %v834 = vshrl.u32 %v709, 16
      %v836 = vshll.u32 %v709, 16
      %v838 = vrot.slane %v836, 1
      %v839 = vor.u32 %v834, %v838
      %v841 = vshll.u32 %v710, 16
      %v843 = vrot.slane %v841, 1
      %v844 = vsel %vm724, %v839, %v843
      %v846 = vshrl.u32 %v711, 16
      %v848 = vshll.u32 %v711, 16
      %v850 = vrot.slane %v848, 1
      %v851 = vor.u32 %v846, %v850
      %v853 = vshll.u32 %v712, 16
      %v855 = vrot.slane %v853, 1
      %v856 = vsel %vm724, %v851, %v855
      %v858 = vshrl.u32 %v713, 16
      %v860 = vshll.u32 %v713, 16
      %v862 = vrot.slane %v860, 1
      %v863 = vor.u32 %v858, %v862
      %v865 = vshll.u32 %v714, 16
      %v867 = vrot.slane %v865, 1
      %v868 = vsel %vm724, %v863, %v867
      %v870 = vshrl.u32 %v715, 16
      %v872 = vshll.u32 %v715, 16
      %v874 = vrot.slane %v872, 1
      %v875 = vor.u32 %v870, %v874
      %v877 = vshll.u32 %v716, 16
      %v879 = vrot.slane %v877, 1
      %v880 = vsel %vm724, %v875, %v879
      %v882 = vshrl.u32 %v717, 16
      %v884 = vshll.u32 %v717, 16
      %v886 = vrot.slane %v884, 1
      %v887 = vor.u32 %v882, %v886
      %v889 = vshll.u32 %v718, 16
      %v891 = vrot.slane %v889, 1
      %v892 = vsel %vm724, %v887, %v891
      %v894 = vshrl.u32 %v719, 16
      %v896 = vshll.u32 %v719, 16
      %v898 = vrot.slane %v896, 1
      %v899 = vor.u32 %v894, %v898
      %v901 = vshll.u32 %v720, 16
      %v903 = vrot.slane %v901, 1
      %v904 = vsel %vm724, %v899, %v903
      %s905 = scalar_lea.vmem %s1, 4
      %v906 = vld [vmem:[%s905] sm:$0xf]
      %vm907 = vcmask 64512
      %v909 = vsel %vm907, %v736, 0
      %v912 = vsel %vm907, %v748, 0
      %v915 = vsel %vm907, %v760, 0
      %v918 = vsel %vm907, %v772, 0
      %v921 = vsel %vm907, %v784, 0
      %v924 = vsel %vm907, %v796, 0
      %v927 = vsel %vm907, %v808, 0
      %v930 = vsel %vm907, %v820, 0
      %v933 = vsel %vm907, %v832, 0
      %v936 = vsel %vm907, %v844, 0
      %v939 = vsel %vm907, %v856, 0
      %v942 = vsel %vm907, %v868, 0
      %v945 = vsel %vm907, %v880, 0
      %v948 = vsel %vm907, %v892, 0
      %v951 = vsel %vm907, %v904, 0
      %vm953 = vcmask 1043456
      %v955 = vsel %vm953, %v906, 0
      %957 = vmatprep.subr.bf16.mxu0 0
      %958 = vmatpush1.bf16.msra.mxu0 %v955
      %959 = vmatprep.subr.bf16.mxu0 0
      %960 = vmatpush1.bf16.msra.mxu0 0
      %961 = vmatprep.subr.bf16.mxu0 0
      %962 = vmatpush1.bf16.msra.mxu0 0
      %963 = vmatprep.subr.bf16.mxu0 0
      %964 = vmatpush1.bf16.msra.mxu0 0
      %965 = vmatprep.subr.bf16.mxu0 0
      %966 = vmatpush1.bf16.msra.mxu0 0
      %967 = vmatprep.subr.bf16.mxu0 0
      %968 = vmatpush1.bf16.msra.mxu0 0
      %969 = vmatprep.subr.bf16.mxu0 0
      %970 = vmatpush1.bf16.msra.mxu0 0
      %971 = vmatprep.subr.bf16.mxu0 0
      %972 = vmatpush1.bf16.msra.mxu0 0
      %973 = vmatprep.subr.bf16.mxu0 0
      %974 = vmatpush1.bf16.msra.mxu0 0
      %975 = vmatprep.subr.bf16.mxu0 0
      %976 = vmatpush1.bf16.msra.mxu0 0
      %977 = vmatprep.subr.bf16.mxu0 0
      %978 = vmatpush1.bf16.msra.mxu0 0
      %979 = vmatprep.subr.bf16.mxu0 0
      %980 = vmatpush1.bf16.msra.mxu0 0
      %981 = vmatprep.subr.bf16.mxu0 0
      %982 = vmatpush1.bf16.msra.mxu0 0
      %983 = vmatprep.subr.bf16.mxu0 0
      %984 = vmatpush1.bf16.msra.mxu0 0
      %985 = vmatprep.subr.bf16.mxu0 0
      %986 = vmatpush1.bf16.msra.mxu0 0
      %987 = vmatprep.subr.bf16.mxu0 0
      %988 = vmatpush1.bf16.msra.mxu0 0
      %989 = vmatprep.mubr.bf16.mxu0 0
      %990 = vmatmul.mubr.bf16.gmra.mrb[0].mxu0 %v909
      %v991 = vpop.f32.mrb[0].mxu0
      %v992 = vadd.f32 0.0, %v991
      %v993 = vpop.f32.mrb[0].mxu0
      %v994 = vpop.f32.mrb[0].mxu0
      %v995 = vadd.f32 0.0, %v994
      %v996 = vpop.f32.mrb[0].mxu0
      %997 = vmatprep.mubr.bf16.mxu0 0
      %998 = vmatmul.mubr.bf16.gmra.mrb[0].mxu0 %v912
      %v999 = vpop.f32.mrb[0].mxu0
      %v1000 = vadd.f32 0.0, %v999
      %v1001 = vpop.f32.mrb[0].mxu0
      %v1002 = vpop.f32.mrb[0].mxu0
      %v1003 = vadd.f32 0.0, %v1002
      %v1004 = vpop.f32.mrb[0].mxu0
      %1005 = vmatprep.mubr.bf16.mxu0 0
      %1006 = vmatmul.mubr.bf16.gmra.mrb[0].mxu0 %v909
      %v1007 = vpop.f32.mrb[0].mxu0
      %v1008 = vadd.f32 0.0, %v1007
      %v1009 = vpop.f32.mrb[0].mxu0
      %v1010 = vpop.f32.mrb[0].mxu0
      %v1011 = vadd.f32 0.0, %v1010
      %v1012 = vpop.f32.mrb[0].mxu0
      %1013 = vmatprep.mubr.bf16.mxu0 0
      %1014 = vmatmul.mubr.bf16.gmra.mrb[0].mxu0 %v915
      %v1015 = vpop.f32.mrb[0].mxu0
      %v1016 = vadd.f32 0.0, %v1015
      %v1017 = vpop.f32.mrb[0].mxu0
      %v1018 = vpop.f32.mrb[0].mxu0
      %v1019 = vadd.f32 0.0, %v1018
      %v1020 = vpop.f32.mrb[0].mxu0
      %1021 = vmatprep.mubr.bf16.mxu0 0
      %1022 = vmatmul.mubr.bf16.gmra.mrb[0].mxu0 %v918
      %v1023 = vpop.f32.mrb[0].mxu0
      %v1024 = vadd.f32 0.0, %v1023
      %v1025 = vpop.f32.mrb[0].mxu0
      %v1026 = vpop.f32.mrb[0].mxu0
      %v1027 = vadd.f32 0.0, %v1026
      %v1028 = vpop.f32.mrb[0].mxu0
      %1029 = vmatprep.mubr.bf16.mxu0 0
      %1030 = vmatmul.mubr.bf16.gmra.mrb[0].mxu0 %v921
      %v1031 = vpop.f32.mrb[0].mxu0
      %v1032 = vadd.f32 0.0, %v1031
      %v1033 = vpop.f32.mrb[0].mxu0
      %v1034 = vpop.f32.mrb[0].mxu0
      %v1035 = vadd.f32 0.0, %v1034
      %v1036 = vpop.f32.mrb[0].mxu0
      %1037 = vmatprep.mubr.bf16.mxu0 0
      %1038 = vmatmul.mubr.bf16.gmra.mrb[0].mxu0 %v924
      %v1039 = vpop.f32.mrb[0].mxu0
      %v1040 = vadd.f32 0.0, %v1039
      %v1041 = vpop.f32.mrb[0].mxu0
      %v1042 = vpop.f32.mrb[0].mxu0
      %v1043 = vadd.f32 0.0, %v1042
      %v1044 = vpop.f32.mrb[0].mxu0
      %1045 = vmatprep.mubr.bf16.mxu0 0
      %1046 = vmatmul.mubr.bf16.gmra.mrb[0].mxu0 %v927
      %v1047 = vpop.f32.mrb[0].mxu0
      %v1048 = vadd.f32 0.0, %v1047
      %v1049 = vpop.f32.mrb[0].mxu0
      %v1050 = vpop.f32.mrb[0].mxu0
      %v1051 = vadd.f32 0.0, %v1050
      %v1052 = vpop.f32.mrb[0].mxu0
      %1053 = vmatprep.mubr.bf16.mxu0 0
      %1054 = vmatmul.mubr.bf16.gmra.mrb[0].mxu0 %v930
      %v1055 = vpop.f32.mrb[0].mxu0
      %v1056 = vadd.f32 0.0, %v1055
      %v1057 = vpop.f32.mrb[0].mxu0
      %v1058 = vpop.f32.mrb[0].mxu0
      %v1059 = vadd.f32 0.0, %v1058
      %v1060 = vpop.f32.mrb[0].mxu0
      %1061 = vmatprep.mubr.bf16.mxu0 0
      %1062 = vmatmul.mubr.bf16.gmra.mrb[0].mxu0 %v933
      %v1063 = vpop.f32.mrb[0].mxu0
      %v1064 = vadd.f32 0.0, %v1063
      %v1065 = vpop.f32.mrb[0].mxu0
      %v1066 = vpop.f32.mrb[0].mxu0
      %v1067 = vadd.f32 0.0, %v1066
      %v1068 = vpop.f32.mrb[0].mxu0
      %1069 = vmatprep.mubr.bf16.mxu0 0
      %1070 = vmatmul.mubr.bf16.gmra.mrb[0].mxu0 %v936
      %v1071 = vpop.f32.mrb[0].mxu0
      %v1072 = vadd.f32 0.0, %v1071
      %v1073 = vpop.f32.mrb[0].mxu0
      %v1074 = vpop.f32.mrb[0].mxu0
      %v1075 = vadd.f32 0.0, %v1074
      %v1076 = vpop.f32.mrb[0].mxu0
      %1077 = vmatprep.mubr.bf16.mxu0 0
      %1078 = vmatmul.mubr.bf16.gmra.mrb[0].mxu0 %v939
      %v1079 = vpop.f32.mrb[0].mxu0
      %v1080 = vadd.f32 0.0, %v1079
      %v1081 = vpop.f32.mrb[0].mxu0
      %v1082 = vpop.f32.mrb[0].mxu0
      %v1083 = vadd.f32 0.0, %v1082
      %v1084 = vpop.f32.mrb[0].mxu0
      %1085 = vmatprep.mubr.bf16.mxu0 0
      %1086 = vmatmul.mubr.bf16.gmra.mrb[0].mxu0 %v942
      %v1087 = vpop.f32.mrb[0].mxu0
      %v1088 = vadd.f32 0.0, %v1087
      %v1089 = vpop.f32.mrb[0].mxu0
      %v1090 = vpop.f32.mrb[0].mxu0
      %v1091 = vadd.f32 0.0, %v1090
      %v1092 = vpop.f32.mrb[0].mxu0
      %1093 = vmatprep.mubr.bf16.mxu0 0
      %1094 = vmatmul.mubr.bf16.gmra.mrb[0].mxu0 %v945
      %v1095 = vpop.f32.mrb[0].mxu0
      %v1096 = vadd.f32 0.0, %v1095
      %v1097 = vpop.f32.mrb[0].mxu0
      %v1098 = vpop.f32.mrb[0].mxu0
      %v1099 = vadd.f32 0.0, %v1098
      %v1100 = vpop.f32.mrb[0].mxu0
      %1101 = vmatprep.mubr.bf16.mxu0 0
      %1102 = vmatmul.mubr.bf16.gmra.mrb[0].mxu0 %v948
      %v1103 = vpop.f32.mrb[0].mxu0
      %v1104 = vadd.f32 0.0, %v1103
      %v1105 = vpop.f32.mrb[0].mxu0
      %v1106 = vpop.f32.mrb[0].mxu0
      %v1107 = vadd.f32 0.0, %v1106
      %v1108 = vpop.f32.mrb[0].mxu0
      %1109 = vmatprep.mubr.bf16.mxu0 0
      %1110 = vmatmul.mubr.bf16.gmra.mrb[0].mxu0 %v951
      %v1111 = vpop.f32.mrb[0].mxu0
      %v1112 = vadd.f32 0.0, %v1111
      %v1113 = vpop.f32.mrb[0].mxu0
      %v1114 = vpop.f32.mrb[0].mxu0
      %v1115 = vadd.f32 0.0, %v1114
      %v1116 = vpop.f32.mrb[0].mxu0
      %1117 = vdwg.mxu0
      %v1118 = vsel %vm907, %v691, 0
      %v1120 = vsel %vm907, %v693, 0
      %v1122 = vsel %vm907, %v695, 0
      %v1124 = vsel %vm907, %v697, 0
      %v1126 = vsel %vm907, %v699, 0
      %v1128 = vsel %vm907, %v701, 0
      %v1130 = vsel %vm907, %v703, 0
      %v1132 = vsel %vm907, %v705, 0
      %v1134 = vsel %vm907, %v707, 0
      %v1136 = vsel %vm907, %v709, 0
      %v1138 = vsel %vm907, %v711, 0
      %v1140 = vsel %vm907, %v713, 0
      %v1142 = vsel %vm907, %v715, 0
      %v1144 = vsel %vm907, %v717, 0
      %v1146 = vsel %vm907, %v719, 0
      %v1149 = vsel %vm953, %v723, 0
      %1151 = vmatprep.subr.bf16.mxu0 0
      %1152 = vmatpush1.bf16.msra.mxu0 %v1149
      %1153 = vmatprep.subr.bf16.mxu0 0
      %1154 = vmatpush1.bf16.msra.mxu0 0
      %1155 = vmatprep.subr.bf16.mxu0 0
      %1156 = vmatpush1.bf16.msra.mxu0 0
      %1157 = vmatprep.subr.bf16.mxu0 0
      %1158 = vmatpush1.bf16.msra.mxu0 0
      %1159 = vmatprep.subr.bf16.mxu0 0
      %1160 = vmatpush1.bf16.msra.mxu0 0
      %1161 = vmatprep.subr.bf16.mxu0 0
      %1162 = vmatpush1.bf16.msra.mxu0 0
      %1163 = vmatprep.subr.bf16.mxu0 0
      %1164 = vmatpush1.bf16.msra.mxu0 0
      %1165 = vmatprep.subr.bf16.mxu0 0
      %1166 = vmatpush1.bf16.msra.mxu0 0
      %1167 = vmatprep.subr.bf16.mxu0 0
      %1168 = vmatpush1.bf16.msra.mxu0 0
      %1169 = vmatprep.subr.bf16.mxu0 0
      %1170 = vmatpush1.bf16.msra.mxu0 0
      %1171 = vmatprep.subr.bf16.mxu0 0
      %1172 = vmatpush1.bf16.msra.mxu0 0
      %1173 = vmatprep.subr.bf16.mxu0 0
      %1174 = vmatpush1.bf16.msra.mxu0 0
      %1175 = vmatprep.subr.bf16.mxu0 0
      %1176 = vmatpush1.bf16.msra.mxu0 0
      %1177 = vmatprep.subr.bf16.mxu0 0
      %1178 = vmatpush1.bf16.msra.mxu0 0
      %1179 = vmatprep.subr.bf16.mxu0 0
      %1180 = vmatpush1.bf16.msra.mxu0 0
      %1181 = vmatprep.subr.bf16.mxu0 0
      %1182 = vmatpush1.bf16.msra.mxu0 0
      %1183 = vmatprep.mubr.bf16.mxu0 0
      %1184 = vmatmul.mubr.bf16.gmra.mrb[0].mxu0 %v1118
      %v1185 = vpop.f32.mrb[0].mxu0
      %v1186 = vadd.f32 %v992, %v1185
      %v1187 = vpop.f32.mrb[0].mxu0
      %v1188 = vpop.f32.mrb[0].mxu0
      %v1189 = vadd.f32 %v995, %v1188
      %v1190 = vpop.f32.mrb[0].mxu0
      %1191 = vmatprep.mubr.bf16.mxu0 0
      %1192 = vmatmul.mubr.bf16.gmra.mrb[0].mxu0 %v1120
      %v1193 = vpop.f32.mrb[0].mxu0
      %v1194 = vadd.f32 %v1000, %v1193
      %v1195 = vpop.f32.mrb[0].mxu0
      %v1196 = vpop.f32.mrb[0].mxu0
      %v1197 = vadd.f32 %v1003, %v1196
      %v1198 = vpop.f32.mrb[0].mxu0
      %1199 = vmatprep.mubr.bf16.mxu0 0
      %1200 = vmatmul.mubr.bf16.gmra.mrb[0].mxu0 %v1118
      %v1201 = vpop.f32.mrb[0].mxu0
      %v1202 = vadd.f32 %v1008, %v1201
      %v1203 = vpop.f32.mrb[0].mxu0
      %v1204 = vpop.f32.mrb[0].mxu0
      %v1205 = vadd.f32 %v1011, %v1204
      %v1206 = vpop.f32.mrb[0].mxu0
      %1207 = vmatprep.mubr.bf16.mxu0 0
      %1208 = vmatmul.mubr.bf16.gmra.mrb[0].mxu0 %v1122
      %v1209 = vpop.f32.mrb[0].mxu0
      %v1210 = vadd.f32 %v1016, %v1209
      %v1211 = vpop.f32.mrb[0].mxu0
      %v1212 = vpop.f32.mrb[0].mxu0
      %v1213 = vadd.f32 %v1019, %v1212
      %v1214 = vpop.f32.mrb[0].mxu0
      %1215 = vmatprep.mubr.bf16.mxu0 0
      %1216 = vmatmul.mubr.bf16.gmra.mrb[0].mxu0 %v1124
      %v1217 = vpop.f32.mrb[0].mxu0
      %v1218 = vadd.f32 %v1024, %v1217
      %v1219 = vpop.f32.mrb[0].mxu0
      %v1220 = vpop.f32.mrb[0].mxu0
      %v1221 = vadd.f32 %v1027, %v1220
      %v1222 = vpop.f32.mrb[0].mxu0
      %1223 = vmatprep.mubr.bf16.mxu0 0
      %1224 = vmatmul.mubr.bf16.gmra.mrb[0].mxu0 %v1126
      %v1225 = vpop.f32.mrb[0].mxu0
      %v1226 = vadd.f32 %v1032, %v1225
      %v1227 = vpop.f32.mrb[0].mxu0
      %v1228 = vpop.f32.mrb[0].mxu0
      %v1229 = vadd.f32 %v1035, %v1228
      %v1230 = vpop.f32.mrb[0].mxu0
      %1231 = vmatprep.mubr.bf16.mxu0 0
      %1232 = vmatmul.mubr.bf16.gmra.mrb[0].mxu0 %v1128
      %v1233 = vpop.f32.mrb[0].mxu0
      %v1234 = vadd.f32 %v1040, %v1233
      %v1235 = vpop.f32.mrb[0].mxu0
      %v1236 = vpop.f32.mrb[0].mxu0
      %v1237 = vadd.f32 %v1043, %v1236
      %v1238 = vpop.f32.mrb[0].mxu0
      %1239 = vmatprep.mubr.bf16.mxu0 0
      %1240 = vmatmul.mubr.bf16.gmra.mrb[0].mxu0 %v1130
      %v1241 = vpop.f32.mrb[0].mxu0
      %v1242 = vadd.f32 %v1048, %v1241
      %v1243 = vpop.f32.mrb[0].mxu0
      %v1244 = vpop.f32.mrb[0].mxu0
      %v1245 = vadd.f32 %v1051, %v1244
      %v1246 = vpop.f32.mrb[0].mxu0
      %1247 = vmatprep.mubr.bf16.mxu0 0
      %1248 = vmatmul.mubr.bf16.gmra.mrb[0].mxu0 %v1132
      %v1249 = vpop.f32.mrb[0].mxu0
      %v1250 = vadd.f32 %v1056, %v1249
      %v1251 = vpop.f32.mrb[0].mxu0
      %v1252 = vpop.f32.mrb[0].mxu0
      %v1253 = vadd.f32 %v1059, %v1252
      %v1254 = vpop.f32.mrb[0].mxu0
      %1255 = vmatprep.mubr.bf16.mxu0 0
      %1256 = vmatmul.mubr.bf16.gmra.mrb[0].mxu0 %v1134
      %v1257 = vpop.f32.mrb[0].mxu0
      %v1258 = vadd.f32 %v1064, %v1257
      %v1259 = vpop.f32.mrb[0].mxu0
      %v1260 = vpop.f32.mrb[0].mxu0
      %v1261 = vadd.f32 %v1067, %v1260
      %v1262 = vpop.f32.mrb[0].mxu0
      %1263 = vmatprep.mubr.bf16.mxu0 0
      %1264 = vmatmul.mubr.bf16.gmra.mrb[0].mxu0 %v1136
      %v1265 = vpop.f32.mrb[0].mxu0
      %v1266 = vadd.f32 %v1072, %v1265
      %v1267 = vpop.f32.mrb[0].mxu0
      %v1268 = vpop.f32.mrb[0].mxu0
      %v1269 = vadd.f32 %v1075, %v1268
      %v1270 = vpop.f32.mrb[0].mxu0
      %1271 = vmatprep.mubr.bf16.mxu0 0
      %1272 = vmatmul.mubr.bf16.gmra.mrb[0].mxu0 %v1138
      %v1273 = vpop.f32.mrb[0].mxu0
      %v1274 = vadd.f32 %v1080, %v1273
      %v1275 = vpop.f32.mrb[0].mxu0
      %v1276 = vpop.f32.mrb[0].mxu0
      %v1277 = vadd.f32 %v1083, %v1276
      %v1278 = vpop.f32.mrb[0].mxu0
      %1279 = vmatprep.mubr.bf16.mxu0 0
      %1280 = vmatmul.mubr.bf16.gmra.mrb[0].mxu0 %v1140
      %v1281 = vpop.f32.mrb[0].mxu0
      %v1282 = vadd.f32 %v1088, %v1281
      %v1283 = vpop.f32.mrb[0].mxu0
      %v1284 = vpop.f32.mrb[0].mxu0
      %v1285 = vadd.f32 %v1091, %v1284
      %v1286 = vpop.f32.mrb[0].mxu0
      %1287 = vmatprep.mubr.bf16.mxu0 0
      %1288 = vmatmul.mubr.bf16.gmra.mrb[0].mxu0 %v1142
      %v1289 = vpop.f32.mrb[0].mxu0
      %v1290 = vadd.f32 %v1096, %v1289
      %v1291 = vpop.f32.mrb[0].mxu0
      %v1292 = vpop.f32.mrb[0].mxu0
      %v1293 = vadd.f32 %v1099, %v1292
      %v1294 = vpop.f32.mrb[0].mxu0
      %1295 = vmatprep.mubr.bf16.mxu0 0
      %1296 = vmatmul.mubr.bf16.gmra.mrb[0].mxu0 %v1144
      %v1297 = vpop.f32.mrb[0].mxu0
      %v1298 = vadd.f32 %v1104, %v1297
      %v1299 = vpop.f32.mrb[0].mxu0
      %v1300 = vpop.f32.mrb[0].mxu0
      %v1301 = vadd.f32 %v1107, %v1300
      %v1302 = vpop.f32.mrb[0].mxu0
      %1303 = vmatprep.mubr.bf16.mxu0 0
      %1304 = vmatmul.mubr.bf16.gmra.mrb[0].mxu0 %v1146
      %v1305 = vpop.f32.mrb[0].mxu0
      %v1306 = vadd.f32 %v1112, %v1305
      %v1307 = vpop.f32.mrb[0].mxu0
      %v1308 = vpop.f32.mrb[0].mxu0
      %v1309 = vadd.f32 %v1115, %v1308
      %v1310 = vpop.f32.mrb[0].mxu0
      %1311 = vdwg.mxu0
      %vm1342 = vcmask 1046528
      %v1343 = vrot.slane %v691, 1
      %v1344 = vrot.slane %v692, 1
      %v1345 = vsel %vm1342, %v1343, %v1344
      %v1346 = vrot.slane %v693, 1
      %v1347 = vrot.slane %v694, 1
      %v1348 = vsel %vm1342, %v1346, %v1347
      %v1349 = vrot.slane %v695, 1
      %v1350 = vrot.slane %v696, 1
      %v1351 = vsel %vm1342, %v1349, %v1350
      %v1352 = vrot.slane %v697, 1
      %v1353 = vrot.slane %v698, 1
      %v1354 = vsel %vm1342, %v1352, %v1353
      %v1355 = vrot.slane %v699, 1
      %v1356 = vrot.slane %v700, 1
      %v1357 = vsel %vm1342, %v1355, %v1356
      %v1358 = vrot.slane %v701, 1
      %v1359 = vrot.slane %v702, 1
      %v1360 = vsel %vm1342, %v1358, %v1359
      %v1361 = vrot.slane %v703, 1
      %v1362 = vrot.slane %v704, 1
      %v1363 = vsel %vm1342, %v1361, %v1362
      %v1364 = vrot.slane %v705, 1
      %v1365 = vrot.slane %v706, 1
      %v1366 = vsel %vm1342, %v1364, %v1365
      %v1367 = vrot.slane %v707, 1
      %v1368 = vrot.slane %v708, 1
      %v1369 = vsel %vm1342, %v1367, %v1368
      %v1370 = vrot.slane %v709, 1
      %v1371 = vrot.slane %v710, 1
      %v1372 = vsel %vm1342, %v1370, %v1371
      %v1373 = vrot.slane %v711, 1
      %v1374 = vrot.slane %v712, 1
      %v1375 = vsel %vm1342, %v1373, %v1374
      %v1376 = vrot.slane %v713, 1
      %v1377 = vrot.slane %v714, 1
      %v1378 = vsel %vm1342, %v1376, %v1377
      %v1379 = vrot.slane %v715, 1
      %v1380 = vrot.slane %v716, 1
      %v1381 = vsel %vm1342, %v1379, %v1380
      %v1382 = vrot.slane %v717, 1
      %v1383 = vrot.slane %v718, 1
      %v1384 = vsel %vm1342, %v1382, %v1383
      %v1385 = vrot.slane %v719, 1
      %v1386 = vrot.slane %v720, 1
      %v1387 = vsel %vm1342, %v1385, %v1386
      %s1388 = scalar_lea.vmem %s1, 8
      %v1389 = vld [vmem:[%s1388] sm:$0xf]
      %v1391 = vsel %vm907, %v1345, 0
      %v1394 = vsel %vm907, %v1348, 0
      %v1397 = vsel %vm907, %v1351, 0
      %v1400 = vsel %vm907, %v1354, 0
      %v1403 = vsel %vm907, %v1357, 0
      %v1406 = vsel %vm907, %v1360, 0
      %v1409 = vsel %vm907, %v1363, 0
      %v1412 = vsel %vm907, %v1366, 0
      %v1415 = vsel %vm907, %v1369, 0
      %v1418 = vsel %vm907, %v1372, 0
      %v1421 = vsel %vm907, %v1375, 0
      %v1424 = vsel %vm907, %v1378, 0
      %v1427 = vsel %vm907, %v1381, 0
      %v1430 = vsel %vm907, %v1384, 0
      %v1433 = vsel %vm907, %v1387, 0
      %v1436 = vsel %vm953, %v1389, 0
      %1438 = vmatprep.subr.bf16.mxu0 0
      %1439 = vmatpush1.bf16.msra.mxu0 %v1436
      %1440 = vmatprep.subr.bf16.mxu0 0
      %1441 = vmatpush1.bf16.msra.mxu0 0
      %1442 = vmatprep.subr.bf16.mxu0 0
      %1443 = vmatpush1.bf16.msra.mxu0 0
      %1444 = vmatprep.subr.bf16.mxu0 0
      %1445 = vmatpush1.bf16.msra.mxu0 0
      %1446 = vmatprep.subr.bf16.mxu0 0
      %1447 = vmatpush1.bf16.msra.mxu0 0
      %1448 = vmatprep.subr.bf16.mxu0 0
      %1449 = vmatpush1.bf16.msra.mxu0 0
      %1450 = vmatprep.subr.bf16.mxu0 0
      %1451 = vmatpush1.bf16.msra.mxu0 0
      %1452 = vmatprep.subr.bf16.mxu0 0
      %1453 = vmatpush1.bf16.msra.mxu0 0
      %1454 = vmatprep.subr.bf16.mxu0 0
      %1455 = vmatpush1.bf16.msra.mxu0 0
      %1456 = vmatprep.subr.bf16.mxu0 0
      %1457 = vmatpush1.bf16.msra.mxu0 0
      %1458 = vmatprep.subr.bf16.mxu0 0
      %1459 = vmatpush1.bf16.msra.mxu0 0
      %1460 = vmatprep.subr.bf16.mxu0 0
      %1461 = vmatpush1.bf16.msra.mxu0 0
      %1462 = vmatprep.subr.bf16.mxu0 0
      %1463 = vmatpush1.bf16.msra.mxu0 0
      %1464 = vmatprep.subr.bf16.mxu0 0
      %1465 = vmatpush1.bf16.msra.mxu0 0
      %1466 = vmatprep.subr.bf16.mxu0 0
      %1467 = vmatpush1.bf16.msra.mxu0 0
      %1468 = vmatprep.subr.bf16.mxu0 0
      %1469 = vmatpush1.bf16.msra.mxu0 0
      %1470 = vmatprep.mubr.bf16.mxu0 0
      %1471 = vmatmul.mubr.bf16.gmra.mrb[0].mxu0 %v1391
      %v1472 = vpop.f32.mrb[0].mxu0
      %v1473 = vadd.f32 0.0, %v1472
      %v1474 = vpop.f32.mrb[0].mxu0
      %v1475 = vpop.f32.mrb[0].mxu0
      %v1476 = vadd.f32 0.0, %v1475
      %v1477 = vpop.f32.mrb[0].mxu0
      %1478 = vmatprep.mubr.bf16.mxu0 0
      %1479 = vmatmul.mubr.bf16.gmra.mrb[0].mxu0 %v1394
      %v1480 = vpop.f32.mrb[0].mxu0
      %v1481 = vadd.f32 0.0, %v1480
      %v1482 = vpop.f32.mrb[0].mxu0
      %v1483 = vpop.f32.mrb[0].mxu0
      %v1484 = vadd.f32 0.0, %v1483
      %v1485 = vpop.f32.mrb[0].mxu0
      %1486 = vmatprep.mubr.bf16.mxu0 0
      %1487 = vmatmul.mubr.bf16.gmra.mrb[0].mxu0 %v1391
      %v1488 = vpop.f32.mrb[0].mxu0
      %v1489 = vadd.f32 0.0, %v1488
      %v1490 = vpop.f32.mrb[0].mxu0
      %v1491 = vpop.f32.mrb[0].mxu0
      %v1492 = vadd.f32 0.0, %v1491
      %v1493 = vpop.f32.mrb[0].mxu0
      %1494 = vmatprep.mubr.bf16.mxu0 0
      %1495 = vmatmul.mubr.bf16.gmra.mrb[0].mxu0 %v1397
      %v1496 = vpop.f32.mrb[0].mxu0
      %v1497 = vadd.f32 0.0, %v1496
      %v1498 = vpop.f32.mrb[0].mxu0
      %v1499 = vpop.f32.mrb[0].mxu0
      %v1500 = vadd.f32 0.0, %v1499
      %v1501 = vpop.f32.mrb[0].mxu0
      %1502 = vmatprep.mubr.bf16.mxu0 0
      %1503 = vmatmul.mubr.bf16.gmra.mrb[0].mxu0 %v1400
      %v1504 = vpop.f32.mrb[0].mxu0
      %v1505 = vadd.f32 0.0, %v1504
      %v1506 = vpop.f32.mrb[0].mxu0
      %v1507 = vpop.f32.mrb[0].mxu0
      %v1508 = vadd.f32 0.0, %v1507
      %v1509 = vpop.f32.mrb[0].mxu0
      %1510 = vmatprep.mubr.bf16.mxu0 0
      %1511 = vmatmul.mubr.bf16.gmra.mrb[0].mxu0 %v1403
      %v1512 = vpop.f32.mrb[0].mxu0
      %v1513 = vadd.f32 0.0, %v1512
      %v1514 = vpop.f32.mrb[0].mxu0
      %v1515 = vpop.f32.mrb[0].mxu0
      %v1516 = vadd.f32 0.0, %v1515
      %v1517 = vpop.f32.mrb[0].mxu0
      %1518 = vmatprep.mubr.bf16.mxu0 0
      %1519 = vmatmul.mubr.bf16.gmra.mrb[0].mxu0 %v1406
      %v1520 = vpop.f32.mrb[0].mxu0
      %v1521 = vadd.f32 0.0, %v1520
      %v1522 = vpop.f32.mrb[0].mxu0
      %v1523 = vpop.f32.mrb[0].mxu0
      %v1524 = vadd.f32 0.0, %v1523
      %v1525 = vpop.f32.mrb[0].mxu0
      %1526 = vmatprep.mubr.bf16.mxu0 0
      %1527 = vmatmul.mubr.bf16.gmra.mrb[0].mxu0 %v1409
      %v1528 = vpop.f32.mrb[0].mxu0
      %v1529 = vadd.f32 0.0, %v1528
      %v1530 = vpop.f32.mrb[0].mxu0
      %v1531 = vpop.f32.mrb[0].mxu0
      %v1532 = vadd.f32 0.0, %v1531
      %v1533 = vpop.f32.mrb[0].mxu0
      %1534 = vmatprep.mubr.bf16.mxu0 0
      %1535 = vmatmul.mubr.bf16.gmra.mrb[0].mxu0 %v1412
      %v1536 = vpop.f32.mrb[0].mxu0
      %v1537 = vadd.f32 0.0, %v1536
      %v1538 = vpop.f32.mrb[0].mxu0
      %v1539 = vpop.f32.mrb[0].mxu0
      %v1540 = vadd.f32 0.0, %v1539
      %v1541 = vpop.f32.mrb[0].mxu0
      %1542 = vmatprep.mubr.bf16.mxu0 0
      %1543 = vmatmul.mubr.bf16.gmra.mrb[0].mxu0 %v1415
      %v1544 = vpop.f32.mrb[0].mxu0
      %v1545 = vadd.f32 0.0, %v1544
      %v1546 = vpop.f32.mrb[0].mxu0
      %v1547 = vpop.f32.mrb[0].mxu0
      %v1548 = vadd.f32 0.0, %v1547
      %v1549 = vpop.f32.mrb[0].mxu0
      %1550 = vmatprep.mubr.bf16.mxu0 0
      %1551 = vmatmul.mubr.bf16.gmra.mrb[0].mxu0 %v1418
      %v1552 = vpop.f32.mrb[0].mxu0
      %v1553 = vadd.f32 0.0, %v1552
      %v1554 = vpop.f32.mrb[0].mxu0
      %v1555 = vpop.f32.mrb[0].mxu0
      %v1556 = vadd.f32 0.0, %v1555
      %v1557 = vpop.f32.mrb[0].mxu0
      %1558 = vmatprep.mubr.bf16.mxu0 0
      %1559 = vmatmul.mubr.bf16.gmra.mrb[0].mxu0 %v1421
      %v1560 = vpop.f32.mrb[0].mxu0
      %v1561 = vadd.f32 0.0, %v1560
      %v1562 = vpop.f32.mrb[0].mxu0
      %v1563 = vpop.f32.mrb[0].mxu0
      %v1564 = vadd.f32 0.0, %v1563
      %v1565 = vpop.f32.mrb[0].mxu0
      %1566 = vmatprep.mubr.bf16.mxu0 0
      %1567 = vmatmul.mubr.bf16.gmra.mrb[0].mxu0 %v1424
      %v1568 = vpop.f32.mrb[0].mxu0
      %v1569 = vadd.f32 0.0, %v1568
      %v1570 = vpop.f32.mrb[0].mxu0
      %v1571 = vpop.f32.mrb[0].mxu0
      %v1572 = vadd.f32 0.0, %v1571
      %v1573 = vpop.f32.mrb[0].mxu0
      %1574 = vmatprep.mubr.bf16.mxu0 0
      %1575 = vmatmul.mubr.bf16.gmra.mrb[0].mxu0 %v1427
      %v1576 = vpop.f32.mrb[0].mxu0
      %v1577 = vadd.f32 0.0, %v1576
      %v1578 = vpop.f32.mrb[0].mxu0
      %v1579 = vpop.f32.mrb[0].mxu0
      %v1580 = vadd.f32 0.0, %v1579
      %v1581 = vpop.f32.mrb[0].mxu0
      %1582 = vmatprep.mubr.bf16.mxu0 0
      %1583 = vmatmul.mubr.bf16.gmra.mrb[0].mxu0 %v1430
      %v1584 = vpop.f32.mrb[0].mxu0
      %v1585 = vadd.f32 0.0, %v1584
      %v1586 = vpop.f32.mrb[0].mxu0
      %v1587 = vpop.f32.mrb[0].mxu0
      %v1588 = vadd.f32 0.0, %v1587
      %v1589 = vpop.f32.mrb[0].mxu0
      %1590 = vmatprep.mubr.bf16.mxu0 0
      %1591 = vmatmul.mubr.bf16.gmra.mrb[0].mxu0 %v1433
      %v1592 = vpop.f32.mrb[0].mxu0
      %v1593 = vadd.f32 0.0, %v1592
      %v1594 = vpop.f32.mrb[0].mxu0
      %v1595 = vpop.f32.mrb[0].mxu0
      %v1596 = vadd.f32 0.0, %v1595
      %v1597 = vpop.f32.mrb[0].mxu0
      %1598 = vdwg.mxu0
      %v1599 = vadd.f32 %v1186, %v1473
      %v1600 = vadd.f32 %v1189, %v1476
      %v1601 = vadd.f32 %v1194, %v1481
      %v1602 = vadd.f32 %v1197, %v1484
      %v1603 = vadd.f32 %v1202, %v1489
      %v1604 = vadd.f32 %v1205, %v1492
      %v1605 = vadd.f32 %v1210, %v1497
      %v1606 = vadd.f32 %v1213, %v1500
      %v1607 = vadd.f32 %v1218, %v1505
      %v1608 = vadd.f32 %v1221, %v1508
      %v1609 = vadd.f32 %v1226, %v1513
      %v1610 = vadd.f32 %v1229, %v1516
      %v1611 = vadd.f32 %v1234, %v1521
      %v1612 = vadd.f32 %v1237, %v1524
      %v1613 = vadd.f32 %v1242, %v1529
      %v1614 = vadd.f32 %v1245, %v1532
      %v1615 = vadd.f32 %v1250, %v1537
      %v1616 = vadd.f32 %v1253, %v1540
      %v1617 = vadd.f32 %v1258, %v1545
      %v1618 = vadd.f32 %v1261, %v1548
      %v1619 = vadd.f32 %v1266, %v1553
      %v1620 = vadd.f32 %v1269, %v1556
      %v1621 = vadd.f32 %v1274, %v1561
      %v1622 = vadd.f32 %v1277, %v1564
      %v1623 = vadd.f32 %v1282, %v1569
      %v1624 = vadd.f32 %v1285, %v1572
      %v1625 = vadd.f32 %v1290, %v1577
      %v1626 = vadd.f32 %v1293, %v1580
      %v1627 = vadd.f32 %v1298, %v1585
      %v1628 = vadd.f32 %v1301, %v1588
      %v1629 = vadd.f32 %v1306, %v1593
      %v1630 = vadd.f32 %v1309, %v1596
      %s1631 = scalar_lea.vmem %s1, 12
      %v1632 = vld [vmem:[%s1631] sm:$0xf]
      %v1634 = vsel %vm907, %v721, 0
      %v1637 = vsel %vm953, %v1632, 0
      %1639 = vmatprep.subr.bf16.mxu0 0
      %1640 = vmatpush1.bf16.msra.mxu0 %v1637
      %1641 = vmatprep.subr.bf16.mxu0 0
      %1642 = vmatpush1.bf16.msra.mxu0 0
      %1643 = vmatprep.subr.bf16.mxu0 0
      %1644 = vmatpush1.bf16.msra.mxu0 0
      %1645 = vmatprep.subr.bf16.mxu0 0
      %1646 = vmatpush1.bf16.msra.mxu0 0
      %1647 = vmatprep.subr.bf16.mxu0 0
      %1648 = vmatpush1.bf16.msra.mxu0 0
      %1649 = vmatprep.subr.bf16.mxu0 0
      %1650 = vmatpush1.bf16.msra.mxu0 0
      %1651 = vmatprep.subr.bf16.mxu0 0
      %1652 = vmatpush1.bf16.msra.mxu0 0
      %1653 = vmatprep.subr.bf16.mxu0 0
      %1654 = vmatpush1.bf16.msra.mxu0 0
      %1655 = vmatprep.subr.bf16.mxu0 0
      %1656 = vmatpush1.bf16.msra.mxu0 0
      %1657 = vmatprep.subr.bf16.mxu0 0
      %1658 = vmatpush1.bf16.msra.mxu0 0
      %1659 = vmatprep.subr.bf16.mxu0 0
      %1660 = vmatpush1.bf16.msra.mxu0 0
      %1661 = vmatprep.subr.bf16.mxu0 0
      %1662 = vmatpush1.bf16.msra.mxu0 0
      %1663 = vmatprep.subr.bf16.mxu0 0
      %1664 = vmatpush1.bf16.msra.mxu0 0
      %1665 = vmatprep.subr.bf16.mxu0 0
      %1666 = vmatpush1.bf16.msra.mxu0 0
      %1667 = vmatprep.subr.bf16.mxu0 0
      %1668 = vmatpush1.bf16.msra.mxu0 0
      %1669 = vmatprep.subr.bf16.mxu0 0
      %1670 = vmatpush1.bf16.msra.mxu0 0
      %1671 = vmatprep.mubr.bf16.mxu0 0
      %1672 = vmatmul.mubr.bf16.gmra.mrb[0].mxu0 %v1120
      %v1673 = vpop.f32.mrb[0].mxu0
      %v1674 = vadd.f32 0.0, %v1673
      %v1675 = vpop.f32.mrb[0].mxu0
      %v1676 = vpop.f32.mrb[0].mxu0
      %v1677 = vadd.f32 0.0, %v1676
      %v1678 = vpop.f32.mrb[0].mxu0
      %1679 = vmatprep.mubr.bf16.mxu0 0
      %1680 = vmatmul.mubr.bf16.gmra.mrb[0].mxu0 %v1118
      %v1681 = vpop.f32.mrb[0].mxu0
      %v1682 = vadd.f32 0.0, %v1681
      %v1683 = vpop.f32.mrb[0].mxu0
      %v1684 = vpop.f32.mrb[0].mxu0
      %v1685 = vadd.f32 0.0, %v1684
      %v1686 = vpop.f32.mrb[0].mxu0
      %1687 = vmatprep.mubr.bf16.mxu0 0
      %1688 = vmatmul.mubr.bf16.gmra.mrb[0].mxu0 %v1122
      %v1689 = vpop.f32.mrb[0].mxu0
      %v1690 = vadd.f32 0.0, %v1689
      %v1691 = vpop.f32.mrb[0].mxu0
      %v1692 = vpop.f32.mrb[0].mxu0
      %v1693 = vadd.f32 0.0, %v1692
      %v1694 = vpop.f32.mrb[0].mxu0
      %1695 = vmatprep.mubr.bf16.mxu0 0
      %1696 = vmatmul.mubr.bf16.gmra.mrb[0].mxu0 %v1124
      %v1697 = vpop.f32.mrb[0].mxu0
      %v1698 = vadd.f32 0.0, %v1697
      %v1699 = vpop.f32.mrb[0].mxu0
      %v1700 = vpop.f32.mrb[0].mxu0
      %v1701 = vadd.f32 0.0, %v1700
      %v1702 = vpop.f32.mrb[0].mxu0
      %1703 = vmatprep.mubr.bf16.mxu0 0
      %1704 = vmatmul.mubr.bf16.gmra.mrb[0].mxu0 %v1126
      %v1705 = vpop.f32.mrb[0].mxu0
      %v1706 = vadd.f32 0.0, %v1705
      %v1707 = vpop.f32.mrb[0].mxu0
      %v1708 = vpop.f32.mrb[0].mxu0
      %v1709 = vadd.f32 0.0, %v1708
      %v1710 = vpop.f32.mrb[0].mxu0
      %1711 = vmatprep.mubr.bf16.mxu0 0
      %1712 = vmatmul.mubr.bf16.gmra.mrb[0].mxu0 %v1128
      %v1713 = vpop.f32.mrb[0].mxu0
      %v1714 = vadd.f32 0.0, %v1713
      %v1715 = vpop.f32.mrb[0].mxu0
      %v1716 = vpop.f32.mrb[0].mxu0
      %v1717 = vadd.f32 0.0, %v1716
      %v1718 = vpop.f32.mrb[0].mxu0
      %1719 = vmatprep.mubr.bf16.mxu0 0
      %1720 = vmatmul.mubr.bf16.gmra.mrb[0].mxu0 %v1130
      %v1721 = vpop.f32.mrb[0].mxu0
      %v1722 = vadd.f32 0.0, %v1721
      %v1723 = vpop.f32.mrb[0].mxu0
      %v1724 = vpop.f32.mrb[0].mxu0
      %v1725 = vadd.f32 0.0, %v1724
      %v1726 = vpop.f32.mrb[0].mxu0
      %1727 = vmatprep.mubr.bf16.mxu0 0
      %1728 = vmatmul.mubr.bf16.gmra.mrb[0].mxu0 %v1132
      %v1729 = vpop.f32.mrb[0].mxu0
      %v1730 = vadd.f32 0.0, %v1729
      %v1731 = vpop.f32.mrb[0].mxu0
      %v1732 = vpop.f32.mrb[0].mxu0
      %v1733 = vadd.f32 0.0, %v1732
      %v1734 = vpop.f32.mrb[0].mxu0
      %1735 = vmatprep.mubr.bf16.mxu0 0
      %1736 = vmatmul.mubr.bf16.gmra.mrb[0].mxu0 %v1134
      %v1737 = vpop.f32.mrb[0].mxu0
      %v1738 = vadd.f32 0.0, %v1737
      %v1739 = vpop.f32.mrb[0].mxu0
      %v1740 = vpop.f32.mrb[0].mxu0
      %v1741 = vadd.f32 0.0, %v1740
      %v1742 = vpop.f32.mrb[0].mxu0
      %1743 = vmatprep.mubr.bf16.mxu0 0
      %1744 = vmatmul.mubr.bf16.gmra.mrb[0].mxu0 %v1136
      %v1745 = vpop.f32.mrb[0].mxu0
      %v1746 = vadd.f32 0.0, %v1745
      %v1747 = vpop.f32.mrb[0].mxu0
      %v1748 = vpop.f32.mrb[0].mxu0
      %v1749 = vadd.f32 0.0, %v1748
      %v1750 = vpop.f32.mrb[0].mxu0
      %1751 = vmatprep.mubr.bf16.mxu0 0
      %1752 = vmatmul.mubr.bf16.gmra.mrb[0].mxu0 %v1138
      %v1753 = vpop.f32.mrb[0].mxu0
      %v1754 = vadd.f32 0.0, %v1753
      %v1755 = vpop.f32.mrb[0].mxu0
      %v1756 = vpop.f32.mrb[0].mxu0
      %v1757 = vadd.f32 0.0, %v1756
      %v1758 = vpop.f32.mrb[0].mxu0
      %1759 = vmatprep.mubr.bf16.mxu0 0
      %1760 = vmatmul.mubr.bf16.gmra.mrb[0].mxu0 %v1140
      %v1761 = vpop.f32.mrb[0].mxu0
      %v1762 = vadd.f32 0.0, %v1761
      %v1763 = vpop.f32.mrb[0].mxu0
      %v1764 = vpop.f32.mrb[0].mxu0
      %v1765 = vadd.f32 0.0, %v1764
      %v1766 = vpop.f32.mrb[0].mxu0
      %1767 = vmatprep.mubr.bf16.mxu0 0
      %1768 = vmatmul.mubr.bf16.gmra.mrb[0].mxu0 %v1142
      %v1769 = vpop.f32.mrb[0].mxu0
      %v1770 = vadd.f32 0.0, %v1769
      %v1771 = vpop.f32.mrb[0].mxu0
      %v1772 = vpop.f32.mrb[0].mxu0
      %v1773 = vadd.f32 0.0, %v1772
      %v1774 = vpop.f32.mrb[0].mxu0
      %1775 = vmatprep.mubr.bf16.mxu0 0
      %1776 = vmatmul.mubr.bf16.gmra.mrb[0].mxu0 %v1144
      %v1777 = vpop.f32.mrb[0].mxu0
      %v1778 = vadd.f32 0.0, %v1777
      %v1779 = vpop.f32.mrb[0].mxu0
      %v1780 = vpop.f32.mrb[0].mxu0
      %v1781 = vadd.f32 0.0, %v1780
      %v1782 = vpop.f32.mrb[0].mxu0
      %1783 = vmatprep.mubr.bf16.mxu0 0
      %1784 = vmatmul.mubr.bf16.gmra.mrb[0].mxu0 %v1146
      %v1785 = vpop.f32.mrb[0].mxu0
      %v1786 = vadd.f32 0.0, %v1785
      %v1787 = vpop.f32.mrb[0].mxu0
      %v1788 = vpop.f32.mrb[0].mxu0
      %v1789 = vadd.f32 0.0, %v1788
      %v1790 = vpop.f32.mrb[0].mxu0
      %1791 = vmatprep.mubr.bf16.mxu0 0
      %1792 = vmatmul.mubr.bf16.gmra.mrb[0].mxu0 %v1634
      %v1793 = vpop.f32.mrb[0].mxu0
      %v1794 = vadd.f32 0.0, %v1793
      %v1795 = vpop.f32.mrb[0].mxu0
      %v1796 = vpop.f32.mrb[0].mxu0
      %v1797 = vadd.f32 0.0, %v1796
      %v1798 = vpop.f32.mrb[0].mxu0
      %1799 = vdwg.mxu0
      %v1800 = vadd.f32 %v1599, %v1674
      %v1801 = vadd.f32 %v1600, %v1677
      %v1802 = vadd.f32 %v1601, %v1682
      %v1803 = vadd.f32 %v1602, %v1685
      %v1804 = vadd.f32 %v1603, %v1690
      %v1805 = vadd.f32 %v1604, %v1693
      %v1806 = vadd.f32 %v1605, %v1698
      %v1807 = vadd.f32 %v1606, %v1701
      %v1808 = vadd.f32 %v1607, %v1706
      %v1809 = vadd.f32 %v1608, %v1709
      %v1810 = vadd.f32 %v1609, %v1714
      %v1811 = vadd.f32 %v1610, %v1717
      %v1812 = vadd.f32 %v1611, %v1722
      %v1813 = vadd.f32 %v1612, %v1725
      %v1814 = vadd.f32 %v1613, %v1730
      %v1815 = vadd.f32 %v1614, %v1733
      %v1816 = vadd.f32 %v1615, %v1738
      %v1817 = vadd.f32 %v1616, %v1741
      %v1818 = vadd.f32 %v1617, %v1746
      %v1819 = vadd.f32 %v1618, %v1749
      %v1820 = vadd.f32 %v1619, %v1754
      %v1821 = vadd.f32 %v1620, %v1757
      %v1822 = vadd.f32 %v1621, %v1762
      %v1823 = vadd.f32 %v1622, %v1765
      %v1824 = vadd.f32 %v1623, %v1770
      %v1825 = vadd.f32 %v1624, %v1773
      %v1826 = vadd.f32 %v1625, %v1778
      %v1827 = vadd.f32 %v1626, %v1781
      %v1828 = vadd.f32 %v1627, %v1786
      %v1829 = vadd.f32 %v1628, %v1789
      %v1830 = vadd.f32 %v1629, %v1794
      %v1831 = vadd.f32 %v1630, %v1797
      %v1832 = vshrl.u32 %v721, 16
      %v1834 = vshll.u32 %v721, 16
      %v1836 = vrot.slane %v1834, 1
      %v1837 = vor.u32 %v1832, %v1836
      %v1839 = vshll.u32 %v722, 16
      %v1841 = vrot.slane %v1839, 1
      %v1842 = vsel %vm724, %v1837, %v1841
      %s1843 = scalar_lea.vmem %s1, 16
      %v1844 = vld [vmem:[%s1843] sm:$0xf]
      %v1846 = vsel %vm907, %v1842, 0
      %v1849 = vsel %vm953, %v1844, 0
      %1851 = vmatprep.subr.bf16.mxu0 0
      %1852 = vmatpush1.bf16.msra.mxu0 %v1849
      %1853 = vmatprep.subr.bf16.mxu0 0
      %1854 = vmatpush1.bf16.msra.mxu0 0
      %1855 = vmatprep.subr.bf16.mxu0 0
      %1856 = vmatpush1.bf16.msra.mxu0 0
      %1857 = vmatprep.subr.bf16.mxu0 0
      %1858 = vmatpush1.bf16.msra.mxu0 0
      %1859 = vmatprep.subr.bf16.mxu0 0
      %1860 = vmatpush1.bf16.msra.mxu0 0
      %1861 = vmatprep.subr.bf16.mxu0 0
      %1862 = vmatpush1.bf16.msra.mxu0 0
      %1863 = vmatprep.subr.bf16.mxu0 0
      %1864 = vmatpush1.bf16.msra.mxu0 0
      %1865 = vmatprep.subr.bf16.mxu0 0
      %1866 = vmatpush1.bf16.msra.mxu0 0
      %1867 = vmatprep.subr.bf16.mxu0 0
      %1868 = vmatpush1.bf16.msra.mxu0 0
      %1869 = vmatprep.subr.bf16.mxu0 0
      %1870 = vmatpush1.bf16.msra.mxu0 0
      %1871 = vmatprep.subr.bf16.mxu0 0
      %1872 = vmatpush1.bf16.msra.mxu0 0
      %1873 = vmatprep.subr.bf16.mxu0 0
      %1874 = vmatpush1.bf16.msra.mxu0 0
      %1875 = vmatprep.subr.bf16.mxu0 0
      %1876 = vmatpush1.bf16.msra.mxu0 0
      %1877 = vmatprep.subr.bf16.mxu0 0
      %1878 = vmatpush1.bf16.msra.mxu0 0
      %1879 = vmatprep.subr.bf16.mxu0 0
      %1880 = vmatpush1.bf16.msra.mxu0 0
      %1881 = vmatprep.subr.bf16.mxu0 0
      %1882 = vmatpush1.bf16.msra.mxu0 0
      %1883 = vmatprep.mubr.bf16.mxu0 0
      %1884 = vmatmul.mubr.bf16.gmra.mrb[0].mxu0 %v912
      %v1885 = vpop.f32.mrb[0].mxu0
      %v1886 = vadd.f32 0.0, %v1885
      %v1887 = vpop.f32.mrb[0].mxu0
      %v1888 = vpop.f32.mrb[0].mxu0
      %v1889 = vadd.f32 0.0, %v1888
      %v1890 = vpop.f32.mrb[0].mxu0
      %1891 = vmatprep.mubr.bf16.mxu0 0
      %1892 = vmatmul.mubr.bf16.gmra.mrb[0].mxu0 %v909
      %v1893 = vpop.f32.mrb[0].mxu0
      %v1894 = vadd.f32 0.0, %v1893
      %v1895 = vpop.f32.mrb[0].mxu0
      %v1896 = vpop.f32.mrb[0].mxu0
      %v1897 = vadd.f32 0.0, %v1896
      %v1898 = vpop.f32.mrb[0].mxu0
      %1899 = vmatprep.mubr.bf16.mxu0 0
      %1900 = vmatmul.mubr.bf16.gmra.mrb[0].mxu0 %v915
      %v1901 = vpop.f32.mrb[0].mxu0
      %v1902 = vadd.f32 0.0, %v1901
      %v1903 = vpop.f32.mrb[0].mxu0
      %v1904 = vpop.f32.mrb[0].mxu0
      %v1905 = vadd.f32 0.0, %v1904
      %v1906 = vpop.f32.mrb[0].mxu0
      %1907 = vmatprep.mubr.bf16.mxu0 0
      %1908 = vmatmul.mubr.bf16.gmra.mrb[0].mxu0 %v918
      %v1909 = vpop.f32.mrb[0].mxu0
      %v1910 = vadd.f32 0.0, %v1909
      %v1911 = vpop.f32.mrb[0].mxu0
      %v1912 = vpop.f32.mrb[0].mxu0
      %v1913 = vadd.f32 0.0, %v1912
      %v1914 = vpop.f32.mrb[0].mxu0
      %1915 = vmatprep.mubr.bf16.mxu0 0
      %1916 = vmatmul.mubr.bf16.gmra.mrb[0].mxu0 %v921
      %v1917 = vpop.f32.mrb[0].mxu0
      %v1918 = vadd.f32 0.0, %v1917
      %v1919 = vpop.f32.mrb[0].mxu0
      %v1920 = vpop.f32.mrb[0].mxu0
      %v1921 = vadd.f32 0.0, %v1920
      %v1922 = vpop.f32.mrb[0].mxu0
      %1923 = vmatprep.mubr.bf16.mxu0 0
      %1924 = vmatmul.mubr.bf16.gmra.mrb[0].mxu0 %v924
      %v1925 = vpop.f32.mrb[0].mxu0
      %v1926 = vadd.f32 0.0, %v1925
      %v1927 = vpop.f32.mrb[0].mxu0
      %v1928 = vpop.f32.mrb[0].mxu0
      %v1929 = vadd.f32 0.0, %v1928
      %v1930 = vpop.f32.mrb[0].mxu0
      %1931 = vmatprep.mubr.bf16.mxu0 0
      %1932 = vmatmul.mubr.bf16.gmra.mrb[0].mxu0 %v927
      %v1933 = vpop.f32.mrb[0].mxu0
      %v1934 = vadd.f32 0.0, %v1933
      %v1935 = vpop.f32.mrb[0].mxu0
      %v1936 = vpop.f32.mrb[0].mxu0
      %v1937 = vadd.f32 0.0, %v1936
      %v1938 = vpop.f32.mrb[0].mxu0
      %1939 = vmatprep.mubr.bf16.mxu0 0
      %1940 = vmatmul.mubr.bf16.gmra.mrb[0].mxu0 %v930
      %v1941 = vpop.f32.mrb[0].mxu0
      %v1942 = vadd.f32 0.0, %v1941
      %v1943 = vpop.f32.mrb[0].mxu0
      %v1944 = vpop.f32.mrb[0].mxu0
      %v1945 = vadd.f32 0.0, %v1944
      %v1946 = vpop.f32.mrb[0].mxu0
      %1947 = vmatprep.mubr.bf16.mxu0 0
      %1948 = vmatmul.mubr.bf16.gmra.mrb[0].mxu0 %v933
      %v1949 = vpop.f32.mrb[0].mxu0
      %v1950 = vadd.f32 0.0, %v1949
      %v1951 = vpop.f32.mrb[0].mxu0
      %v1952 = vpop.f32.mrb[0].mxu0
      %v1953 = vadd.f32 0.0, %v1952
      %v1954 = vpop.f32.mrb[0].mxu0
      %1955 = vmatprep.mubr.bf16.mxu0 0
      %1956 = vmatmul.mubr.bf16.gmra.mrb[0].mxu0 %v936
      %v1957 = vpop.f32.mrb[0].mxu0
      %v1958 = vadd.f32 0.0, %v1957
      %v1959 = vpop.f32.mrb[0].mxu0
      %v1960 = vpop.f32.mrb[0].mxu0
      %v1961 = vadd.f32 0.0, %v1960
      %v1962 = vpop.f32.mrb[0].mxu0
      %1963 = vmatprep.mubr.bf16.mxu0 0
      %1964 = vmatmul.mubr.bf16.gmra.mrb[0].mxu0 %v939
      %v1965 = vpop.f32.mrb[0].mxu0
      %v1966 = vadd.f32 0.0, %v1965
      %v1967 = vpop.f32.mrb[0].mxu0
      %v1968 = vpop.f32.mrb[0].mxu0
      %v1969 = vadd.f32 0.0, %v1968
      %v1970 = vpop.f32.mrb[0].mxu0
      %1971 = vmatprep.mubr.bf16.mxu0 0
      %1972 = vmatmul.mubr.bf16.gmra.mrb[0].mxu0 %v942
      %v1973 = vpop.f32.mrb[0].mxu0
      %v1974 = vadd.f32 0.0, %v1973
      %v1975 = vpop.f32.mrb[0].mxu0
      %v1976 = vpop.f32.mrb[0].mxu0
      %v1977 = vadd.f32 0.0, %v1976
      %v1978 = vpop.f32.mrb[0].mxu0
      %1979 = vmatprep.mubr.bf16.mxu0 0
      %1980 = vmatmul.mubr.bf16.gmra.mrb[0].mxu0 %v945
      %v1981 = vpop.f32.mrb[0].mxu0
      %v1982 = vadd.f32 0.0, %v1981
      %v1983 = vpop.f32.mrb[0].mxu0
      %v1984 = vpop.f32.mrb[0].mxu0
      %v1985 = vadd.f32 0.0, %v1984
      %v1986 = vpop.f32.mrb[0].mxu0
      %1987 = vmatprep.mubr.bf16.mxu0 0
      %1988 = vmatmul.mubr.bf16.gmra.mrb[0].mxu0 %v948
      %v1989 = vpop.f32.mrb[0].mxu0
      %v1990 = vadd.f32 0.0, %v1989
      %v1991 = vpop.f32.mrb[0].mxu0
      %v1992 = vpop.f32.mrb[0].mxu0
      %v1993 = vadd.f32 0.0, %v1992
      %v1994 = vpop.f32.mrb[0].mxu0
      %1995 = vmatprep.mubr.bf16.mxu0 0
      %1996 = vmatmul.mubr.bf16.gmra.mrb[0].mxu0 %v951
      %v1997 = vpop.f32.mrb[0].mxu0
      %v1998 = vadd.f32 0.0, %v1997
      %v1999 = vpop.f32.mrb[0].mxu0
      %v2000 = vpop.f32.mrb[0].mxu0
      %v2001 = vadd.f32 0.0, %v2000
      %v2002 = vpop.f32.mrb[0].mxu0
      %2003 = vmatprep.mubr.bf16.mxu0 0
      %2004 = vmatmul.mubr.bf16.gmra.mrb[0].mxu0 %v1846
      %v2005 = vpop.f32.mrb[0].mxu0
      %v2006 = vadd.f32 0.0, %v2005
      %v2007 = vpop.f32.mrb[0].mxu0
      %v2008 = vpop.f32.mrb[0].mxu0
      %v2009 = vadd.f32 0.0, %v2008
      %v2010 = vpop.f32.mrb[0].mxu0
      %2011 = vdwg.mxu0
      %v2012 = vadd.f32 %v1800, %v1886
      %v2013 = vadd.f32 %v1801, %v1889
      %v2014 = vadd.f32 %v1802, %v1894
      %v2015 = vadd.f32 %v1803, %v1897
      %v2016 = vadd.f32 %v1804, %v1902
      %v2017 = vadd.f32 %v1805, %v1905
      %v2018 = vadd.f32 %v1806, %v1910
      %v2019 = vadd.f32 %v1807, %v1913
      %v2020 = vadd.f32 %v1808, %v1918
      %v2021 = vadd.f32 %v1809, %v1921
      %v2022 = vadd.f32 %v1810, %v1926
      %v2023 = vadd.f32 %v1811, %v1929
      %v2024 = vadd.f32 %v1812, %v1934
      %v2025 = vadd.f32 %v1813, %v1937
      %v2026 = vadd.f32 %v1814, %v1942
      %v2027 = vadd.f32 %v1815, %v1945
      %v2028 = vadd.f32 %v1816, %v1950
      %v2029 = vadd.f32 %v1817, %v1953
      %v2030 = vadd.f32 %v1818, %v1958
      %v2031 = vadd.f32 %v1819, %v1961
      %v2032 = vadd.f32 %v1820, %v1966
      %v2033 = vadd.f32 %v1821, %v1969
      %v2034 = vadd.f32 %v1822, %v1974
      %v2035 = vadd.f32 %v1823, %v1977
      %v2036 = vadd.f32 %v1824, %v1982
      %v2037 = vadd.f32 %v1825, %v1985
      %v2038 = vadd.f32 %v1826, %v1990
      %v2039 = vadd.f32 %v1827, %v1993
      %v2040 = vadd.f32 %v1828, %v1998
      %v2041 = vadd.f32 %v1829, %v2001
      %v2042 = vadd.f32 %v1830, %v2006
      %v2043 = vadd.f32 %v1831, %v2009
      %v2046 = vrot.slane %v721, 1
      %v2047 = vrot.slane %v722, 1
      %v2048 = vsel %vm1342, %v2046, %v2047
      %s2049 = scalar_lea.vmem %s1, 20
      %v2050 = vld [vmem:[%s2049] sm:$0xf]
      %v2052 = vsel %vm907, %v2048, 0
      %v2055 = vsel %vm953, %v2050, 0
      %2057 = vmatprep.subr.bf16.mxu0 0
      %2058 = vmatpush1.bf16.msra.mxu0 %v2055
      %2059 = vmatprep.subr.bf16.mxu0 0
      %2060 = vmatpush1.bf16.msra.mxu0 0
      %2061 = vmatprep.subr.bf16.mxu0 0
      %2062 = vmatpush1.bf16.msra.mxu0 0
      %2063 = vmatprep.subr.bf16.mxu0 0
      %2064 = vmatpush1.bf16.msra.mxu0 0
      %2065 = vmatprep.subr.bf16.mxu0 0
      %2066 = vmatpush1.bf16.msra.mxu0 0
      %2067 = vmatprep.subr.bf16.mxu0 0
      %2068 = vmatpush1.bf16.msra.mxu0 0
      %2069 = vmatprep.subr.bf16.mxu0 0
      %2070 = vmatpush1.bf16.msra.mxu0 0
      %2071 = vmatprep.subr.bf16.mxu0 0
      %2072 = vmatpush1.bf16.msra.mxu0 0
      %2073 = vmatprep.subr.bf16.mxu0 0
      %2074 = vmatpush1.bf16.msra.mxu0 0
      %2075 = vmatprep.subr.bf16.mxu0 0
      %2076 = vmatpush1.bf16.msra.mxu0 0
      %2077 = vmatprep.subr.bf16.mxu0 0
      %2078 = vmatpush1.bf16.msra.mxu0 0
      %2079 = vmatprep.subr.bf16.mxu0 0
      %2080 = vmatpush1.bf16.msra.mxu0 0
      %2081 = vmatprep.subr.bf16.mxu0 0
      %2082 = vmatpush1.bf16.msra.mxu0 0
      %2083 = vmatprep.subr.bf16.mxu0 0
      %2084 = vmatpush1.bf16.msra.mxu0 0
      %2085 = vmatprep.subr.bf16.mxu0 0
      %2086 = vmatpush1.bf16.msra.mxu0 0
      %2087 = vmatprep.subr.bf16.mxu0 0
      %2088 = vmatpush1.bf16.msra.mxu0 0
      %2089 = vmatprep.mubr.bf16.mxu0 0
      %2090 = vmatmul.mubr.bf16.gmra.mrb[0].mxu0 %v1394
      %v2091 = vpop.f32.mrb[0].mxu0
      %v2092 = vadd.f32 0.0, %v2091
      %v2093 = vpop.f32.mrb[0].mxu0
      %v2094 = vpop.f32.mrb[0].mxu0
      %v2095 = vadd.f32 0.0, %v2094
      %v2096 = vpop.f32.mrb[0].mxu0
      %2097 = vmatprep.mubr.bf16.mxu0 0
      %2098 = vmatmul.mubr.bf16.gmra.mrb[0].mxu0 %v1391
      %v2099 = vpop.f32.mrb[0].mxu0
      %v2100 = vadd.f32 0.0, %v2099
      %v2101 = vpop.f32.mrb[0].mxu0
      %v2102 = vpop.f32.mrb[0].mxu0
      %v2103 = vadd.f32 0.0, %v2102
      %v2104 = vpop.f32.mrb[0].mxu0
      %2105 = vmatprep.mubr.bf16.mxu0 0
      %2106 = vmatmul.mubr.bf16.gmra.mrb[0].mxu0 %v1397
      %v2107 = vpop.f32.mrb[0].mxu0
      %v2108 = vadd.f32 0.0, %v2107
      %v2109 = vpop.f32.mrb[0].mxu0
      %v2110 = vpop.f32.mrb[0].mxu0
      %v2111 = vadd.f32 0.0, %v2110
      %v2112 = vpop.f32.mrb[0].mxu0
      %2113 = vmatprep.mubr.bf16.mxu0 0
      %2114 = vmatmul.mubr.bf16.gmra.mrb[0].mxu0 %v1400
      %v2115 = vpop.f32.mrb[0].mxu0
      %v2116 = vadd.f32 0.0, %v2115
      %v2117 = vpop.f32.mrb[0].mxu0
      %v2118 = vpop.f32.mrb[0].mxu0
      %v2119 = vadd.f32 0.0, %v2118
      %v2120 = vpop.f32.mrb[0].mxu0
      %2121 = vmatprep.mubr.bf16.mxu0 0
      %2122 = vmatmul.mubr.bf16.gmra.mrb[0].mxu0 %v1403
      %v2123 = vpop.f32.mrb[0].mxu0
      %v2124 = vadd.f32 0.0, %v2123
      %v2125 = vpop.f32.mrb[0].mxu0
      %v2126 = vpop.f32.mrb[0].mxu0
      %v2127 = vadd.f32 0.0, %v2126
      %v2128 = vpop.f32.mrb[0].mxu0
      %2129 = vmatprep.mubr.bf16.mxu0 0
      %2130 = vmatmul.mubr.bf16.gmra.mrb[0].mxu0 %v1406
      %v2131 = vpop.f32.mrb[0].mxu0
      %v2132 = vadd.f32 0.0, %v2131
      %v2133 = vpop.f32.mrb[0].mxu0
      %v2134 = vpop.f32.mrb[0].mxu0
      %v2135 = vadd.f32 0.0, %v2134
      %v2136 = vpop.f32.mrb[0].mxu0
      %2137 = vmatprep.mubr.bf16.mxu0 0
      %2138 = vmatmul.mubr.bf16.gmra.mrb[0].mxu0 %v1409
      %v2139 = vpop.f32.mrb[0].mxu0
      %v2140 = vadd.f32 0.0, %v2139
      %v2141 = vpop.f32.mrb[0].mxu0
      %v2142 = vpop.f32.mrb[0].mxu0
      %v2143 = vadd.f32 0.0, %v2142
      %v2144 = vpop.f32.mrb[0].mxu0
      %2145 = vmatprep.mubr.bf16.mxu0 0
      %2146 = vmatmul.mubr.bf16.gmra.mrb[0].mxu0 %v1412
      %v2147 = vpop.f32.mrb[0].mxu0
      %v2148 = vadd.f32 0.0, %v2147
      %v2149 = vpop.f32.mrb[0].mxu0
      %v2150 = vpop.f32.mrb[0].mxu0
      %v2151 = vadd.f32 0.0, %v2150
      %v2152 = vpop.f32.mrb[0].mxu0
      %2153 = vmatprep.mubr.bf16.mxu0 0
      %2154 = vmatmul.mubr.bf16.gmra.mrb[0].mxu0 %v1415
      %v2155 = vpop.f32.mrb[0].mxu0
      %v2156 = vadd.f32 0.0, %v2155
      %v2157 = vpop.f32.mrb[0].mxu0
      %v2158 = vpop.f32.mrb[0].mxu0
      %v2159 = vadd.f32 0.0, %v2158
      %v2160 = vpop.f32.mrb[0].mxu0
      %2161 = vmatprep.mubr.bf16.mxu0 0
      %2162 = vmatmul.mubr.bf16.gmra.mrb[0].mxu0 %v1418
      %v2163 = vpop.f32.mrb[0].mxu0
      %v2164 = vadd.f32 0.0, %v2163
      %v2165 = vpop.f32.mrb[0].mxu0
      %v2166 = vpop.f32.mrb[0].mxu0
      %v2167 = vadd.f32 0.0, %v2166
      %v2168 = vpop.f32.mrb[0].mxu0
      %2169 = vmatprep.mubr.bf16.mxu0 0
      %2170 = vmatmul.mubr.bf16.gmra.mrb[0].mxu0 %v1421
      %v2171 = vpop.f32.mrb[0].mxu0
      %v2172 = vadd.f32 0.0, %v2171
      %v2173 = vpop.f32.mrb[0].mxu0
      %v2174 = vpop.f32.mrb[0].mxu0
      %v2175 = vadd.f32 0.0, %v2174
      %v2176 = vpop.f32.mrb[0].mxu0
      %2177 = vmatprep.mubr.bf16.mxu0 0
      %2178 = vmatmul.mubr.bf16.gmra.mrb[0].mxu0 %v1424
      %v2179 = vpop.f32.mrb[0].mxu0
      %v2180 = vadd.f32 0.0, %v2179
      %v2181 = vpop.f32.mrb[0].mxu0
      %v2182 = vpop.f32.mrb[0].mxu0
      %v2183 = vadd.f32 0.0, %v2182
      %v2184 = vpop.f32.mrb[0].mxu0
      %2185 = vmatprep.mubr.bf16.mxu0 0
      %2186 = vmatmul.mubr.bf16.gmra.mrb[0].mxu0 %v1427
      %v2187 = vpop.f32.mrb[0].mxu0
      %v2188 = vadd.f32 0.0, %v2187
      %v2189 = vpop.f32.mrb[0].mxu0
      %v2190 = vpop.f32.mrb[0].mxu0
      %v2191 = vadd.f32 0.0, %v2190
      %v2192 = vpop.f32.mrb[0].mxu0
      %2193 = vmatprep.mubr.bf16.mxu0 0
      %2194 = vmatmul.mubr.bf16.gmra.mrb[0].mxu0 %v1430
      %v2195 = vpop.f32.mrb[0].mxu0
      %v2196 = vadd.f32 0.0, %v2195
      %v2197 = vpop.f32.mrb[0].mxu0
      %v2198 = vpop.f32.mrb[0].mxu0
      %v2199 = vadd.f32 0.0, %v2198
      %v2200 = vpop.f32.mrb[0].mxu0
      %2201 = vmatprep.mubr.bf16.mxu0 0
      %2202 = vmatmul.mubr.bf16.gmra.mrb[0].mxu0 %v1433
      %v2203 = vpop.f32.mrb[0].mxu0
      %v2204 = vadd.f32 0.0, %v2203
      %v2205 = vpop.f32.mrb[0].mxu0
      %v2206 = vpop.f32.mrb[0].mxu0
      %v2207 = vadd.f32 0.0, %v2206
      %v2208 = vpop.f32.mrb[0].mxu0
      %2209 = vmatprep.mubr.bf16.mxu0 0
      %2210 = vmatmul.mubr.bf16.gmra.mrb[0].mxu0 %v2052
      %v2211 = vpop.f32.mrb[0].mxu0
      %v2212 = vadd.f32 0.0, %v2211
      %v2213 = vpop.f32.mrb[0].mxu0
      %v2214 = vpop.f32.mrb[0].mxu0
      %v2215 = vadd.f32 0.0, %v2214
      %v2216 = vpop.f32.mrb[0].mxu0
      %2217 = vdwg.mxu0
      %v2218 = vadd.f32 %v2012, %v2092
      %v2219 = vadd.f32 %v2013, %v2095
      %v2220 = vadd.f32 %v2014, %v2100
      %v2221 = vadd.f32 %v2015, %v2103
      %v2222 = vadd.f32 %v2016, %v2108
      %v2223 = vadd.f32 %v2017, %v2111
      %v2224 = vadd.f32 %v2018, %v2116
      %v2225 = vadd.f32 %v2019, %v2119
      %v2226 = vadd.f32 %v2020, %v2124
      %v2227 = vadd.f32 %v2021, %v2127
      %v2228 = vadd.f32 %v2022, %v2132
      %v2229 = vadd.f32 %v2023, %v2135
      %v2230 = vadd.f32 %v2024, %v2140
      %v2231 = vadd.f32 %v2025, %v2143
      %v2232 = vadd.f32 %v2026, %v2148
      %v2233 = vadd.f32 %v2027, %v2151
      %v2234 = vadd.f32 %v2028, %v2156
      %v2235 = vadd.f32 %v2029, %v2159
      %v2236 = vadd.f32 %v2030, %v2164
      %v2237 = vadd.f32 %v2031, %v2167
      %v2238 = vadd.f32 %v2032, %v2172
      %v2239 = vadd.f32 %v2033, %v2175
      %v2240 = vadd.f32 %v2034, %v2180
      %v2241 = vadd.f32 %v2035, %v2183
      %v2242 = vadd.f32 %v2036, %v2188
      %v2243 = vadd.f32 %v2037, %v2191
      %v2244 = vadd.f32 %v2038, %v2196
      %v2245 = vadd.f32 %v2039, %v2199
      %v2246 = vadd.f32 %v2040, %v2204
      %v2247 = vadd.f32 %v2041, %v2207
      %v2248 = vadd.f32 %v2042, %v2212
      %v2249 = vadd.f32 %v2043, %v2215
      %s2250 = scalar_lea.vmem %s1, 24
      %v2251 = vld [vmem:[%s2250] sm:$0xf]
      %v2253 = vsel %vm953, %v2251, 0
      %2255 = vmatprep.subr.bf16.mxu0 0
      %2256 = vmatpush1.bf16.msra.mxu0 %v2253
      %2257 = vmatprep.subr.bf16.mxu0 0
      %2258 = vmatpush1.bf16.msra.mxu0 0
      %2259 = vmatprep.subr.bf16.mxu0 0
      %2260 = vmatpush1.bf16.msra.mxu0 0
      %2261 = vmatprep.subr.bf16.mxu0 0
      %2262 = vmatpush1.bf16.msra.mxu0 0
      %2263 = vmatprep.subr.bf16.mxu0 0
      %2264 = vmatpush1.bf16.msra.mxu0 0
      %2265 = vmatprep.subr.bf16.mxu0 0
      %2266 = vmatpush1.bf16.msra.mxu0 0
      %2267 = vmatprep.subr.bf16.mxu0 0
      %2268 = vmatpush1.bf16.msra.mxu0 0
      %2269 = vmatprep.subr.bf16.mxu0 0
      %2270 = vmatpush1.bf16.msra.mxu0 0
      %2271 = vmatprep.subr.bf16.mxu0 0
      %2272 = vmatpush1.bf16.msra.mxu0 0
      %2273 = vmatprep.subr.bf16.mxu0 0
      %2274 = vmatpush1.bf16.msra.mxu0 0
      %2275 = vmatprep.subr.bf16.mxu0 0
      %2276 = vmatpush1.bf16.msra.mxu0 0
      %2277 = vmatprep.subr.bf16.mxu0 0
      %2278 = vmatpush1.bf16.msra.mxu0 0
      %2279 = vmatprep.subr.bf16.mxu0 0
      %2280 = vmatpush1.bf16.msra.mxu0 0
      %2281 = vmatprep.subr.bf16.mxu0 0
      %2282 = vmatpush1.bf16.msra.mxu0 0
      %2283 = vmatprep.subr.bf16.mxu0 0
      %2284 = vmatpush1.bf16.msra.mxu0 0
      %2285 = vmatprep.subr.bf16.mxu0 0
      %2286 = vmatpush1.bf16.msra.mxu0 0
      %2287 = vmatprep.mubr.bf16.mxu0 0
      %2288 = vmatmul.mubr.bf16.gmra.mrb[0].mxu0 %v1118
      %v2289 = vpop.f32.mrb[0].mxu0
      %v2290 = vadd.f32 0.0, %v2289
      %v2291 = vpop.f32.mrb[0].mxu0
      %v2292 = vpop.f32.mrb[0].mxu0
      %v2293 = vadd.f32 0.0, %v2292
      %v2294 = vpop.f32.mrb[0].mxu0
      %2295 = vmatprep.mubr.bf16.mxu0 0
      %2296 = vmatmul.mubr.bf16.gmra.mrb[0].mxu0 %v1122
      %v2297 = vpop.f32.mrb[0].mxu0
      %v2298 = vadd.f32 0.0, %v2297
      %v2299 = vpop.f32.mrb[0].mxu0
      %v2300 = vpop.f32.mrb[0].mxu0
      %v2301 = vadd.f32 0.0, %v2300
      %v2302 = vpop.f32.mrb[0].mxu0
      %2303 = vmatprep.mubr.bf16.mxu0 0
      %2304 = vmatmul.mubr.bf16.gmra.mrb[0].mxu0 %v1124
      %v2305 = vpop.f32.mrb[0].mxu0
      %v2306 = vadd.f32 0.0, %v2305
      %v2307 = vpop.f32.mrb[0].mxu0
      %v2308 = vpop.f32.mrb[0].mxu0
      %v2309 = vadd.f32 0.0, %v2308
      %v2310 = vpop.f32.mrb[0].mxu0
      %2311 = vmatprep.mubr.bf16.mxu0 0
      %2312 = vmatmul.mubr.bf16.gmra.mrb[0].mxu0 %v1126
      %v2313 = vpop.f32.mrb[0].mxu0
      %v2314 = vadd.f32 0.0, %v2313
      %v2315 = vpop.f32.mrb[0].mxu0
      %v2316 = vpop.f32.mrb[0].mxu0
      %v2317 = vadd.f32 0.0, %v2316
      %v2318 = vpop.f32.mrb[0].mxu0
      %2319 = vmatprep.mubr.bf16.mxu0 0
      %2320 = vmatmul.mubr.bf16.gmra.mrb[0].mxu0 %v1128
      %v2321 = vpop.f32.mrb[0].mxu0
      %v2322 = vadd.f32 0.0, %v2321
      %v2323 = vpop.f32.mrb[0].mxu0
      %v2324 = vpop.f32.mrb[0].mxu0
      %v2325 = vadd.f32 0.0, %v2324
      %v2326 = vpop.f32.mrb[0].mxu0
      %2327 = vmatprep.mubr.bf16.mxu0 0
      %2328 = vmatmul.mubr.bf16.gmra.mrb[0].mxu0 %v1130
      %v2329 = vpop.f32.mrb[0].mxu0
      %v2330 = vadd.f32 0.0, %v2329
      %v2331 = vpop.f32.mrb[0].mxu0
      %v2332 = vpop.f32.mrb[0].mxu0
      %v2333 = vadd.f32 0.0, %v2332
      %v2334 = vpop.f32.mrb[0].mxu0
      %2335 = vmatprep.mubr.bf16.mxu0 0
      %2336 = vmatmul.mubr.bf16.gmra.mrb[0].mxu0 %v1132
      %v2337 = vpop.f32.mrb[0].mxu0
      %v2338 = vadd.f32 0.0, %v2337
      %v2339 = vpop.f32.mrb[0].mxu0
      %v2340 = vpop.f32.mrb[0].mxu0
      %v2341 = vadd.f32 0.0, %v2340
      %v2342 = vpop.f32.mrb[0].mxu0
      %2343 = vmatprep.mubr.bf16.mxu0 0
      %2344 = vmatmul.mubr.bf16.gmra.mrb[0].mxu0 %v1134
      %v2345 = vpop.f32.mrb[0].mxu0
      %v2346 = vadd.f32 0.0, %v2345
      %v2347 = vpop.f32.mrb[0].mxu0
      %v2348 = vpop.f32.mrb[0].mxu0
      %v2349 = vadd.f32 0.0, %v2348
      %v2350 = vpop.f32.mrb[0].mxu0
      %2351 = vmatprep.mubr.bf16.mxu0 0
      %2352 = vmatmul.mubr.bf16.gmra.mrb[0].mxu0 %v1136
      %v2353 = vpop.f32.mrb[0].mxu0
      %v2354 = vadd.f32 0.0, %v2353
      %v2355 = vpop.f32.mrb[0].mxu0
      %v2356 = vpop.f32.mrb[0].mxu0
      %v2357 = vadd.f32 0.0, %v2356
      %v2358 = vpop.f32.mrb[0].mxu0
      %2359 = vmatprep.mubr.bf16.mxu0 0
      %2360 = vmatmul.mubr.bf16.gmra.mrb[0].mxu0 %v1138
      %v2361 = vpop.f32.mrb[0].mxu0
      %v2362 = vadd.f32 0.0, %v2361
      %v2363 = vpop.f32.mrb[0].mxu0
      %v2364 = vpop.f32.mrb[0].mxu0
      %v2365 = vadd.f32 0.0, %v2364
      %v2366 = vpop.f32.mrb[0].mxu0
      %2367 = vmatprep.mubr.bf16.mxu0 0
      %2368 = vmatmul.mubr.bf16.gmra.mrb[0].mxu0 %v1140
      %v2369 = vpop.f32.mrb[0].mxu0
      %v2370 = vadd.f32 0.0, %v2369
      %v2371 = vpop.f32.mrb[0].mxu0
      %v2372 = vpop.f32.mrb[0].mxu0
      %v2373 = vadd.f32 0.0, %v2372
      %v2374 = vpop.f32.mrb[0].mxu0
      %2375 = vmatprep.mubr.bf16.mxu0 0
      %2376 = vmatmul.mubr.bf16.gmra.mrb[0].mxu0 %v1142
      %v2377 = vpop.f32.mrb[0].mxu0
      %v2378 = vadd.f32 0.0, %v2377
      %v2379 = vpop.f32.mrb[0].mxu0
      %v2380 = vpop.f32.mrb[0].mxu0
      %v2381 = vadd.f32 0.0, %v2380
      %v2382 = vpop.f32.mrb[0].mxu0
      %2383 = vmatprep.mubr.bf16.mxu0 0
      %2384 = vmatmul.mubr.bf16.gmra.mrb[0].mxu0 %v1144
      %v2385 = vpop.f32.mrb[0].mxu0
      %v2386 = vadd.f32 0.0, %v2385
      %v2387 = vpop.f32.mrb[0].mxu0
      %v2388 = vpop.f32.mrb[0].mxu0
      %v2389 = vadd.f32 0.0, %v2388
      %v2390 = vpop.f32.mrb[0].mxu0
      %2391 = vmatprep.mubr.bf16.mxu0 0
      %2392 = vmatmul.mubr.bf16.gmra.mrb[0].mxu0 %v1146
      %v2393 = vpop.f32.mrb[0].mxu0
      %v2394 = vadd.f32 0.0, %v2393
      %v2395 = vpop.f32.mrb[0].mxu0
      %v2396 = vpop.f32.mrb[0].mxu0
      %v2397 = vadd.f32 0.0, %v2396
      %v2398 = vpop.f32.mrb[0].mxu0
      %2399 = vmatprep.mubr.bf16.mxu0 0
      %2400 = vmatmul.mubr.bf16.gmra.mrb[0].mxu0 %v1634
      %v2401 = vpop.f32.mrb[0].mxu0
      %v2402 = vadd.f32 0.0, %v2401
      %v2403 = vpop.f32.mrb[0].mxu0
      %v2404 = vpop.f32.mrb[0].mxu0
      %v2405 = vadd.f32 0.0, %v2404
      %v2406 = vpop.f32.mrb[0].mxu0
      %2407 = vmatprep.mubr.bf16.mxu0 0
      %2408 = vmatmul.mubr.bf16.gmra.mrb[0].mxu0 %v1146
      %v2409 = vpop.f32.mrb[0].mxu0
      %v2410 = vadd.f32 0.0, %v2409
      %v2411 = vpop.f32.mrb[0].mxu0
      %v2412 = vpop.f32.mrb[0].mxu0
      %v2413 = vadd.f32 0.0, %v2412
      %v2414 = vpop.f32.mrb[0].mxu0
      %2415 = vdwg.mxu0
      %v2416 = vadd.f32 %v2218, %v2290
      %v2417 = vadd.f32 %v2219, %v2293
      %v2418 = vadd.f32 %v2220, %v2298
      %v2419 = vadd.f32 %v2221, %v2301
      %v2420 = vadd.f32 %v2222, %v2306
      %v2421 = vadd.f32 %v2223, %v2309
      %v2422 = vadd.f32 %v2224, %v2314
      %v2423 = vadd.f32 %v2225, %v2317
      %v2424 = vadd.f32 %v2226, %v2322
      %v2425 = vadd.f32 %v2227, %v2325
      %v2426 = vadd.f32 %v2228, %v2330
      %v2427 = vadd.f32 %v2229, %v2333
      %v2428 = vadd.f32 %v2230, %v2338
      %v2429 = vadd.f32 %v2231, %v2341
      %v2430 = vadd.f32 %v2232, %v2346
      %v2431 = vadd.f32 %v2233, %v2349
      %v2432 = vadd.f32 %v2234, %v2354
      %v2433 = vadd.f32 %v2235, %v2357
      %v2434 = vadd.f32 %v2236, %v2362
      %v2435 = vadd.f32 %v2237, %v2365
      %v2436 = vadd.f32 %v2238, %v2370
      %v2437 = vadd.f32 %v2239, %v2373
      %v2438 = vadd.f32 %v2240, %v2378
      %v2439 = vadd.f32 %v2241, %v2381
      %v2440 = vadd.f32 %v2242, %v2386
      %v2441 = vadd.f32 %v2243, %v2389
      %v2442 = vadd.f32 %v2244, %v2394
      %v2443 = vadd.f32 %v2245, %v2397
      %v2444 = vadd.f32 %v2246, %v2402
      %v2445 = vadd.f32 %v2247, %v2405
      %v2446 = vadd.f32 %v2248, %v2410
      %v2447 = vadd.f32 %v2249, %v2413
      %s2448 = scalar_lea.vmem %s1, 28
      %v2449 = vld [vmem:[%s2448] sm:$0xf]
      %v2451 = vsel %vm953, %v2449, 0
      %2453 = vmatprep.subr.bf16.mxu0 0
      %2454 = vmatpush1.bf16.msra.mxu0 %v2451
      %2455 = vmatprep.subr.bf16.mxu0 0
      %2456 = vmatpush1.bf16.msra.mxu0 0
      %2457 = vmatprep.subr.bf16.mxu0 0
      %2458 = vmatpush1.bf16.msra.mxu0 0
      %2459 = vmatprep.subr.bf16.mxu0 0
      %2460 = vmatpush1.bf16.msra.mxu0 0
      %2461 = vmatprep.subr.bf16.mxu0 0
      %2462 = vmatpush1.bf16.msra.mxu0 0
      %2463 = vmatprep.subr.bf16.mxu0 0
      %2464 = vmatpush1.bf16.msra.mxu0 0
      %2465 = vmatprep.subr.bf16.mxu0 0
      %2466 = vmatpush1.bf16.msra.mxu0 0
      %2467 = vmatprep.subr.bf16.mxu0 0
      %2468 = vmatpush1.bf16.msra.mxu0 0
      %2469 = vmatprep.subr.bf16.mxu0 0
      %2470 = vmatpush1.bf16.msra.mxu0 0
      %2471 = vmatprep.subr.bf16.mxu0 0
      %2472 = vmatpush1.bf16.msra.mxu0 0
      %2473 = vmatprep.subr.bf16.mxu0 0
      %2474 = vmatpush1.bf16.msra.mxu0 0
      %2475 = vmatprep.subr.bf16.mxu0 0
      %2476 = vmatpush1.bf16.msra.mxu0 0
      %2477 = vmatprep.subr.bf16.mxu0 0
      %2478 = vmatpush1.bf16.msra.mxu0 0
      %2479 = vmatprep.subr.bf16.mxu0 0
      %2480 = vmatpush1.bf16.msra.mxu0 0
      %2481 = vmatprep.subr.bf16.mxu0 0
      %2482 = vmatpush1.bf16.msra.mxu0 0
      %2483 = vmatprep.subr.bf16.mxu0 0
      %2484 = vmatpush1.bf16.msra.mxu0 0
      %2485 = vmatprep.mubr.bf16.mxu0 0
      %2486 = vmatmul.mubr.bf16.gmra.mrb[0].mxu0 %v909
      %v2487 = vpop.f32.mrb[0].mxu0
      %v2488 = vadd.f32 0.0, %v2487
      %v2489 = vpop.f32.mrb[0].mxu0
      %v2490 = vpop.f32.mrb[0].mxu0
      %v2491 = vadd.f32 0.0, %v2490
      %v2492 = vpop.f32.mrb[0].mxu0
      %2493 = vmatprep.mubr.bf16.mxu0 0
      %2494 = vmatmul.mubr.bf16.gmra.mrb[0].mxu0 %v915
      %v2495 = vpop.f32.mrb[0].mxu0
      %v2496 = vadd.f32 0.0, %v2495
      %v2497 = vpop.f32.mrb[0].mxu0
      %v2498 = vpop.f32.mrb[0].mxu0
      %v2499 = vadd.f32 0.0, %v2498
      %v2500 = vpop.f32.mrb[0].mxu0
      %2501 = vmatprep.mubr.bf16.mxu0 0
      %2502 = vmatmul.mubr.bf16.gmra.mrb[0].mxu0 %v918
      %v2503 = vpop.f32.mrb[0].mxu0
      %v2504 = vadd.f32 0.0, %v2503
      %v2505 = vpop.f32.mrb[0].mxu0
      %v2506 = vpop.f32.mrb[0].mxu0
      %v2507 = vadd.f32 0.0, %v2506
      %v2508 = vpop.f32.mrb[0].mxu0
      %2509 = vmatprep.mubr.bf16.mxu0 0
      %2510 = vmatmul.mubr.bf16.gmra.mrb[0].mxu0 %v921
      %v2511 = vpop.f32.mrb[0].mxu0
      %v2512 = vadd.f32 0.0, %v2511
      %v2513 = vpop.f32.mrb[0].mxu0
      %v2514 = vpop.f32.mrb[0].mxu0
      %v2515 = vadd.f32 0.0, %v2514
      %v2516 = vpop.f32.mrb[0].mxu0
      %2517 = vmatprep.mubr.bf16.mxu0 0
      %2518 = vmatmul.mubr.bf16.gmra.mrb[0].mxu0 %v924
      %v2519 = vpop.f32.mrb[0].mxu0
      %v2520 = vadd.f32 0.0, %v2519
      %v2521 = vpop.f32.mrb[0].mxu0
      %v2522 = vpop.f32.mrb[0].mxu0
      %v2523 = vadd.f32 0.0, %v2522
      %v2524 = vpop.f32.mrb[0].mxu0
      %2525 = vmatprep.mubr.bf16.mxu0 0
      %2526 = vmatmul.mubr.bf16.gmra.mrb[0].mxu0 %v927
      %v2527 = vpop.f32.mrb[0].mxu0
      %v2528 = vadd.f32 0.0, %v2527
      %v2529 = vpop.f32.mrb[0].mxu0
      %v2530 = vpop.f32.mrb[0].mxu0
      %v2531 = vadd.f32 0.0, %v2530
      %v2532 = vpop.f32.mrb[0].mxu0
      %2533 = vmatprep.mubr.bf16.mxu0 0
      %2534 = vmatmul.mubr.bf16.gmra.mrb[0].mxu0 %v930
      %v2535 = vpop.f32.mrb[0].mxu0
      %v2536 = vadd.f32 0.0, %v2535
      %v2537 = vpop.f32.mrb[0].mxu0
      %v2538 = vpop.f32.mrb[0].mxu0
      %v2539 = vadd.f32 0.0, %v2538
      %v2540 = vpop.f32.mrb[0].mxu0
      %2541 = vmatprep.mubr.bf16.mxu0 0
      %2542 = vmatmul.mubr.bf16.gmra.mrb[0].mxu0 %v933
      %v2543 = vpop.f32.mrb[0].mxu0
      %v2544 = vadd.f32 0.0, %v2543
      %v2545 = vpop.f32.mrb[0].mxu0
      %v2546 = vpop.f32.mrb[0].mxu0
      %v2547 = vadd.f32 0.0, %v2546
      %v2548 = vpop.f32.mrb[0].mxu0
      %2549 = vmatprep.mubr.bf16.mxu0 0
      %2550 = vmatmul.mubr.bf16.gmra.mrb[0].mxu0 %v936
      %v2551 = vpop.f32.mrb[0].mxu0
      %v2552 = vadd.f32 0.0, %v2551
      %v2553 = vpop.f32.mrb[0].mxu0
      %v2554 = vpop.f32.mrb[0].mxu0
      %v2555 = vadd.f32 0.0, %v2554
      %v2556 = vpop.f32.mrb[0].mxu0
      %2557 = vmatprep.mubr.bf16.mxu0 0
      %2558 = vmatmul.mubr.bf16.gmra.mrb[0].mxu0 %v939
      %v2559 = vpop.f32.mrb[0].mxu0
      %v2560 = vadd.f32 0.0, %v2559
      %v2561 = vpop.f32.mrb[0].mxu0
      %v2562 = vpop.f32.mrb[0].mxu0
      %v2563 = vadd.f32 0.0, %v2562
      %v2564 = vpop.f32.mrb[0].mxu0
      %2565 = vmatprep.mubr.bf16.mxu0 0
      %2566 = vmatmul.mubr.bf16.gmra.mrb[0].mxu0 %v942
      %v2567 = vpop.f32.mrb[0].mxu0
      %v2568 = vadd.f32 0.0, %v2567
      %v2569 = vpop.f32.mrb[0].mxu0
      %v2570 = vpop.f32.mrb[0].mxu0
      %v2571 = vadd.f32 0.0, %v2570
      %v2572 = vpop.f32.mrb[0].mxu0
      %2573 = vmatprep.mubr.bf16.mxu0 0
      %2574 = vmatmul.mubr.bf16.gmra.mrb[0].mxu0 %v945
      %v2575 = vpop.f32.mrb[0].mxu0
      %v2576 = vadd.f32 0.0, %v2575
      %v2577 = vpop.f32.mrb[0].mxu0
      %v2578 = vpop.f32.mrb[0].mxu0
      %v2579 = vadd.f32 0.0, %v2578
      %v2580 = vpop.f32.mrb[0].mxu0
      %2581 = vmatprep.mubr.bf16.mxu0 0
      %2582 = vmatmul.mubr.bf16.gmra.mrb[0].mxu0 %v948
      %v2583 = vpop.f32.mrb[0].mxu0
      %v2584 = vadd.f32 0.0, %v2583
      %v2585 = vpop.f32.mrb[0].mxu0
      %v2586 = vpop.f32.mrb[0].mxu0
      %v2587 = vadd.f32 0.0, %v2586
      %v2588 = vpop.f32.mrb[0].mxu0
      %2589 = vmatprep.mubr.bf16.mxu0 0
      %2590 = vmatmul.mubr.bf16.gmra.mrb[0].mxu0 %v951
      %v2591 = vpop.f32.mrb[0].mxu0
      %v2592 = vadd.f32 0.0, %v2591
      %v2593 = vpop.f32.mrb[0].mxu0
      %v2594 = vpop.f32.mrb[0].mxu0
      %v2595 = vadd.f32 0.0, %v2594
      %v2596 = vpop.f32.mrb[0].mxu0
      %2597 = vmatprep.mubr.bf16.mxu0 0
      %2598 = vmatmul.mubr.bf16.gmra.mrb[0].mxu0 %v1846
      %v2599 = vpop.f32.mrb[0].mxu0
      %v2600 = vadd.f32 0.0, %v2599
      %v2601 = vpop.f32.mrb[0].mxu0
      %v2602 = vpop.f32.mrb[0].mxu0
      %v2603 = vadd.f32 0.0, %v2602
      %v2604 = vpop.f32.mrb[0].mxu0
      %2605 = vmatprep.mubr.bf16.mxu0 0
      %2606 = vmatmul.mubr.bf16.gmra.mrb[0].mxu0 %v951
      %v2607 = vpop.f32.mrb[0].mxu0
      %v2608 = vadd.f32 0.0, %v2607
      %v2609 = vpop.f32.mrb[0].mxu0
      %v2610 = vpop.f32.mrb[0].mxu0
      %v2611 = vadd.f32 0.0, %v2610
      %v2612 = vpop.f32.mrb[0].mxu0
      %2613 = vdwg.mxu0
      %v2614 = vadd.f32 %v2416, %v2488
      %v2615 = vadd.f32 %v2417, %v2491
      %v2616 = vadd.f32 %v2418, %v2496
      %v2617 = vadd.f32 %v2419, %v2499
      %v2618 = vadd.f32 %v2420, %v2504
      %v2619 = vadd.f32 %v2421, %v2507
      %v2620 = vadd.f32 %v2422, %v2512
      %v2621 = vadd.f32 %v2423, %v2515
      %v2622 = vadd.f32 %v2424, %v2520
      %v2623 = vadd.f32 %v2425, %v2523
      %v2624 = vadd.f32 %v2426, %v2528
      %v2625 = vadd.f32 %v2427, %v2531
      %v2626 = vadd.f32 %v2428, %v2536
      %v2627 = vadd.f32 %v2429, %v2539
      %v2628 = vadd.f32 %v2430, %v2544
      %v2629 = vadd.f32 %v2431, %v2547
      %v2630 = vadd.f32 %v2432, %v2552
      %v2631 = vadd.f32 %v2433, %v2555
      %v2632 = vadd.f32 %v2434, %v2560
      %v2633 = vadd.f32 %v2435, %v2563
      %v2634 = vadd.f32 %v2436, %v2568
      %v2635 = vadd.f32 %v2437, %v2571
      %v2636 = vadd.f32 %v2438, %v2576
      %v2637 = vadd.f32 %v2439, %v2579
      %v2638 = vadd.f32 %v2440, %v2584
      %v2639 = vadd.f32 %v2441, %v2587
      %v2640 = vadd.f32 %v2442, %v2592
      %v2641 = vadd.f32 %v2443, %v2595
      %v2642 = vadd.f32 %v2444, %v2600
      %v2643 = vadd.f32 %v2445, %v2603
      %v2644 = vadd.f32 %v2446, %v2608
      %v2645 = vadd.f32 %v2447, %v2611
      %s2646 = scalar_lea.vmem %s1, 32
      %v2647 = vld [vmem:[%s2646] sm:$0xf]
      %v2649 = vsel %vm953, %v2647, 0
      %2651 = vmatprep.subr.bf16.mxu0 0
      %2652 = vmatpush1.bf16.msra.mxu0 %v2649
      %2653 = vmatprep.subr.bf16.mxu0 0
      %2654 = vmatpush1.bf16.msra.mxu0 0
      %2655 = vmatprep.subr.bf16.mxu0 0
      %2656 = vmatpush1.bf16.msra.mxu0 0
      %2657 = vmatprep.subr.bf16.mxu0 0
      %2658 = vmatpush1.bf16.msra.mxu0 0
      %2659 = vmatprep.subr.bf16.mxu0 0
      %2660 = vmatpush1.bf16.msra.mxu0 0
      %2661 = vmatprep.subr.bf16.mxu0 0
      %2662 = vmatpush1.bf16.msra.mxu0 0
      %2663 = vmatprep.subr.bf16.mxu0 0
      %2664 = vmatpush1.bf16.msra.mxu0 0
      %2665 = vmatprep.subr.bf16.mxu0 0
      %2666 = vmatpush1.bf16.msra.mxu0 0
      %2667 = vmatprep.subr.bf16.mxu0 0
      %2668 = vmatpush1.bf16.msra.mxu0 0
      %2669 = vmatprep.subr.bf16.mxu0 0
      %2670 = vmatpush1.bf16.msra.mxu0 0
      %2671 = vmatprep.subr.bf16.mxu0 0
      %2672 = vmatpush1.bf16.msra.mxu0 0
      %2673 = vmatprep.subr.bf16.mxu0 0
      %2674 = vmatpush1.bf16.msra.mxu0 0
      %2675 = vmatprep.subr.bf16.mxu0 0
      %2676 = vmatpush1.bf16.msra.mxu0 0
      %2677 = vmatprep.subr.bf16.mxu0 0
      %2678 = vmatpush1.bf16.msra.mxu0 0
      %2679 = vmatprep.subr.bf16.mxu0 0
      %2680 = vmatpush1.bf16.msra.mxu0 0
      %2681 = vmatprep.subr.bf16.mxu0 0
      %2682 = vmatpush1.bf16.msra.mxu0 0
      %2683 = vmatprep.mubr.bf16.mxu0 0
      %2684 = vmatmul.mubr.bf16.gmra.mrb[0].mxu0 %v1391
      %v2685 = vpop.f32.mrb[0].mxu0
      %v2686 = vadd.f32 0.0, %v2685
      %v2687 = vpop.f32.mrb[0].mxu0
      %v2688 = vpop.f32.mrb[0].mxu0
      %v2689 = vadd.f32 0.0, %v2688
      %v2690 = vpop.f32.mrb[0].mxu0
      %2691 = vmatprep.mubr.bf16.mxu0 0
      %2692 = vmatmul.mubr.bf16.gmra.mrb[0].mxu0 %v1397
      %v2693 = vpop.f32.mrb[0].mxu0
      %v2694 = vadd.f32 0.0, %v2693
      %v2695 = vpop.f32.mrb[0].mxu0
      %v2696 = vpop.f32.mrb[0].mxu0
      %v2697 = vadd.f32 0.0, %v2696
      %v2698 = vpop.f32.mrb[0].mxu0
      %2699 = vmatprep.mubr.bf16.mxu0 0
      %2700 = vmatmul.mubr.bf16.gmra.mrb[0].mxu0 %v1400
      %v2701 = vpop.f32.mrb[0].mxu0
      %v2702 = vadd.f32 0.0, %v2701
      %v2703 = vpop.f32.mrb[0].mxu0
      %v2704 = vpop.f32.mrb[0].mxu0
      %v2705 = vadd.f32 0.0, %v2704
      %v2706 = vpop.f32.mrb[0].mxu0
      %2707 = vmatprep.mubr.bf16.mxu0 0
      %2708 = vmatmul.mubr.bf16.gmra.mrb[0].mxu0 %v1403
      %v2709 = vpop.f32.mrb[0].mxu0
      %v2710 = vadd.f32 0.0, %v2709
      %v2711 = vpop.f32.mrb[0].mxu0
      %v2712 = vpop.f32.mrb[0].mxu0
      %v2713 = vadd.f32 0.0, %v2712
      %v2714 = vpop.f32.mrb[0].mxu0
      %2715 = vmatprep.mubr.bf16.mxu0 0
      %2716 = vmatmul.mubr.bf16.gmra.mrb[0].mxu0 %v1406
      %v2717 = vpop.f32.mrb[0].mxu0
      %v2718 = vadd.f32 0.0, %v2717
      %v2719 = vpop.f32.mrb[0].mxu0
      %v2720 = vpop.f32.mrb[0].mxu0
      %v2721 = vadd.f32 0.0, %v2720
      %v2722 = vpop.f32.mrb[0].mxu0
      %2723 = vmatprep.mubr.bf16.mxu0 0
      %2724 = vmatmul.mubr.bf16.gmra.mrb[0].mxu0 %v1409
      %v2725 = vpop.f32.mrb[0].mxu0
      %v2726 = vadd.f32 0.0, %v2725
      %v2727 = vpop.f32.mrb[0].mxu0
      %v2728 = vpop.f32.mrb[0].mxu0
      %v2729 = vadd.f32 0.0, %v2728
      %v2730 = vpop.f32.mrb[0].mxu0
      %2731 = vmatprep.mubr.bf16.mxu0 0
      %2732 = vmatmul.mubr.bf16.gmra.mrb[0].mxu0 %v1412
      %v2733 = vpop.f32.mrb[0].mxu0
      %v2734 = vadd.f32 0.0, %v2733
      %v2735 = vpop.f32.mrb[0].mxu0
      %v2736 = vpop.f32.mrb[0].mxu0
      %v2737 = vadd.f32 0.0, %v2736
      %v2738 = vpop.f32.mrb[0].mxu0
      %2739 = vmatprep.mubr.bf16.mxu0 0
      %2740 = vmatmul.mubr.bf16.gmra.mrb[0].mxu0 %v1415
      %v2741 = vpop.f32.mrb[0].mxu0
      %v2742 = vadd.f32 0.0, %v2741
      %v2743 = vpop.f32.mrb[0].mxu0
      %v2744 = vpop.f32.mrb[0].mxu0
      %v2745 = vadd.f32 0.0, %v2744
      %v2746 = vpop.f32.mrb[0].mxu0
      %2747 = vmatprep.mubr.bf16.mxu0 0
      %2748 = vmatmul.mubr.bf16.gmra.mrb[0].mxu0 %v1418
      %v2749 = vpop.f32.mrb[0].mxu0
      %v2750 = vadd.f32 0.0, %v2749
      %v2751 = vpop.f32.mrb[0].mxu0
      %v2752 = vpop.f32.mrb[0].mxu0
      %v2753 = vadd.f32 0.0, %v2752
      %v2754 = vpop.f32.mrb[0].mxu0
      %2755 = vmatprep.mubr.bf16.mxu0 0
      %2756 = vmatmul.mubr.bf16.gmra.mrb[0].mxu0 %v1421
      %v2757 = vpop.f32.mrb[0].mxu0
      %v2758 = vadd.f32 0.0, %v2757
      %v2759 = vpop.f32.mrb[0].mxu0
      %v2760 = vpop.f32.mrb[0].mxu0
      %v2761 = vadd.f32 0.0, %v2760
      %v2762 = vpop.f32.mrb[0].mxu0
      %2763 = vmatprep.mubr.bf16.mxu0 0
      %2764 = vmatmul.mubr.bf16.gmra.mrb[0].mxu0 %v1424
      %v2765 = vpop.f32.mrb[0].mxu0
      %v2766 = vadd.f32 0.0, %v2765
      %v2767 = vpop.f32.mrb[0].mxu0
      %v2768 = vpop.f32.mrb[0].mxu0
      %v2769 = vadd.f32 0.0, %v2768
      %v2770 = vpop.f32.mrb[0].mxu0
      %2771 = vmatprep.mubr.bf16.mxu0 0
      %2772 = vmatmul.mubr.bf16.gmra.mrb[0].mxu0 %v1427
      %v2773 = vpop.f32.mrb[0].mxu0
      %v2774 = vadd.f32 0.0, %v2773
      %v2775 = vpop.f32.mrb[0].mxu0
      %v2776 = vpop.f32.mrb[0].mxu0
      %v2777 = vadd.f32 0.0, %v2776
      %v2778 = vpop.f32.mrb[0].mxu0
      %2779 = vmatprep.mubr.bf16.mxu0 0
      %2780 = vmatmul.mubr.bf16.gmra.mrb[0].mxu0 %v1430
      %v2781 = vpop.f32.mrb[0].mxu0
      %v2782 = vadd.f32 0.0, %v2781
      %v2783 = vpop.f32.mrb[0].mxu0
      %v2784 = vpop.f32.mrb[0].mxu0
      %v2785 = vadd.f32 0.0, %v2784
      %v2786 = vpop.f32.mrb[0].mxu0
      %2787 = vmatprep.mubr.bf16.mxu0 0
      %2788 = vmatmul.mubr.bf16.gmra.mrb[0].mxu0 %v1433
      %v2789 = vpop.f32.mrb[0].mxu0
      %v2790 = vadd.f32 0.0, %v2789
      %v2791 = vpop.f32.mrb[0].mxu0
      %v2792 = vpop.f32.mrb[0].mxu0
      %v2793 = vadd.f32 0.0, %v2792
      %v2794 = vpop.f32.mrb[0].mxu0
      %2795 = vmatprep.mubr.bf16.mxu0 0
      %2796 = vmatmul.mubr.bf16.gmra.mrb[0].mxu0 %v2052
      %v2797 = vpop.f32.mrb[0].mxu0
      %v2798 = vadd.f32 0.0, %v2797
      %v2799 = vpop.f32.mrb[0].mxu0
      %v2800 = vpop.f32.mrb[0].mxu0
      %v2801 = vadd.f32 0.0, %v2800
      %v2802 = vpop.f32.mrb[0].mxu0
      %2803 = vmatprep.mubr.bf16.mxu0 0
      %2804 = vmatmul.mubr.bf16.gmra.mrb[0].mxu0 %v1433
      %v2805 = vpop.f32.mrb[0].mxu0
      %v2806 = vadd.f32 0.0, %v2805
      %v2807 = vpop.f32.mrb[0].mxu0
      %v2808 = vpop.f32.mrb[0].mxu0
      %v2809 = vadd.f32 0.0, %v2808
      %v2810 = vpop.f32.mrb[0].mxu0
      %2811 = vdwg.mxu0
      %v2812 = vadd.f32 %v2614, %v2686
      %v2813 = vadd.f32 %v2615, %v2689
      %v2814 = vadd.f32 %v2616, %v2694
      %v2815 = vadd.f32 %v2617, %v2697
      %v2816 = vadd.f32 %v2618, %v2702
      %v2817 = vadd.f32 %v2619, %v2705
      %v2818 = vadd.f32 %v2620, %v2710
      %v2819 = vadd.f32 %v2621, %v2713
      %v2820 = vadd.f32 %v2622, %v2718
      %v2821 = vadd.f32 %v2623, %v2721
      %v2822 = vadd.f32 %v2624, %v2726
      %v2823 = vadd.f32 %v2625, %v2729
      %v2824 = vadd.f32 %v2626, %v2734
      %v2825 = vadd.f32 %v2627, %v2737
      %v2826 = vadd.f32 %v2628, %v2742
      %v2827 = vadd.f32 %v2629, %v2745
      %v2828 = vadd.f32 %v2630, %v2750
      %v2829 = vadd.f32 %v2631, %v2753
      %v2830 = vadd.f32 %v2632, %v2758
      %v2831 = vadd.f32 %v2633, %v2761
      %v2832 = vadd.f32 %v2634, %v2766
      %v2833 = vadd.f32 %v2635, %v2769
      %v2834 = vadd.f32 %v2636, %v2774
      %v2835 = vadd.f32 %v2637, %v2777
      %v2836 = vadd.f32 %v2638, %v2782
      %v2837 = vadd.f32 %v2639, %v2785
      %v2838 = vadd.f32 %v2640, %v2790
      %v2839 = vadd.f32 %v2641, %v2793
      %v2840 = vadd.f32 %v2642, %v2798
      %v2841 = vadd.f32 %v2643, %v2801
      %v2842 = vadd.f32 %v2644, %v2806
      %v2843 = vadd.f32 %v2645, %v2809
      %v2844 = vld [vmem:[%s2] sm:$0x1]
      %v2846 = vlaneseq
      %v2847 = vshrl.u32 %v2846, 7
      %v2848 = vsub.s32 0, %v2847
      %v2849 = vrot.slane %v2844, %v2848
      %v2851 = vadd.f32 %v2812, %v2849
      %v2852 = vadd.f32 %v2813, %v2849
      %v2853 = vadd.f32 %v2814, %v2849
      %v2854 = vadd.f32 %v2815, %v2849
      %v2855 = vadd.f32 %v2816, %v2849
      %v2856 = vadd.f32 %v2817, %v2849
      %v2857 = vadd.f32 %v2818, %v2849
      %v2858 = vadd.f32 %v2819, %v2849
      %v2859 = vadd.f32 %v2820, %v2849
      %v2860 = vadd.f32 %v2821, %v2849
      %v2861 = vadd.f32 %v2822, %v2849
      %v2862 = vadd.f32 %v2823, %v2849
      %v2863 = vadd.f32 %v2824, %v2849
      %v2864 = vadd.f32 %v2825, %v2849
      %v2865 = vadd.f32 %v2826, %v2849
      %v2866 = vadd.f32 %v2827, %v2849
      %v2867 = vadd.f32 %v2828, %v2849
      %v2868 = vadd.f32 %v2829, %v2849
      %v2869 = vadd.f32 %v2830, %v2849
      %v2870 = vadd.f32 %v2831, %v2849
      %v2871 = vadd.f32 %v2832, %v2849
      %v2872 = vadd.f32 %v2833, %v2849
      %v2873 = vadd.f32 %v2834, %v2849
      %v2874 = vadd.f32 %v2835, %v2849
      %v2875 = vadd.f32 %v2836, %v2849
      %v2876 = vadd.f32 %v2837, %v2849
      %v2877 = vadd.f32 %v2838, %v2849
      %v2878 = vadd.f32 %v2839, %v2849
      %v2879 = vadd.f32 %v2840, %v2849
      %v2880 = vadd.f32 %v2841, %v2849
      %v2881 = vadd.f32 %v2842, %v2849
      %v2882 = vadd.f32 %v2843, %v2849
      %v2883 = vsel %vm907, %v2851, 0.0
      %v2884 = vsel %vm907, %v2852, 0.0
      %v2885 = vadd.f32 %v2883, %v2884
      %v2886 = vsel %vm907, %v2853, 0.0
      %v2887 = vadd.f32 %v2885, %v2886
      %v2888 = vsel %vm907, %v2854, 0.0
      %v2889 = vadd.f32 %v2887, %v2888
      %v2890 = vsel %vm907, %v2855, 0.0
      %v2891 = vadd.f32 %v2889, %v2890
      %v2892 = vsel %vm907, %v2856, 0.0
      %v2893 = vadd.f32 %v2891, %v2892
      %v2894 = vsel %vm907, %v2857, 0.0
      %v2895 = vadd.f32 %v2893, %v2894
      %v2896 = vsel %vm907, %v2858, 0.0
      %v2897 = vadd.f32 %v2895, %v2896
      %v2898 = vsel %vm907, %v2859, 0.0
      %v2899 = vadd.f32 %v2897, %v2898
      %v2900 = vsel %vm907, %v2860, 0.0
      %v2901 = vadd.f32 %v2899, %v2900
      %v2902 = vsel %vm907, %v2861, 0.0
      %v2903 = vadd.f32 %v2901, %v2902
      %v2904 = vsel %vm907, %v2862, 0.0
      %v2905 = vadd.f32 %v2903, %v2904
      %v2906 = vsel %vm907, %v2863, 0.0
      %v2907 = vadd.f32 %v2905, %v2906
      %v2908 = vsel %vm907, %v2864, 0.0
      %v2909 = vadd.f32 %v2907, %v2908
      %v2910 = vsel %vm907, %v2865, 0.0
      %v2911 = vadd.f32 %v2909, %v2910
      %v2912 = vsel %vm907, %v2866, 0.0
      %v2913 = vadd.f32 %v2911, %v2912
      %v2914 = vsel %vm907, %v2867, 0.0
      %v2915 = vadd.f32 %v2913, %v2914
      %v2916 = vsel %vm907, %v2868, 0.0
      %v2917 = vadd.f32 %v2915, %v2916
      %v2918 = vsel %vm907, %v2869, 0.0
      %v2919 = vadd.f32 %v2917, %v2918
      %v2920 = vsel %vm907, %v2870, 0.0
      %v2921 = vadd.f32 %v2919, %v2920
      %v2922 = vsel %vm907, %v2871, 0.0
      %v2923 = vadd.f32 %v2921, %v2922
      %v2924 = vsel %vm907, %v2872, 0.0
      %v2925 = vadd.f32 %v2923, %v2924
      %v2926 = vsel %vm907, %v2873, 0.0
      %v2927 = vadd.f32 %v2925, %v2926
      %v2928 = vsel %vm907, %v2874, 0.0
      %v2929 = vadd.f32 %v2927, %v2928
      %v2930 = vsel %vm907, %v2875, 0.0
      %v2931 = vadd.f32 %v2929, %v2930
      %v2932 = vsel %vm907, %v2876, 0.0
      %v2933 = vadd.f32 %v2931, %v2932
      %v2934 = vsel %vm907, %v2877, 0.0
      %v2935 = vadd.f32 %v2933, %v2934
      %v2936 = vsel %vm907, %v2878, 0.0
      %v2937 = vadd.f32 %v2935, %v2936
      %v2938 = vsel %vm907, %v2879, 0.0
      %v2939 = vadd.f32 %v2937, %v2938
      %v2940 = vsel %vm907, %v2880, 0.0
      %v2941 = vadd.f32 %v2939, %v2940
      %v2942 = vsel %vm907, %v2881, 0.0
      %v2943 = vadd.f32 %v2941, %v2942
      %v2944 = vsel %vm907, %v2882, 0.0
      %v2945 = vadd.f32 %v2943, %v2944
      %v2946 = vrot.slane %v2945, 4
      %v2947 = vadd.f32 %v2945, %v2946
      %v2948 = vrot.slane %v2947, 2
      %v2949 = vadd.f32 %v2947, %v2948
      %v2950 = vrot.slane %v2949, 1
      %v2951 = vadd.f32 %v2949, %v2950
      %v2952 = vrcp.pop 256.0
      %v2953 = vmul.f32 %v2951, %v2952
      %v2954 = vsub.f32 %v2851, %v2953
      %v2955 = vsub.f32 %v2852, %v2953
      %v2956 = vsub.f32 %v2853, %v2953
      %v2957 = vsub.f32 %v2854, %v2953
      %v2958 = vsub.f32 %v2855, %v2953
      %v2959 = vsub.f32 %v2856, %v2953
      %v2960 = vsub.f32 %v2857, %v2953
      %v2961 = vsub.f32 %v2858, %v2953
      %v2962 = vsub.f32 %v2859, %v2953
      %v2963 = vsub.f32 %v2860, %v2953
      %v2964 = vsub.f32 %v2861, %v2953
      %v2965 = vsub.f32 %v2862, %v2953
      %v2966 = vsub.f32 %v2863, %v2953
      %v2967 = vsub.f32 %v2864, %v2953
      %v2968 = vsub.f32 %v2865, %v2953
      %v2969 = vsub.f32 %v2866, %v2953
      %v2970 = vsub.f32 %v2867, %v2953
      %v2971 = vsub.f32 %v2868, %v2953
      %v2972 = vsub.f32 %v2869, %v2953
      %v2973 = vsub.f32 %v2870, %v2953
      %v2974 = vsub.f32 %v2871, %v2953
      %v2975 = vsub.f32 %v2872, %v2953
      %v2976 = vsub.f32 %v2873, %v2953
      %v2977 = vsub.f32 %v2874, %v2953
      %v2978 = vsub.f32 %v2875, %v2953
      %v2979 = vsub.f32 %v2876, %v2953
      %v2980 = vsub.f32 %v2877, %v2953
      %v2981 = vsub.f32 %v2878, %v2953
      %v2982 = vsub.f32 %v2879, %v2953
      %v2983 = vsub.f32 %v2880, %v2953
      %v2984 = vsub.f32 %v2881, %v2953
      %v2985 = vsub.f32 %v2882, %v2953
      %v2986 = vmul.f32 %v2954, %v2954
      %v2987 = vmul.f32 %v2955, %v2955
      %v2988 = vmul.f32 %v2956, %v2956
      %v2989 = vmul.f32 %v2957, %v2957
      %v2990 = vmul.f32 %v2958, %v2958
      %v2991 = vmul.f32 %v2959, %v2959
      %v2992 = vmul.f32 %v2960, %v2960
      %v2993 = vmul.f32 %v2961, %v2961
      %v2994 = vmul.f32 %v2962, %v2962
      %v2995 = vmul.f32 %v2963, %v2963
      %v2996 = vmul.f32 %v2964, %v2964
      %v2997 = vmul.f32 %v2965, %v2965
      %v2998 = vmul.f32 %v2966, %v2966
      %v2999 = vmul.f32 %v2967, %v2967
      %v3000 = vmul.f32 %v2968, %v2968
      %v3001 = vmul.f32 %v2969, %v2969
      %v3002 = vmul.f32 %v2970, %v2970
      %v3003 = vmul.f32 %v2971, %v2971
      %v3004 = vmul.f32 %v2972, %v2972
      %v3005 = vmul.f32 %v2973, %v2973
      %v3006 = vmul.f32 %v2974, %v2974
      %v3007 = vmul.f32 %v2975, %v2975
      %v3008 = vmul.f32 %v2976, %v2976
      %v3009 = vmul.f32 %v2977, %v2977
      %v3010 = vmul.f32 %v2978, %v2978
      %v3011 = vmul.f32 %v2979, %v2979
      %v3012 = vmul.f32 %v2980, %v2980
      %v3013 = vmul.f32 %v2981, %v2981
      %v3014 = vmul.f32 %v2982, %v2982
      %v3015 = vmul.f32 %v2983, %v2983
      %v3016 = vmul.f32 %v2984, %v2984
      %v3017 = vmul.f32 %v2985, %v2985
      %v3018 = vsel %vm907, %v2986, 0.0
      %v3019 = vsel %vm907, %v2987, 0.0
      %v3020 = vadd.f32 %v3018, %v3019
      %v3021 = vsel %vm907, %v2988, 0.0
      %v3022 = vadd.f32 %v3020, %v3021
      %v3023 = vsel %vm907, %v2989, 0.0
      %v3024 = vadd.f32 %v3022, %v3023
      %v3025 = vsel %vm907, %v2990, 0.0
      %v3026 = vadd.f32 %v3024, %v3025
      %v3027 = vsel %vm907, %v2991, 0.0
      %v3028 = vadd.f32 %v3026, %v3027
      %v3029 = vsel %vm907, %v2992, 0.0
      %v3030 = vadd.f32 %v3028, %v3029
      %v3031 = vsel %vm907, %v2993, 0.0
      %v3032 = vadd.f32 %v3030, %v3031
      %v3033 = vsel %vm907, %v2994, 0.0
      %v3034 = vadd.f32 %v3032, %v3033
      %v3035 = vsel %vm907, %v2995, 0.0
      %v3036 = vadd.f32 %v3034, %v3035
      %v3037 = vsel %vm907, %v2996, 0.0
      %v3038 = vadd.f32 %v3036, %v3037
      %v3039 = vsel %vm907, %v2997, 0.0
      %v3040 = vadd.f32 %v3038, %v3039
      %v3041 = vsel %vm907, %v2998, 0.0
      %v3042 = vadd.f32 %v3040, %v3041
      %v3043 = vsel %vm907, %v2999, 0.0
      %v3044 = vadd.f32 %v3042, %v3043
      %v3045 = vsel %vm907, %v3000, 0.0
      %v3046 = vadd.f32 %v3044, %v3045
      %v3047 = vsel %vm907, %v3001, 0.0
      %v3048 = vadd.f32 %v3046, %v3047
      %v3049 = vsel %vm907, %v3002, 0.0
      %v3050 = vadd.f32 %v3048, %v3049
      %v3051 = vsel %vm907, %v3003, 0.0
      %v3052 = vadd.f32 %v3050, %v3051
      %v3053 = vsel %vm907, %v3004, 0.0
      %v3054 = vadd.f32 %v3052, %v3053
      %v3055 = vsel %vm907, %v3005, 0.0
      %v3056 = vadd.f32 %v3054, %v3055
      %v3057 = vsel %vm907, %v3006, 0.0
      %v3058 = vadd.f32 %v3056, %v3057
      %v3059 = vsel %vm907, %v3007, 0.0
      %v3060 = vadd.f32 %v3058, %v3059
      %v3061 = vsel %vm907, %v3008, 0.0
      %v3062 = vadd.f32 %v3060, %v3061
      %v3063 = vsel %vm907, %v3009, 0.0
      %v3064 = vadd.f32 %v3062, %v3063
      %v3065 = vsel %vm907, %v3010, 0.0
      %v3066 = vadd.f32 %v3064, %v3065
      %v3067 = vsel %vm907, %v3011, 0.0
      %v3068 = vadd.f32 %v3066, %v3067
      %v3069 = vsel %vm907, %v3012, 0.0
      %v3070 = vadd.f32 %v3068, %v3069
      %v3071 = vsel %vm907, %v3013, 0.0
      %v3072 = vadd.f32 %v3070, %v3071
      %v3073 = vsel %vm907, %v3014, 0.0
      %v3074 = vadd.f32 %v3072, %v3073
      %v3075 = vsel %vm907, %v3015, 0.0
      %v3076 = vadd.f32 %v3074, %v3075
      %v3077 = vsel %vm907, %v3016, 0.0
      %v3078 = vadd.f32 %v3076, %v3077
      %v3079 = vsel %vm907, %v3017, 0.0
      %v3080 = vadd.f32 %v3078, %v3079
      %v3081 = vrot.slane %v3080, 4
      %v3082 = vadd.f32 %v3080, %v3081
      %v3083 = vrot.slane %v3082, 2
      %v3084 = vadd.f32 %v3082, %v3083
      %v3085 = vrot.slane %v3084, 1
      %v3086 = vadd.f32 %v3084, %v3085
      %v3087 = vrcp.pop 255.0
      %v3088 = vmul.f32 %v3086, %v3087
      %v3089 = vrsqrt.pop %v3088
      %v3090 = vmul.f32 %v3088, %v3089
      %vm3091 = vcmp.eq.f32.partialorder %v3088, inf
      %v3092 = vsel %vm3091, %v3088, %v3090
      %vm3093 = vcmp.eq.f32.partialorder %v3088, 0.0
      %v3094 = vand.u32 %v3088, 2147483648
      %v3095 = vsel %vm3093, %v3094, %v3092
      %v3096 = vadd.f32 %v3095, 1e-05
      %v3097 = vrcp.pop %v3096
      %v3098 = vmul.f32 %v397, %v3097
      %v3099 = vmul.f32 %v2953, %v3098
      %v3100 = vsub.f32 %v396, %v3099
      %v3102 = vlaneseq
      %v3103 = vshrl.u32 %v3102, 7
      %v3104 = vsub.s32 0, %v3103
      %v3105 = vrot.slane %v3098, %v3104
      %v3107 = vmul.f32 %v2851, %v3105
      %v3108 = vmul.f32 %v2852, %v3105
      %v3109 = vmul.f32 %v2853, %v3105
      %v3110 = vmul.f32 %v2854, %v3105
      %v3111 = vmul.f32 %v2855, %v3105
      %v3112 = vmul.f32 %v2856, %v3105
      %v3113 = vmul.f32 %v2857, %v3105
      %v3114 = vmul.f32 %v2858, %v3105
      %v3115 = vmul.f32 %v2859, %v3105
      %v3116 = vmul.f32 %v2860, %v3105
      %v3117 = vmul.f32 %v2861, %v3105
      %v3118 = vmul.f32 %v2862, %v3105
      %v3119 = vmul.f32 %v2863, %v3105
      %v3120 = vmul.f32 %v2864, %v3105
      %v3121 = vmul.f32 %v2865, %v3105
      %v3122 = vmul.f32 %v2866, %v3105
      %v3123 = vmul.f32 %v2867, %v3105
      %v3124 = vmul.f32 %v2868, %v3105
      %v3125 = vmul.f32 %v2869, %v3105
      %v3126 = vmul.f32 %v2870, %v3105
      %v3127 = vmul.f32 %v2871, %v3105
      %v3128 = vmul.f32 %v2872, %v3105
      %v3129 = vmul.f32 %v2873, %v3105
      %v3130 = vmul.f32 %v2874, %v3105
      %v3131 = vmul.f32 %v2875, %v3105
      %v3132 = vmul.f32 %v2876, %v3105
      %v3133 = vmul.f32 %v2877, %v3105
      %v3134 = vmul.f32 %v2878, %v3105
      %v3135 = vmul.f32 %v2879, %v3105
      %v3136 = vmul.f32 %v2880, %v3105
      %v3137 = vmul.f32 %v2881, %v3105
      %v3138 = vmul.f32 %v2882, %v3105
      %v3140 = vlaneseq
      %v3141 = vshrl.u32 %v3140, 7
      %v3142 = vsub.s32 0, %v3141
      %v3143 = vrot.slane %v3100, %v3142
      %v3145 = vadd.f32 %v3107, %v3143
      %v3146 = vadd.f32 %v3108, %v3143
      %v3147 = vadd.f32 %v3109, %v3143
      %v3148 = vadd.f32 %v3110, %v3143
      %v3149 = vadd.f32 %v3111, %v3143
      %v3150 = vadd.f32 %v3112, %v3143
      %v3151 = vadd.f32 %v3113, %v3143
      %v3152 = vadd.f32 %v3114, %v3143
      %v3153 = vadd.f32 %v3115, %v3143
      %v3154 = vadd.f32 %v3116, %v3143
      %v3155 = vadd.f32 %v3117, %v3143
      %v3156 = vadd.f32 %v3118, %v3143
      %v3157 = vadd.f32 %v3119, %v3143
      %v3158 = vadd.f32 %v3120, %v3143
      %v3159 = vadd.f32 %v3121, %v3143
      %v3160 = vadd.f32 %v3122, %v3143
      %v3161 = vadd.f32 %v3123, %v3143
      %v3162 = vadd.f32 %v3124, %v3143
      %v3163 = vadd.f32 %v3125, %v3143
      %v3164 = vadd.f32 %v3126, %v3143
      %v3165 = vadd.f32 %v3127, %v3143
      %v3166 = vadd.f32 %v3128, %v3143
      %v3167 = vadd.f32 %v3129, %v3143
      %v3168 = vadd.f32 %v3130, %v3143
      %v3169 = vadd.f32 %v3131, %v3143
      %v3170 = vadd.f32 %v3132, %v3143
      %v3171 = vadd.f32 %v3133, %v3143
      %v3172 = vadd.f32 %v3134, %v3143
      %v3173 = vadd.f32 %v3135, %v3143
      %v3174 = vadd.f32 %v3136, %v3143
      %v3175 = vadd.f32 %v3137, %v3143
      %v3176 = vadd.f32 %v3138, %v3143
      %v3177 = vmax.f32 %v3145, 0.0
      %v3178 = vmax.f32 %v3146, 0.0
      %v3179 = vmax.f32 %v3147, 0.0
      %v3180 = vmax.f32 %v3148, 0.0
      %v3181 = vmax.f32 %v3149, 0.0
      %v3182 = vmax.f32 %v3150, 0.0
      %v3183 = vmax.f32 %v3151, 0.0
      %v3184 = vmax.f32 %v3152, 0.0
      %v3185 = vmax.f32 %v3153, 0.0
      %v3186 = vmax.f32 %v3154, 0.0
      %v3187 = vmax.f32 %v3155, 0.0
      %v3188 = vmax.f32 %v3156, 0.0
      %v3189 = vmax.f32 %v3157, 0.0
      %v3190 = vmax.f32 %v3158, 0.0
      %v3191 = vmax.f32 %v3159, 0.0
      %v3192 = vmax.f32 %v3160, 0.0
      %v3193 = vmax.f32 %v3161, 0.0
      %v3194 = vmax.f32 %v3162, 0.0
      %v3195 = vmax.f32 %v3163, 0.0
      %v3196 = vmax.f32 %v3164, 0.0
      %v3197 = vmax.f32 %v3165, 0.0
      %v3198 = vmax.f32 %v3166, 0.0
      %v3199 = vmax.f32 %v3167, 0.0
      %v3200 = vmax.f32 %v3168, 0.0
      %v3201 = vmax.f32 %v3169, 0.0
      %v3202 = vmax.f32 %v3170, 0.0
      %v3203 = vmax.f32 %v3171, 0.0
      %v3204 = vmax.f32 %v3172, 0.0
      %v3205 = vmax.f32 %v3173, 0.0
      %v3206 = vmax.f32 %v3174, 0.0
      %v3207 = vmax.f32 %v3175, 0.0
      %v3208 = vmax.f32 %v3176, 0.0
      %v3225 = vrot.slane %v3179, 1
      %v3226 = vrot.slane %v3177, 1
      %v3227 = vrot.slane %v3181, 1
      %v3228 = vrot.slane %v3183, 1
      %v3229 = vrot.slane %v3185, 1
      %v3230 = vrot.slane %v3187, 1
      %v3231 = vrot.slane %v3189, 1
      %v3232 = vrot.slane %v3191, 1
      %v3233 = vrot.slane %v3193, 1
      %v3234 = vrot.slane %v3195, 1
      %v3235 = vrot.slane %v3197, 1
      %v3236 = vrot.slane %v3199, 1
      %v3237 = vrot.slane %v3201, 1
      %v3238 = vrot.slane %v3203, 1
      %v3239 = vrot.slane %v3205, 1
      %v3240 = vrot.slane %v3207, 1
      %v3273 = vrot.slane %v3179, 7
      %v3274 = vrot.slane %v3180, 7
      %v3275 = vsel %vm530, %v3273, %v3274
      %v3276 = vrot.slane %v3177, 7
      %v3277 = vrot.slane %v3178, 7
      %v3278 = vsel %vm530, %v3276, %v3277
      %v3279 = vrot.slane %v3181, 7
      %v3280 = vrot.slane %v3182, 7
      %v3281 = vsel %vm530, %v3279, %v3280
      %v3282 = vrot.slane %v3183, 7
      %v3283 = vrot.slane %v3184, 7
      %v3284 = vsel %vm530, %v3282, %v3283
      %v3285 = vrot.slane %v3185, 7
      %v3286 = vrot.slane %v3186, 7
      %v3287 = vsel %vm530, %v3285, %v3286
      %v3288 = vrot.slane %v3187, 7
      %v3289 = vrot.slane %v3188, 7
      %v3290 = vsel %vm530, %v3288, %v3289
      %v3291 = vrot.slane %v3189, 7
      %v3292 = vrot.slane %v3190, 7
      %v3293 = vsel %vm530, %v3291, %v3292
      %v3294 = vrot.slane %v3191, 7
      %v3295 = vrot.slane %v3192, 7
      %v3296 = vsel %vm530, %v3294, %v3295
      %v3297 = vrot.slane %v3193, 7
      %v3298 = vrot.slane %v3194, 7
      %v3299 = vsel %vm530, %v3297, %v3298
      %v3300 = vrot.slane %v3195, 7
      %v3301 = vrot.slane %v3196, 7
      %v3302 = vsel %vm530, %v3300, %v3301
      %v3303 = vrot.slane %v3197, 7
      %v3304 = vrot.slane %v3198, 7
      %v3305 = vsel %vm530, %v3303, %v3304
      %v3306 = vrot.slane %v3199, 7
      %v3307 = vrot.slane %v3200, 7
      %v3308 = vsel %vm530, %v3306, %v3307
      %v3309 = vrot.slane %v3201, 7
      %v3310 = vrot.slane %v3202, 7
      %v3311 = vsel %vm530, %v3309, %v3310
      %v3312 = vrot.slane %v3203, 7
      %v3313 = vrot.slane %v3204, 7
      %v3314 = vsel %vm530, %v3312, %v3313
      %v3315 = vrot.slane %v3205, 7
      %v3316 = vrot.slane %v3206, 7
      %v3317 = vsel %vm530, %v3315, %v3316
      %v3318 = vrot.slane %v3207, 7
      %v3319 = vrot.slane %v3208, 7
      %v3320 = vsel %vm530, %v3318, %v3319
      %v3369 = vrot.slane %v3180, 5
      %v3370 = vrot.slane %v3178, 5
      %v3371 = vrot.slane %v3182, 5
      %v3372 = vrot.slane %v3184, 5
      %v3373 = vrot.slane %v3186, 5
      %v3374 = vrot.slane %v3188, 5
      %v3375 = vrot.slane %v3190, 5
      %v3376 = vrot.slane %v3192, 5
      %v3377 = vrot.slane %v3194, 5
      %v3378 = vrot.slane %v3196, 5
      %v3379 = vrot.slane %v3198, 5
      %v3380 = vrot.slane %v3200, 5
      %v3381 = vrot.slane %v3202, 5
      %v3382 = vrot.slane %v3204, 5
      %v3383 = vrot.slane %v3206, 5
      %v3384 = vrot.slane %v3208, 5
      %v3401 = vsel %vm530, %v3225, %v3273
      %v3402 = vsel %vm530, %v3226, %v3276
      %v3403 = vsel %vm530, %v3227, %v3279
      %v3404 = vsel %vm530, %v3228, %v3282
      %v3405 = vsel %vm530, %v3229, %v3285
      %v3406 = vsel %vm530, %v3230, %v3288
      %v3407 = vsel %vm530, %v3231, %v3291
      %v3408 = vsel %vm530, %v3232, %v3294
      %v3409 = vsel %vm530, %v3233, %v3297
      %v3410 = vsel %vm530, %v3234, %v3300
      %v3411 = vsel %vm530, %v3235, %v3303
      %v3412 = vsel %vm530, %v3236, %v3306
      %v3413 = vsel %vm530, %v3237, %v3309
      %v3414 = vsel %vm530, %v3238, %v3312
      %v3415 = vsel %vm530, %v3239, %v3315
      %v3416 = vsel %vm530, %v3240, %v3318
      %v3417 = vsel %vm530, %v3274, %v3369
      %v3418 = vsel %vm530, %v3277, %v3370
      %v3419 = vsel %vm530, %v3280, %v3371
      %v3420 = vsel %vm530, %v3283, %v3372
      %v3421 = vsel %vm530, %v3286, %v3373
      %v3422 = vsel %vm530, %v3289, %v3374
      %v3423 = vsel %vm530, %v3292, %v3375
      %v3424 = vsel %vm530, %v3295, %v3376
      %v3425 = vsel %vm530, %v3298, %v3377
      %v3426 = vsel %vm530, %v3301, %v3378
      %v3427 = vsel %vm530, %v3304, %v3379
      %v3428 = vsel %vm530, %v3307, %v3380
      %v3429 = vsel %vm530, %v3310, %v3381
      %v3430 = vsel %vm530, %v3313, %v3382
      %v3431 = vsel %vm530, %v3316, %v3383
      %v3432 = vsel %vm530, %v3319, %v3384
      %v3433 = vpack.c.bf16 %v3275, %v3401
      %v3434 = vpack.c.bf16 %v3417, %v3417
      %v3435 = vpack.c.bf16 %v3278, %v3402
      %v3436 = vpack.c.bf16 %v3418, %v3418
      %v3437 = vpack.c.bf16 %v3281, %v3403
      %v3438 = vpack.c.bf16 %v3419, %v3419
      %v3439 = vpack.c.bf16 %v3284, %v3404
      %v3440 = vpack.c.bf16 %v3420, %v3420
      %v3441 = vpack.c.bf16 %v3287, %v3405
      %v3442 = vpack.c.bf16 %v3421, %v3421
      %v3443 = vpack.c.bf16 %v3290, %v3406
      %v3444 = vpack.c.bf16 %v3422, %v3422
      %v3445 = vpack.c.bf16 %v3293, %v3407
      %v3446 = vpack.c.bf16 %v3423, %v3423
      %v3447 = vpack.c.bf16 %v3296, %v3408
      %v3448 = vpack.c.bf16 %v3424, %v3424
      %v3449 = vpack.c.bf16 %v3299, %v3409
      %v3450 = vpack.c.bf16 %v3425, %v3425
      %v3451 = vpack.c.bf16 %v3302, %v3410
      %v3452 = vpack.c.bf16 %v3426, %v3426
      %v3453 = vpack.c.bf16 %v3305, %v3411
      %v3454 = vpack.c.bf16 %v3427, %v3427
      %v3455 = vpack.c.bf16 %v3308, %v3412
      %v3456 = vpack.c.bf16 %v3428, %v3428
      %v3457 = vpack.c.bf16 %v3311, %v3413
      %v3458 = vpack.c.bf16 %v3429, %v3429
      %v3459 = vpack.c.bf16 %v3314, %v3414
      %v3460 = vpack.c.bf16 %v3430, %v3430
      %v3461 = vpack.c.bf16 %v3317, %v3415
      %v3462 = vpack.c.bf16 %v3431, %v3431
      %v3463 = vpack.c.bf16 %v3320, %v3416
      %v3464 = vpack.c.bf16 %v3432, %v3432
      %v3465 = vld [vmem:[%s3] sm:$0xf]
      %v3467 = vshrl.u32 %v3433, 16
      %v3469 = vshll.u32 %v3433, 16
      %v3471 = vrot.slane %v3469, 1
      %v3472 = vor.u32 %v3467, %v3471
      %v3474 = vshll.u32 %v3434, 16
      %v3476 = vrot.slane %v3474, 1
      %v3477 = vsel %vm724, %v3472, %v3476
      %v3479 = vshrl.u32 %v3435, 16
      %v3481 = vshll.u32 %v3435, 16
      %v3483 = vrot.slane %v3481, 1
      %v3484 = vor.u32 %v3479, %v3483
      %v3486 = vshll.u32 %v3436, 16
      %v3488 = vrot.slane %v3486, 1
      %v3489 = vsel %vm724, %v3484, %v3488
      %v3491 = vshrl.u32 %v3437, 16
      %v3493 = vshll.u32 %v3437, 16
      %v3495 = vrot.slane %v3493, 1
      %v3496 = vor.u32 %v3491, %v3495
      %v3498 = vshll.u32 %v3438, 16
      %v3500 = vrot.slane %v3498, 1
      %v3501 = vsel %vm724, %v3496, %v3500
      %v3503 = vshrl.u32 %v3439, 16
      %v3505 = vshll.u32 %v3439, 16
      %v3507 = vrot.slane %v3505, 1
      %v3508 = vor.u32 %v3503, %v3507
      %v3510 = vshll.u32 %v3440, 16
      %v3512 = vrot.slane %v3510, 1
      %v3513 = vsel %vm724, %v3508, %v3512
      %v3515 = vshrl.u32 %v3441, 16
      %v3517 = vshll.u32 %v3441, 16
      %v3519 = vrot.slane %v3517, 1
      %v3520 = vor.u32 %v3515, %v3519
      %v3522 = vshll.u32 %v3442, 16
      %v3524 = vrot.slane %v3522, 1
      %v3525 = vsel %vm724, %v3520, %v3524
      %v3527 = vshrl.u32 %v3443, 16
      %v3529 = vshll.u32 %v3443, 16
      %v3531 = vrot.slane %v3529, 1
      %v3532 = vor.u32 %v3527, %v3531
      %v3534 = vshll.u32 %v3444, 16
      %v3536 = vrot.slane %v3534, 1
      %v3537 = vsel %vm724, %v3532, %v3536
      %v3539 = vshrl.u32 %v3445, 16
      %v3541 = vshll.u32 %v3445, 16
      %v3543 = vrot.slane %v3541, 1
      %v3544 = vor.u32 %v3539, %v3543
      %v3546 = vshll.u32 %v3446, 16
      %v3548 = vrot.slane %v3546, 1
      %v3549 = vsel %vm724, %v3544, %v3548
      %v3551 = vshrl.u32 %v3447, 16
      %v3553 = vshll.u32 %v3447, 16
      %v3555 = vrot.slane %v3553, 1
      %v3556 = vor.u32 %v3551, %v3555
      %v3558 = vshll.u32 %v3448, 16
      %v3560 = vrot.slane %v3558, 1
      %v3561 = vsel %vm724, %v3556, %v3560
      %v3563 = vshrl.u32 %v3449, 16
      %v3565 = vshll.u32 %v3449, 16
      %v3567 = vrot.slane %v3565, 1
      %v3568 = vor.u32 %v3563, %v3567
      %v3570 = vshll.u32 %v3450, 16
      %v3572 = vrot.slane %v3570, 1
      %v3573 = vsel %vm724, %v3568, %v3572
      %v3575 = vshrl.u32 %v3451, 16
      %v3577 = vshll.u32 %v3451, 16
      %v3579 = vrot.slane %v3577, 1
      %v3580 = vor.u32 %v3575, %v3579
      %v3582 = vshll.u32 %v3452, 16
      %v3584 = vrot.slane %v3582, 1
      %v3585 = vsel %vm724, %v3580, %v3584
      %v3587 = vshrl.u32 %v3453, 16
      %v3589 = vshll.u32 %v3453, 16
      %v3591 = vrot.slane %v3589, 1
      %v3592 = vor.u32 %v3587, %v3591
      %v3594 = vshll.u32 %v3454, 16
      %v3596 = vrot.slane %v3594, 1
      %v3597 = vsel %vm724, %v3592, %v3596
      %v3599 = vshrl.u32 %v3455, 16
      %v3601 = vshll.u32 %v3455, 16
      %v3603 = vrot.slane %v3601, 1
      %v3604 = vor.u32 %v3599, %v3603
      %v3606 = vshll.u32 %v3456, 16
      %v3608 = vrot.slane %v3606, 1
      %v3609 = vsel %vm724, %v3604, %v3608
      %v3611 = vshrl.u32 %v3457, 16
      %v3613 = vshll.u32 %v3457, 16
      %v3615 = vrot.slane %v3613, 1
      %v3616 = vor.u32 %v3611, %v3615
      %v3618 = vshll.u32 %v3458, 16
      %v3620 = vrot.slane %v3618, 1
      %v3621 = vsel %vm724, %v3616, %v3620
      %v3623 = vshrl.u32 %v3459, 16
      %v3625 = vshll.u32 %v3459, 16
      %v3627 = vrot.slane %v3625, 1
      %v3628 = vor.u32 %v3623, %v3627
      %v3630 = vshll.u32 %v3460, 16
      %v3632 = vrot.slane %v3630, 1
      %v3633 = vsel %vm724, %v3628, %v3632
      %v3635 = vshrl.u32 %v3461, 16
      %v3637 = vshll.u32 %v3461, 16
      %v3639 = vrot.slane %v3637, 1
      %v3640 = vor.u32 %v3635, %v3639
      %v3642 = vshll.u32 %v3462, 16
      %v3644 = vrot.slane %v3642, 1
      %v3645 = vsel %vm724, %v3640, %v3644
      %s3646 = scalar_lea.vmem %s3, 4
      %v3647 = vld [vmem:[%s3646] sm:$0xf]
      %v3649 = vsel %vm907, %v3477, 0
      %v3652 = vsel %vm907, %v3489, 0
      %v3655 = vsel %vm907, %v3501, 0
      %v3658 = vsel %vm907, %v3513, 0
      %v3661 = vsel %vm907, %v3525, 0
      %v3664 = vsel %vm907, %v3537, 0
      %v3667 = vsel %vm907, %v3549, 0
      %v3670 = vsel %vm907, %v3561, 0
      %v3673 = vsel %vm907, %v3573, 0
      %v3676 = vsel %vm907, %v3585, 0
      %v3679 = vsel %vm907, %v3597, 0
      %v3682 = vsel %vm907, %v3609, 0
      %v3685 = vsel %vm907, %v3621, 0
      %v3688 = vsel %vm907, %v3633, 0
      %v3691 = vsel %vm907, %v3645, 0
      %v3694 = vsel %vm953, %v3647, 0
      %3696 = vmatprep.subr.bf16.mxu0 0
      %3697 = vmatpush1.bf16.msra.mxu0 %v3694
      %3698 = vmatprep.subr.bf16.mxu0 0
      %3699 = vmatpush1.bf16.msra.mxu0 0
      %3700 = vmatprep.subr.bf16.mxu0 0
      %3701 = vmatpush1.bf16.msra.mxu0 0
      %3702 = vmatprep.subr.bf16.mxu0 0
      %3703 = vmatpush1.bf16.msra.mxu0 0
      %3704 = vmatprep.subr.bf16.mxu0 0
      %3705 = vmatpush1.bf16.msra.mxu0 0
      %3706 = vmatprep.subr.bf16.mxu0 0
      %3707 = vmatpush1.bf16.msra.mxu0 0
      %3708 = vmatprep.subr.bf16.mxu0 0
      %3709 = vmatpush1.bf16.msra.mxu0 0
      %3710 = vmatprep.subr.bf16.mxu0 0
      %3711 = vmatpush1.bf16.msra.mxu0 0
      %3712 = vmatprep.subr.bf16.mxu0 0
      %3713 = vmatpush1.bf16.msra.mxu0 0
      %3714 = vmatprep.subr.bf16.mxu0 0
      %3715 = vmatpush1.bf16.msra.mxu0 0
      %3716 = vmatprep.subr.bf16.mxu0 0
      %3717 = vmatpush1.bf16.msra.mxu0 0
      %3718 = vmatprep.subr.bf16.mxu0 0
      %3719 = vmatpush1.bf16.msra.mxu0 0
      %3720 = vmatprep.subr.bf16.mxu0 0
      %3721 = vmatpush1.bf16.msra.mxu0 0
      %3722 = vmatprep.subr.bf16.mxu0 0
      %3723 = vmatpush1.bf16.msra.mxu0 0
      %3724 = vmatprep.subr.bf16.mxu0 0
      %3725 = vmatpush1.bf16.msra.mxu0 0
      %3726 = vmatprep.subr.bf16.mxu0 0
      %3727 = vmatpush1.bf16.msra.mxu0 0
      %3728 = vmatprep.mubr.bf16.mxu0 0
      %3729 = vmatmul.mubr.bf16.gmra.mrb[0].mxu0 %v3649
      %v3730 = vpop.f32.mrb[0].mxu0
      %v3731 = vadd.f32 0.0, %v3730
      %v3732 = vpop.f32.mrb[0].mxu0
      %v3733 = vpop.f32.mrb[0].mxu0
      %v3734 = vadd.f32 0.0, %v3733
      %v3735 = vpop.f32.mrb[0].mxu0
      %3736 = vmatprep.mubr.bf16.mxu0 0
      %3737 = vmatmul.mubr.bf16.gmra.mrb[0].mxu0 %v3652
      %v3738 = vpop.f32.mrb[0].mxu0
      %v3739 = vadd.f32 0.0, %v3738
      %v3740 = vpop.f32.mrb[0].mxu0
      %v3741 = vpop.f32.mrb[0].mxu0
      %v3742 = vadd.f32 0.0, %v3741
      %v3743 = vpop.f32.mrb[0].mxu0
      %3744 = vmatprep.mubr.bf16.mxu0 0
      %3745 = vmatmul.mubr.bf16.gmra.mrb[0].mxu0 %v3649
      %v3746 = vpop.f32.mrb[0].mxu0
      %v3747 = vadd.f32 0.0, %v3746
      %v3748 = vpop.f32.mrb[0].mxu0
      %v3749 = vpop.f32.mrb[0].mxu0
      %v3750 = vadd.f32 0.0, %v3749
      %v3751 = vpop.f32.mrb[0].mxu0
      %3752 = vmatprep.mubr.bf16.mxu0 0
      %3753 = vmatmul.mubr.bf16.gmra.mrb[0].mxu0 %v3655
      %v3754 = vpop.f32.mrb[0].mxu0
      %v3755 = vadd.f32 0.0, %v3754
      %v3756 = vpop.f32.mrb[0].mxu0
      %v3757 = vpop.f32.mrb[0].mxu0
      %v3758 = vadd.f32 0.0, %v3757
      %v3759 = vpop.f32.mrb[0].mxu0
      %3760 = vmatprep.mubr.bf16.mxu0 0
      %3761 = vmatmul.mubr.bf16.gmra.mrb[0].mxu0 %v3658
      %v3762 = vpop.f32.mrb[0].mxu0
      %v3763 = vadd.f32 0.0, %v3762
      %v3764 = vpop.f32.mrb[0].mxu0
      %v3765 = vpop.f32.mrb[0].mxu0
      %v3766 = vadd.f32 0.0, %v3765
      %v3767 = vpop.f32.mrb[0].mxu0
      %3768 = vmatprep.mubr.bf16.mxu0 0
      %3769 = vmatmul.mubr.bf16.gmra.mrb[0].mxu0 %v3661
      %v3770 = vpop.f32.mrb[0].mxu0
      %v3771 = vadd.f32 0.0, %v3770
      %v3772 = vpop.f32.mrb[0].mxu0
      %v3773 = vpop.f32.mrb[0].mxu0
      %v3774 = vadd.f32 0.0, %v3773
      %v3775 = vpop.f32.mrb[0].mxu0
      %3776 = vmatprep.mubr.bf16.mxu0 0
      %3777 = vmatmul.mubr.bf16.gmra.mrb[0].mxu0 %v3664
      %v3778 = vpop.f32.mrb[0].mxu0
      %v3779 = vadd.f32 0.0, %v3778
      %v3780 = vpop.f32.mrb[0].mxu0
      %v3781 = vpop.f32.mrb[0].mxu0
      %v3782 = vadd.f32 0.0, %v3781
      %v3783 = vpop.f32.mrb[0].mxu0
      %3784 = vmatprep.mubr.bf16.mxu0 0
      %3785 = vmatmul.mubr.bf16.gmra.mrb[0].mxu0 %v3667
      %v3786 = vpop.f32.mrb[0].mxu0
      %v3787 = vadd.f32 0.0, %v3786
      %v3788 = vpop.f32.mrb[0].mxu0
      %v3789 = vpop.f32.mrb[0].mxu0
      %v3790 = vadd.f32 0.0, %v3789
      %v3791 = vpop.f32.mrb[0].mxu0
      %3792 = vmatprep.mubr.bf16.mxu0 0
      %3793 = vmatmul.mubr.bf16.gmra.mrb[0].mxu0 %v3670
      %v3794 = vpop.f32.mrb[0].mxu0
      %v3795 = vadd.f32 0.0, %v3794
      %v3796 = vpop.f32.mrb[0].mxu0
      %v3797 = vpop.f32.mrb[0].mxu0
      %v3798 = vadd.f32 0.0, %v3797
      %v3799 = vpop.f32.mrb[0].mxu0
      %3800 = vmatprep.mubr.bf16.mxu0 0
      %3801 = vmatmul.mubr.bf16.gmra.mrb[0].mxu0 %v3673
      %v3802 = vpop.f32.mrb[0].mxu0
      %v3803 = vadd.f32 0.0, %v3802
      %v3804 = vpop.f32.mrb[0].mxu0
      %v3805 = vpop.f32.mrb[0].mxu0
      %v3806 = vadd.f32 0.0, %v3805
      %v3807 = vpop.f32.mrb[0].mxu0
      %3808 = vmatprep.mubr.bf16.mxu0 0
      %3809 = vmatmul.mubr.bf16.gmra.mrb[0].mxu0 %v3676
      %v3810 = vpop.f32.mrb[0].mxu0
      %v3811 = vadd.f32 0.0, %v3810
      %v3812 = vpop.f32.mrb[0].mxu0
      %v3813 = vpop.f32.mrb[0].mxu0
      %v3814 = vadd.f32 0.0, %v3813
      %v3815 = vpop.f32.mrb[0].mxu0
      %3816 = vmatprep.mubr.bf16.mxu0 0
      %3817 = vmatmul.mubr.bf16.gmra.mrb[0].mxu0 %v3679
      %v3818 = vpop.f32.mrb[0].mxu0
      %v3819 = vadd.f32 0.0, %v3818
      %v3820 = vpop.f32.mrb[0].mxu0
      %v3821 = vpop.f32.mrb[0].mxu0
      %v3822 = vadd.f32 0.0, %v3821
      %v3823 = vpop.f32.mrb[0].mxu0
      %3824 = vmatprep.mubr.bf16.mxu0 0
      %3825 = vmatmul.mubr.bf16.gmra.mrb[0].mxu0 %v3682
      %v3826 = vpop.f32.mrb[0].mxu0
      %v3827 = vadd.f32 0.0, %v3826
      %v3828 = vpop.f32.mrb[0].mxu0
      %v3829 = vpop.f32.mrb[0].mxu0
      %v3830 = vadd.f32 0.0, %v3829
      %v3831 = vpop.f32.mrb[0].mxu0
      %3832 = vmatprep.mubr.bf16.mxu0 0
      %3833 = vmatmul.mubr.bf16.gmra.mrb[0].mxu0 %v3685
      %v3834 = vpop.f32.mrb[0].mxu0
      %v3835 = vadd.f32 0.0, %v3834
      %v3836 = vpop.f32.mrb[0].mxu0
      %v3837 = vpop.f32.mrb[0].mxu0
      %v3838 = vadd.f32 0.0, %v3837
      %v3839 = vpop.f32.mrb[0].mxu0
      %3840 = vmatprep.mubr.bf16.mxu0 0
      %3841 = vmatmul.mubr.bf16.gmra.mrb[0].mxu0 %v3688
      %v3842 = vpop.f32.mrb[0].mxu0
      %v3843 = vadd.f32 0.0, %v3842
      %v3844 = vpop.f32.mrb[0].mxu0
      %v3845 = vpop.f32.mrb[0].mxu0
      %v3846 = vadd.f32 0.0, %v3845
      %v3847 = vpop.f32.mrb[0].mxu0
      %3848 = vmatprep.mubr.bf16.mxu0 0
      %3849 = vmatmul.mubr.bf16.gmra.mrb[0].mxu0 %v3691
      %v3850 = vpop.f32.mrb[0].mxu0
      %v3851 = vadd.f32 0.0, %v3850
      %v3852 = vpop.f32.mrb[0].mxu0
      %v3853 = vpop.f32.mrb[0].mxu0
      %v3854 = vadd.f32 0.0, %v3853
      %v3855 = vpop.f32.mrb[0].mxu0
      %3856 = vdwg.mxu0
      %v3857 = vsel %vm907, %v3433, 0
      %v3859 = vsel %vm907, %v3435, 0
      %v3861 = vsel %vm907, %v3437, 0
      %v3863 = vsel %vm907, %v3439, 0
      %v3865 = vsel %vm907, %v3441, 0
      %v3867 = vsel %vm907, %v3443, 0
      %v3869 = vsel %vm907, %v3445, 0
      %v3871 = vsel %vm907, %v3447, 0
      %v3873 = vsel %vm907, %v3449, 0
      %v3875 = vsel %vm907, %v3451, 0
      %v3877 = vsel %vm907, %v3453, 0
      %v3879 = vsel %vm907, %v3455, 0
      %v3881 = vsel %vm907, %v3457, 0
      %v3883 = vsel %vm907, %v3459, 0
      %v3885 = vsel %vm907, %v3461, 0
      %v3888 = vsel %vm953, %v3465, 0
      %3890 = vmatprep.subr.bf16.mxu0 0
      %3891 = vmatpush1.bf16.msra.mxu0 %v3888
      %3892 = vmatprep.subr.bf16.mxu0 0
      %3893 = vmatpush1.bf16.msra.mxu0 0
      %3894 = vmatprep.subr.bf16.mxu0 0
      %3895 = vmatpush1.bf16.msra.mxu0 0
      %3896 = vmatprep.subr.bf16.mxu0 0
      %3897 = vmatpush1.bf16.msra.mxu0 0
      %3898 = vmatprep.subr.bf16.mxu0 0
      %3899 = vmatpush1.bf16.msra.mxu0 0
      %3900 = vmatprep.subr.bf16.mxu0 0
      %3901 = vmatpush1.bf16.msra.mxu0 0
      %3902 = vmatprep.subr.bf16.mxu0 0
      %3903 = vmatpush1.bf16.msra.mxu0 0
      %3904 = vmatprep.subr.bf16.mxu0 0
      %3905 = vmatpush1.bf16.msra.mxu0 0
      %3906 = vmatprep.subr.bf16.mxu0 0
      %3907 = vmatpush1.bf16.msra.mxu0 0
      %3908 = vmatprep.subr.bf16.mxu0 0
      %3909 = vmatpush1.bf16.msra.mxu0 0
      %3910 = vmatprep.subr.bf16.mxu0 0
      %3911 = vmatpush1.bf16.msra.mxu0 0
      %3912 = vmatprep.subr.bf16.mxu0 0
      %3913 = vmatpush1.bf16.msra.mxu0 0
      %3914 = vmatprep.subr.bf16.mxu0 0
      %3915 = vmatpush1.bf16.msra.mxu0 0
      %3916 = vmatprep.subr.bf16.mxu0 0
      %3917 = vmatpush1.bf16.msra.mxu0 0
      %3918 = vmatprep.subr.bf16.mxu0 0
      %3919 = vmatpush1.bf16.msra.mxu0 0
      %3920 = vmatprep.subr.bf16.mxu0 0
      %3921 = vmatpush1.bf16.msra.mxu0 0
      %3922 = vmatprep.mubr.bf16.mxu0 0
      %3923 = vmatmul.mubr.bf16.gmra.mrb[0].mxu0 %v3857
      %v3924 = vpop.f32.mrb[0].mxu0
      %v3925 = vadd.f32 %v3731, %v3924
      %v3926 = vpop.f32.mrb[0].mxu0
      %v3927 = vpop.f32.mrb[0].mxu0
      %v3928 = vadd.f32 %v3734, %v3927
      %v3929 = vpop.f32.mrb[0].mxu0
      %3930 = vmatprep.mubr.bf16.mxu0 0
      %3931 = vmatmul.mubr.bf16.gmra.mrb[0].mxu0 %v3859
      %v3932 = vpop.f32.mrb[0].mxu0
      %v3933 = vadd.f32 %v3739, %v3932
      %v3934 = vpop.f32.mrb[0].mxu0
      %v3935 = vpop.f32.mrb[0].mxu0
      %v3936 = vadd.f32 %v3742, %v3935
      %v3937 = vpop.f32.mrb[0].mxu0
      %3938 = vmatprep.mubr.bf16.mxu0 0
      %3939 = vmatmul.mubr.bf16.gmra.mrb[0].mxu0 %v3857
      %v3940 = vpop.f32.mrb[0].mxu0
      %v3941 = vadd.f32 %v3747, %v3940
      %v3942 = vpop.f32.mrb[0].mxu0
      %v3943 = vpop.f32.mrb[0].mxu0
      %v3944 = vadd.f32 %v3750, %v3943
      %v3945 = vpop.f32.mrb[0].mxu0
      %3946 = vmatprep.mubr.bf16.mxu0 0
      %3947 = vmatmul.mubr.bf16.gmra.mrb[0].mxu0 %v3861
      %v3948 = vpop.f32.mrb[0].mxu0
      %v3949 = vadd.f32 %v3755, %v3948
      %v3950 = vpop.f32.mrb[0].mxu0
      %v3951 = vpop.f32.mrb[0].mxu0
      %v3952 = vadd.f32 %v3758, %v3951
      %v3953 = vpop.f32.mrb[0].mxu0
      %3954 = vmatprep.mubr.bf16.mxu0 0
      %3955 = vmatmul.mubr.bf16.gmra.mrb[0].mxu0 %v3863
      %v3956 = vpop.f32.mrb[0].mxu0
      %v3957 = vadd.f32 %v3763, %v3956
      %v3958 = vpop.f32.mrb[0].mxu0
      %v3959 = vpop.f32.mrb[0].mxu0
      %v3960 = vadd.f32 %v3766, %v3959
      %v3961 = vpop.f32.mrb[0].mxu0
      %3962 = vmatprep.mubr.bf16.mxu0 0
      %3963 = vmatmul.mubr.bf16.gmra.mrb[0].mxu0 %v3865
      %v3964 = vpop.f32.mrb[0].mxu0
      %v3965 = vadd.f32 %v3771, %v3964
      %v3966 = vpop.f32.mrb[0].mxu0
      %v3967 = vpop.f32.mrb[0].mxu0
      %v3968 = vadd.f32 %v3774, %v3967
      %v3969 = vpop.f32.mrb[0].mxu0
      %3970 = vmatprep.mubr.bf16.mxu0 0
      %3971 = vmatmul.mubr.bf16.gmra.mrb[0].mxu0 %v3867
      %v3972 = vpop.f32.mrb[0].mxu0
      %v3973 = vadd.f32 %v3779, %v3972
      %v3974 = vpop.f32.mrb[0].mxu0
      %v3975 = vpop.f32.mrb[0].mxu0
      %v3976 = vadd.f32 %v3782, %v3975
      %v3977 = vpop.f32.mrb[0].mxu0
      %3978 = vmatprep.mubr.bf16.mxu0 0
      %3979 = vmatmul.mubr.bf16.gmra.mrb[0].mxu0 %v3869
      %v3980 = vpop.f32.mrb[0].mxu0
      %v3981 = vadd.f32 %v3787, %v3980
      %v3982 = vpop.f32.mrb[0].mxu0
      %v3983 = vpop.f32.mrb[0].mxu0
      %v3984 = vadd.f32 %v3790, %v3983
      %v3985 = vpop.f32.mrb[0].mxu0
      %3986 = vmatprep.mubr.bf16.mxu0 0
      %3987 = vmatmul.mubr.bf16.gmra.mrb[0].mxu0 %v3871
      %v3988 = vpop.f32.mrb[0].mxu0
      %v3989 = vadd.f32 %v3795, %v3988
      %v3990 = vpop.f32.mrb[0].mxu0
      %v3991 = vpop.f32.mrb[0].mxu0
      %v3992 = vadd.f32 %v3798, %v3991
      %v3993 = vpop.f32.mrb[0].mxu0
      %3994 = vmatprep.mubr.bf16.mxu0 0
      %3995 = vmatmul.mubr.bf16.gmra.mrb[0].mxu0 %v3873
      %v3996 = vpop.f32.mrb[0].mxu0
      %v3997 = vadd.f32 %v3803, %v3996
      %v3998 = vpop.f32.mrb[0].mxu0
      %v3999 = vpop.f32.mrb[0].mxu0
      %v4000 = vadd.f32 %v3806, %v3999
      %v4001 = vpop.f32.mrb[0].mxu0
      %4002 = vmatprep.mubr.bf16.mxu0 0
      %4003 = vmatmul.mubr.bf16.gmra.mrb[0].mxu0 %v3875
      %v4004 = vpop.f32.mrb[0].mxu0
      %v4005 = vadd.f32 %v3811, %v4004
      %v4006 = vpop.f32.mrb[0].mxu0
      %v4007 = vpop.f32.mrb[0].mxu0
      %v4008 = vadd.f32 %v3814, %v4007
      %v4009 = vpop.f32.mrb[0].mxu0
      %4010 = vmatprep.mubr.bf16.mxu0 0
      %4011 = vmatmul.mubr.bf16.gmra.mrb[0].mxu0 %v3877
      %v4012 = vpop.f32.mrb[0].mxu0
      %v4013 = vadd.f32 %v3819, %v4012
      %v4014 = vpop.f32.mrb[0].mxu0
      %v4015 = vpop.f32.mrb[0].mxu0
      %v4016 = vadd.f32 %v3822, %v4015
      %v4017 = vpop.f32.mrb[0].mxu0
      %4018 = vmatprep.mubr.bf16.mxu0 0
      %4019 = vmatmul.mubr.bf16.gmra.mrb[0].mxu0 %v3879
      %v4020 = vpop.f32.mrb[0].mxu0
      %v4021 = vadd.f32 %v3827, %v4020
      %v4022 = vpop.f32.mrb[0].mxu0
      %v4023 = vpop.f32.mrb[0].mxu0
      %v4024 = vadd.f32 %v3830, %v4023
      %v4025 = vpop.f32.mrb[0].mxu0
      %4026 = vmatprep.mubr.bf16.mxu0 0
      %4027 = vmatmul.mubr.bf16.gmra.mrb[0].mxu0 %v3881
      %v4028 = vpop.f32.mrb[0].mxu0
      %v4029 = vadd.f32 %v3835, %v4028
      %v4030 = vpop.f32.mrb[0].mxu0
      %v4031 = vpop.f32.mrb[0].mxu0
      %v4032 = vadd.f32 %v3838, %v4031
      %v4033 = vpop.f32.mrb[0].mxu0
      %4034 = vmatprep.mubr.bf16.mxu0 0
      %4035 = vmatmul.mubr.bf16.gmra.mrb[0].mxu0 %v3883
      %v4036 = vpop.f32.mrb[0].mxu0
      %v4037 = vadd.f32 %v3843, %v4036
      %v4038 = vpop.f32.mrb[0].mxu0
      %v4039 = vpop.f32.mrb[0].mxu0
      %v4040 = vadd.f32 %v3846, %v4039
      %v4041 = vpop.f32.mrb[0].mxu0
      %4042 = vmatprep.mubr.bf16.mxu0 0
      %4043 = vmatmul.mubr.bf16.gmra.mrb[0].mxu0 %v3885
      %v4044 = vpop.f32.mrb[0].mxu0
      %v4045 = vadd.f32 %v3851, %v4044
      %v4046 = vpop.f32.mrb[0].mxu0
      %v4047 = vpop.f32.mrb[0].mxu0
      %v4048 = vadd.f32 %v3854, %v4047
      %v4049 = vpop.f32.mrb[0].mxu0
      %4050 = vdwg.mxu0
      %v4081 = vrot.slane %v3433, 1
      %v4082 = vrot.slane %v3434, 1
      %v4083 = vsel %vm1342, %v4081, %v4082
      %v4084 = vrot.slane %v3435, 1
      %v4085 = vrot.slane %v3436, 1
      %v4086 = vsel %vm1342, %v4084, %v4085
      %v4087 = vrot.slane %v3437, 1
      %v4088 = vrot.slane %v3438, 1
      %v4089 = vsel %vm1342, %v4087, %v4088
      %v4090 = vrot.slane %v3439, 1
      %v4091 = vrot.slane %v3440, 1
      %v4092 = vsel %vm1342, %v4090, %v4091
      %v4093 = vrot.slane %v3441, 1
      %v4094 = vrot.slane %v3442, 1
      %v4095 = vsel %vm1342, %v4093, %v4094
      %v4096 = vrot.slane %v3443, 1
      %v4097 = vrot.slane %v3444, 1
      %v4098 = vsel %vm1342, %v4096, %v4097
      %v4099 = vrot.slane %v3445, 1
      %v4100 = vrot.slane %v3446, 1
      %v4101 = vsel %vm1342, %v4099, %v4100
      %v4102 = vrot.slane %v3447, 1
      %v4103 = vrot.slane %v3448, 1
      %v4104 = vsel %vm1342, %v4102, %v4103
      %v4105 = vrot.slane %v3449, 1
      %v4106 = vrot.slane %v3450, 1
      %v4107 = vsel %vm1342, %v4105, %v4106
      %v4108 = vrot.slane %v3451, 1
      %v4109 = vrot.slane %v3452, 1
      %v4110 = vsel %vm1342, %v4108, %v4109
      %v4111 = vrot.slane %v3453, 1
      %v4112 = vrot.slane %v3454, 1
      %v4113 = vsel %vm1342, %v4111, %v4112
      %v4114 = vrot.slane %v3455, 1
      %v4115 = vrot.slane %v3456, 1
      %v4116 = vsel %vm1342, %v4114, %v4115
      %v4117 = vrot.slane %v3457, 1
      %v4118 = vrot.slane %v3458, 1
      %v4119 = vsel %vm1342, %v4117, %v4118
      %v4120 = vrot.slane %v3459, 1
      %v4121 = vrot.slane %v3460, 1
      %v4122 = vsel %vm1342, %v4120, %v4121
      %v4123 = vrot.slane %v3461, 1
      %v4124 = vrot.slane %v3462, 1
      %v4125 = vsel %vm1342, %v4123, %v4124
      %s4126 = scalar_lea.vmem %s3, 8
      %v4127 = vld [vmem:[%s4126] sm:$0xf]
      %v4129 = vsel %vm907, %v4083, 0
      %v4132 = vsel %vm907, %v4086, 0
      %v4135 = vsel %vm907, %v4089, 0
      %v4138 = vsel %vm907, %v4092, 0
      %v4141 = vsel %vm907, %v4095, 0
      %v4144 = vsel %vm907, %v4098, 0
      %v4147 = vsel %vm907, %v4101, 0
      %v4150 = vsel %vm907, %v4104, 0
      %v4153 = vsel %vm907, %v4107, 0
      %v4156 = vsel %vm907, %v4110, 0
      %v4159 = vsel %vm907, %v4113, 0
      %v4162 = vsel %vm907, %v4116, 0
      %v4165 = vsel %vm907, %v4119, 0
      %v4168 = vsel %vm907, %v4122, 0
      %v4171 = vsel %vm907, %v4125, 0
      %v4174 = vsel %vm953, %v4127, 0
      %4176 = vmatprep.subr.bf16.mxu0 0
      %4177 = vmatpush1.bf16.msra.mxu0 %v4174
      %4178 = vmatprep.subr.bf16.mxu0 0
      %4179 = vmatpush1.bf16.msra.mxu0 0
      %4180 = vmatprep.subr.bf16.mxu0 0
      %4181 = vmatpush1.bf16.msra.mxu0 0
      %4182 = vmatprep.subr.bf16.mxu0 0
      %4183 = vmatpush1.bf16.msra.mxu0 0
      %4184 = vmatprep.subr.bf16.mxu0 0
      %4185 = vmatpush1.bf16.msra.mxu0 0
      %4186 = vmatprep.subr.bf16.mxu0 0
      %4187 = vmatpush1.bf16.msra.mxu0 0
      %4188 = vmatprep.subr.bf16.mxu0 0
      %4189 = vmatpush1.bf16.msra.mxu0 0
      %4190 = vmatprep.subr.bf16.mxu0 0
      %4191 = vmatpush1.bf16.msra.mxu0 0
      %4192 = vmatprep.subr.bf16.mxu0 0
      %4193 = vmatpush1.bf16.msra.mxu0 0
      %4194 = vmatprep.subr.bf16.mxu0 0
      %4195 = vmatpush1.bf16.msra.mxu0 0
      %4196 = vmatprep.subr.bf16.mxu0 0
      %4197 = vmatpush1.bf16.msra.mxu0 0
      %4198 = vmatprep.subr.bf16.mxu0 0
      %4199 = vmatpush1.bf16.msra.mxu0 0
      %4200 = vmatprep.subr.bf16.mxu0 0
      %4201 = vmatpush1.bf16.msra.mxu0 0
      %4202 = vmatprep.subr.bf16.mxu0 0
      %4203 = vmatpush1.bf16.msra.mxu0 0
      %4204 = vmatprep.subr.bf16.mxu0 0
      %4205 = vmatpush1.bf16.msra.mxu0 0
      %4206 = vmatprep.subr.bf16.mxu0 0
      %4207 = vmatpush1.bf16.msra.mxu0 0
      %4208 = vmatprep.mubr.bf16.mxu0 0
      %4209 = vmatmul.mubr.bf16.gmra.mrb[0].mxu0 %v4129
      %v4210 = vpop.f32.mrb[0].mxu0
      %v4211 = vadd.f32 0.0, %v4210
      %v4212 = vpop.f32.mrb[0].mxu0
      %v4213 = vpop.f32.mrb[0].mxu0
      %v4214 = vadd.f32 0.0, %v4213
      %v4215 = vpop.f32.mrb[0].mxu0
      %4216 = vmatprep.mubr.bf16.mxu0 0
      %4217 = vmatmul.mubr.bf16.gmra.mrb[0].mxu0 %v4132
      %v4218 = vpop.f32.mrb[0].mxu0
      %v4219 = vadd.f32 0.0, %v4218
      %v4220 = vpop.f32.mrb[0].mxu0
      %v4221 = vpop.f32.mrb[0].mxu0
      %v4222 = vadd.f32 0.0, %v4221
      %v4223 = vpop.f32.mrb[0].mxu0
      %4224 = vmatprep.mubr.bf16.mxu0 0
      %4225 = vmatmul.mubr.bf16.gmra.mrb[0].mxu0 %v4129
      %v4226 = vpop.f32.mrb[0].mxu0
      %v4227 = vadd.f32 0.0, %v4226
      %v4228 = vpop.f32.mrb[0].mxu0
      %v4229 = vpop.f32.mrb[0].mxu0
      %v4230 = vadd.f32 0.0, %v4229
      %v4231 = vpop.f32.mrb[0].mxu0
      %4232 = vmatprep.mubr.bf16.mxu0 0
      %4233 = vmatmul.mubr.bf16.gmra.mrb[0].mxu0 %v4135
      %v4234 = vpop.f32.mrb[0].mxu0
      %v4235 = vadd.f32 0.0, %v4234
      %v4236 = vpop.f32.mrb[0].mxu0
      %v4237 = vpop.f32.mrb[0].mxu0
      %v4238 = vadd.f32 0.0, %v4237
      %v4239 = vpop.f32.mrb[0].mxu0
      %4240 = vmatprep.mubr.bf16.mxu0 0
      %4241 = vmatmul.mubr.bf16.gmra.mrb[0].mxu0 %v4138
      %v4242 = vpop.f32.mrb[0].mxu0
      %v4243 = vadd.f32 0.0, %v4242
      %v4244 = vpop.f32.mrb[0].mxu0
      %v4245 = vpop.f32.mrb[0].mxu0
      %v4246 = vadd.f32 0.0, %v4245
      %v4247 = vpop.f32.mrb[0].mxu0
      %4248 = vmatprep.mubr.bf16.mxu0 0
      %4249 = vmatmul.mubr.bf16.gmra.mrb[0].mxu0 %v4141
      %v4250 = vpop.f32.mrb[0].mxu0
      %v4251 = vadd.f32 0.0, %v4250
      %v4252 = vpop.f32.mrb[0].mxu0
      %v4253 = vpop.f32.mrb[0].mxu0
      %v4254 = vadd.f32 0.0, %v4253
      %v4255 = vpop.f32.mrb[0].mxu0
      %4256 = vmatprep.mubr.bf16.mxu0 0
      %4257 = vmatmul.mubr.bf16.gmra.mrb[0].mxu0 %v4144
      %v4258 = vpop.f32.mrb[0].mxu0
      %v4259 = vadd.f32 0.0, %v4258
      %v4260 = vpop.f32.mrb[0].mxu0
      %v4261 = vpop.f32.mrb[0].mxu0
      %v4262 = vadd.f32 0.0, %v4261
      %v4263 = vpop.f32.mrb[0].mxu0
      %4264 = vmatprep.mubr.bf16.mxu0 0
      %4265 = vmatmul.mubr.bf16.gmra.mrb[0].mxu0 %v4147
      %v4266 = vpop.f32.mrb[0].mxu0
      %v4267 = vadd.f32 0.0, %v4266
      %v4268 = vpop.f32.mrb[0].mxu0
      %v4269 = vpop.f32.mrb[0].mxu0
      %v4270 = vadd.f32 0.0, %v4269
      %v4271 = vpop.f32.mrb[0].mxu0
      %4272 = vmatprep.mubr.bf16.mxu0 0
      %4273 = vmatmul.mubr.bf16.gmra.mrb[0].mxu0 %v4150
      %v4274 = vpop.f32.mrb[0].mxu0
      %v4275 = vadd.f32 0.0, %v4274
      %v4276 = vpop.f32.mrb[0].mxu0
      %v4277 = vpop.f32.mrb[0].mxu0
      %v4278 = vadd.f32 0.0, %v4277
      %v4279 = vpop.f32.mrb[0].mxu0
      %4280 = vmatprep.mubr.bf16.mxu0 0
      %4281 = vmatmul.mubr.bf16.gmra.mrb[0].mxu0 %v4153
      %v4282 = vpop.f32.mrb[0].mxu0
      %v4283 = vadd.f32 0.0, %v4282
      %v4284 = vpop.f32.mrb[0].mxu0
      %v4285 = vpop.f32.mrb[0].mxu0
      %v4286 = vadd.f32 0.0, %v4285
      %v4287 = vpop.f32.mrb[0].mxu0
      %4288 = vmatprep.mubr.bf16.mxu0 0
      %4289 = vmatmul.mubr.bf16.gmra.mrb[0].mxu0 %v4156
      %v4290 = vpop.f32.mrb[0].mxu0
      %v4291 = vadd.f32 0.0, %v4290
      %v4292 = vpop.f32.mrb[0].mxu0
      %v4293 = vpop.f32.mrb[0].mxu0
      %v4294 = vadd.f32 0.0, %v4293
      %v4295 = vpop.f32.mrb[0].mxu0
      %4296 = vmatprep.mubr.bf16.mxu0 0
      %4297 = vmatmul.mubr.bf16.gmra.mrb[0].mxu0 %v4159
      %v4298 = vpop.f32.mrb[0].mxu0
      %v4299 = vadd.f32 0.0, %v4298
      %v4300 = vpop.f32.mrb[0].mxu0
      %v4301 = vpop.f32.mrb[0].mxu0
      %v4302 = vadd.f32 0.0, %v4301
      %v4303 = vpop.f32.mrb[0].mxu0
      %4304 = vmatprep.mubr.bf16.mxu0 0
      %4305 = vmatmul.mubr.bf16.gmra.mrb[0].mxu0 %v4162
      %v4306 = vpop.f32.mrb[0].mxu0
      %v4307 = vadd.f32 0.0, %v4306
      %v4308 = vpop.f32.mrb[0].mxu0
      %v4309 = vpop.f32.mrb[0].mxu0
      %v4310 = vadd.f32 0.0, %v4309
      %v4311 = vpop.f32.mrb[0].mxu0
      %4312 = vmatprep.mubr.bf16.mxu0 0
      %4313 = vmatmul.mubr.bf16.gmra.mrb[0].mxu0 %v4165
      %v4314 = vpop.f32.mrb[0].mxu0
      %v4315 = vadd.f32 0.0, %v4314
      %v4316 = vpop.f32.mrb[0].mxu0
      %v4317 = vpop.f32.mrb[0].mxu0
      %v4318 = vadd.f32 0.0, %v4317
      %v4319 = vpop.f32.mrb[0].mxu0
      %4320 = vmatprep.mubr.bf16.mxu0 0
      %4321 = vmatmul.mubr.bf16.gmra.mrb[0].mxu0 %v4168
      %v4322 = vpop.f32.mrb[0].mxu0
      %v4323 = vadd.f32 0.0, %v4322
      %v4324 = vpop.f32.mrb[0].mxu0
      %v4325 = vpop.f32.mrb[0].mxu0
      %v4326 = vadd.f32 0.0, %v4325
      %v4327 = vpop.f32.mrb[0].mxu0
      %4328 = vmatprep.mubr.bf16.mxu0 0
      %4329 = vmatmul.mubr.bf16.gmra.mrb[0].mxu0 %v4171
      %v4330 = vpop.f32.mrb[0].mxu0
      %v4331 = vadd.f32 0.0, %v4330
      %v4332 = vpop.f32.mrb[0].mxu0
      %v4333 = vpop.f32.mrb[0].mxu0
      %v4334 = vadd.f32 0.0, %v4333
      %v4335 = vpop.f32.mrb[0].mxu0
      %4336 = vdwg.mxu0
      %v4337 = vadd.f32 %v3925, %v4211
      %v4338 = vadd.f32 %v3928, %v4214
      %v4339 = vadd.f32 %v3933, %v4219
      %v4340 = vadd.f32 %v3936, %v4222
      %v4341 = vadd.f32 %v3941, %v4227
      %v4342 = vadd.f32 %v3944, %v4230
      %v4343 = vadd.f32 %v3949, %v4235
      %v4344 = vadd.f32 %v3952, %v4238
      %v4345 = vadd.f32 %v3957, %v4243
      %v4346 = vadd.f32 %v3960, %v4246
      %v4347 = vadd.f32 %v3965, %v4251
      %v4348 = vadd.f32 %v3968, %v4254
      %v4349 = vadd.f32 %v3973, %v4259
      %v4350 = vadd.f32 %v3976, %v4262
      %v4351 = vadd.f32 %v3981, %v4267
      %v4352 = vadd.f32 %v3984, %v4270
      %v4353 = vadd.f32 %v3989, %v4275
      %v4354 = vadd.f32 %v3992, %v4278
      %v4355 = vadd.f32 %v3997, %v4283
      %v4356 = vadd.f32 %v4000, %v4286
      %v4357 = vadd.f32 %v4005, %v4291
      %v4358 = vadd.f32 %v4008, %v4294
      %v4359 = vadd.f32 %v4013, %v4299
      %v4360 = vadd.f32 %v4016, %v4302
      %v4361 = vadd.f32 %v4021, %v4307
      %v4362 = vadd.f32 %v4024, %v4310
      %v4363 = vadd.f32 %v4029, %v4315
      %v4364 = vadd.f32 %v4032, %v4318
      %v4365 = vadd.f32 %v4037, %v4323
      %v4366 = vadd.f32 %v4040, %v4326
      %v4367 = vadd.f32 %v4045, %v4331
      %v4368 = vadd.f32 %v4048, %v4334
      %s4369 = scalar_lea.vmem %s3, 12
      %v4370 = vld [vmem:[%s4369] sm:$0xf]
      %v4372 = vsel %vm907, %v3463, 0
      %v4375 = vsel %vm953, %v4370, 0
      %4377 = vmatprep.subr.bf16.mxu0 0
      %4378 = vmatpush1.bf16.msra.mxu0 %v4375
      %4379 = vmatprep.subr.bf16.mxu0 0
      %4380 = vmatpush1.bf16.msra.mxu0 0
      %4381 = vmatprep.subr.bf16.mxu0 0
      %4382 = vmatpush1.bf16.msra.mxu0 0
      %4383 = vmatprep.subr.bf16.mxu0 0
      %4384 = vmatpush1.bf16.msra.mxu0 0
      %4385 = vmatprep.subr.bf16.mxu0 0
      %4386 = vmatpush1.bf16.msra.mxu0 0
      %4387 = vmatprep.subr.bf16.mxu0 0
      %4388 = vmatpush1.bf16.msra.mxu0 0
      %4389 = vmatprep.subr.bf16.mxu0 0
      %4390 = vmatpush1.bf16.msra.mxu0 0
      %4391 = vmatprep.subr.bf16.mxu0 0
      %4392 = vmatpush1.bf16.msra.mxu0 0
      %4393 = vmatprep.subr.bf16.mxu0 0
      %4394 = vmatpush1.bf16.msra.mxu0 0
      %4395 = vmatprep.subr.bf16.mxu0 0
      %4396 = vmatpush1.bf16.msra.mxu0 0
      %4397 = vmatprep.subr.bf16.mxu0 0
      %4398 = vmatpush1.bf16.msra.mxu0 0
      %4399 = vmatprep.subr.bf16.mxu0 0
      %4400 = vmatpush1.bf16.msra.mxu0 0
      %4401 = vmatprep.subr.bf16.mxu0 0
      %4402 = vmatpush1.bf16.msra.mxu0 0
      %4403 = vmatprep.subr.bf16.mxu0 0
      %4404 = vmatpush1.bf16.msra.mxu0 0
      %4405 = vmatprep.subr.bf16.mxu0 0
      %4406 = vmatpush1.bf16.msra.mxu0 0
      %4407 = vmatprep.subr.bf16.mxu0 0
      %4408 = vmatpush1.bf16.msra.mxu0 0
      %4409 = vmatprep.mubr.bf16.mxu0 0
      %4410 = vmatmul.mubr.bf16.gmra.mrb[0].mxu0 %v3859
      %v4411 = vpop.f32.mrb[0].mxu0
      %v4412 = vadd.f32 0.0, %v4411
      %v4413 = vpop.f32.mrb[0].mxu0
      %v4414 = vpop.f32.mrb[0].mxu0
      %v4415 = vadd.f32 0.0, %v4414
      %v4416 = vpop.f32.mrb[0].mxu0
      %4417 = vmatprep.mubr.bf16.mxu0 0
      %4418 = vmatmul.mubr.bf16.gmra.mrb[0].mxu0 %v3857
      %v4419 = vpop.f32.mrb[0].mxu0
      %v4420 = vadd.f32 0.0, %v4419
      %v4421 = vpop.f32.mrb[0].mxu0
      %v4422 = vpop.f32.mrb[0].mxu0
      %v4423 = vadd.f32 0.0, %v4422
      %v4424 = vpop.f32.mrb[0].mxu0
      %4425 = vmatprep.mubr.bf16.mxu0 0
      %4426 = vmatmul.mubr.bf16.gmra.mrb[0].mxu0 %v3861
      %v4427 = vpop.f32.mrb[0].mxu0
      %v4428 = vadd.f32 0.0, %v4427
      %v4429 = vpop.f32.mrb[0].mxu0
      %v4430 = vpop.f32.mrb[0].mxu0
      %v4431 = vadd.f32 0.0, %v4430
      %v4432 = vpop.f32.mrb[0].mxu0
      %4433 = vmatprep.mubr.bf16.mxu0 0
      %4434 = vmatmul.mubr.bf16.gmra.mrb[0].mxu0 %v3863
      %v4435 = vpop.f32.mrb[0].mxu0
      %v4436 = vadd.f32 0.0, %v4435
      %v4437 = vpop.f32.mrb[0].mxu0
      %v4438 = vpop.f32.mrb[0].mxu0
      %v4439 = vadd.f32 0.0, %v4438
      %v4440 = vpop.f32.mrb[0].mxu0
      %4441 = vmatprep.mubr.bf16.mxu0 0
      %4442 = vmatmul.mubr.bf16.gmra.mrb[0].mxu0 %v3865
      %v4443 = vpop.f32.mrb[0].mxu0
      %v4444 = vadd.f32 0.0, %v4443
      %v4445 = vpop.f32.mrb[0].mxu0
      %v4446 = vpop.f32.mrb[0].mxu0
      %v4447 = vadd.f32 0.0, %v4446
      %v4448 = vpop.f32.mrb[0].mxu0
      %4449 = vmatprep.mubr.bf16.mxu0 0
      %4450 = vmatmul.mubr.bf16.gmra.mrb[0].mxu0 %v3867
      %v4451 = vpop.f32.mrb[0].mxu0
      %v4452 = vadd.f32 0.0, %v4451
      %v4453 = vpop.f32.mrb[0].mxu0
      %v4454 = vpop.f32.mrb[0].mxu0
      %v4455 = vadd.f32 0.0, %v4454
      %v4456 = vpop.f32.mrb[0].mxu0
      %4457 = vmatprep.mubr.bf16.mxu0 0
      %4458 = vmatmul.mubr.bf16.gmra.mrb[0].mxu0 %v3869
      %v4459 = vpop.f32.mrb[0].mxu0
      %v4460 = vadd.f32 0.0, %v4459
      %v4461 = vpop.f32.mrb[0].mxu0
      %v4462 = vpop.f32.mrb[0].mxu0
      %v4463 = vadd.f32 0.0, %v4462
      %v4464 = vpop.f32.mrb[0].mxu0
      %4465 = vmatprep.mubr.bf16.mxu0 0
      %4466 = vmatmul.mubr.bf16.gmra.mrb[0].mxu0 %v3871
      %v4467 = vpop.f32.mrb[0].mxu0
      %v4468 = vadd.f32 0.0, %v4467
      %v4469 = vpop.f32.mrb[0].mxu0
      %v4470 = vpop.f32.mrb[0].mxu0
      %v4471 = vadd.f32 0.0, %v4470
      %v4472 = vpop.f32.mrb[0].mxu0
      %4473 = vmatprep.mubr.bf16.mxu0 0
      %4474 = vmatmul.mubr.bf16.gmra.mrb[0].mxu0 %v3873
      %v4475 = vpop.f32.mrb[0].mxu0
      %v4476 = vadd.f32 0.0, %v4475
      %v4477 = vpop.f32.mrb[0].mxu0
      %v4478 = vpop.f32.mrb[0].mxu0
      %v4479 = vadd.f32 0.0, %v4478
      %v4480 = vpop.f32.mrb[0].mxu0
      %4481 = vmatprep.mubr.bf16.mxu0 0
      %4482 = vmatmul.mubr.bf16.gmra.mrb[0].mxu0 %v3875
      %v4483 = vpop.f32.mrb[0].mxu0
      %v4484 = vadd.f32 0.0, %v4483
      %v4485 = vpop.f32.mrb[0].mxu0
      %v4486 = vpop.f32.mrb[0].mxu0
      %v4487 = vadd.f32 0.0, %v4486
      %v4488 = vpop.f32.mrb[0].mxu0
      %4489 = vmatprep.mubr.bf16.mxu0 0
      %4490 = vmatmul.mubr.bf16.gmra.mrb[0].mxu0 %v3877
      %v4491 = vpop.f32.mrb[0].mxu0
      %v4492 = vadd.f32 0.0, %v4491
      %v4493 = vpop.f32.mrb[0].mxu0
      %v4494 = vpop.f32.mrb[0].mxu0
      %v4495 = vadd.f32 0.0, %v4494
      %v4496 = vpop.f32.mrb[0].mxu0
      %4497 = vmatprep.mubr.bf16.mxu0 0
      %4498 = vmatmul.mubr.bf16.gmra.mrb[0].mxu0 %v3879
      %v4499 = vpop.f32.mrb[0].mxu0
      %v4500 = vadd.f32 0.0, %v4499
      %v4501 = vpop.f32.mrb[0].mxu0
      %v4502 = vpop.f32.mrb[0].mxu0
      %v4503 = vadd.f32 0.0, %v4502
      %v4504 = vpop.f32.mrb[0].mxu0
      %4505 = vmatprep.mubr.bf16.mxu0 0
      %4506 = vmatmul.mubr.bf16.gmra.mrb[0].mxu0 %v3881
      %v4507 = vpop.f32.mrb[0].mxu0
      %v4508 = vadd.f32 0.0, %v4507
      %v4509 = vpop.f32.mrb[0].mxu0
      %v4510 = vpop.f32.mrb[0].mxu0
      %v4511 = vadd.f32 0.0, %v4510
      %v4512 = vpop.f32.mrb[0].mxu0
      %4513 = vmatprep.mubr.bf16.mxu0 0
      %4514 = vmatmul.mubr.bf16.gmra.mrb[0].mxu0 %v3883
      %v4515 = vpop.f32.mrb[0].mxu0
      %v4516 = vadd.f32 0.0, %v4515
      %v4517 = vpop.f32.mrb[0].mxu0
      %v4518 = vpop.f32.mrb[0].mxu0
      %v4519 = vadd.f32 0.0, %v4518
      %v4520 = vpop.f32.mrb[0].mxu0
      %4521 = vmatprep.mubr.bf16.mxu0 0
      %4522 = vmatmul.mubr.bf16.gmra.mrb[0].mxu0 %v3885
      %v4523 = vpop.f32.mrb[0].mxu0
      %v4524 = vadd.f32 0.0, %v4523
      %v4525 = vpop.f32.mrb[0].mxu0
      %v4526 = vpop.f32.mrb[0].mxu0
      %v4527 = vadd.f32 0.0, %v4526
      %v4528 = vpop.f32.mrb[0].mxu0
      %4529 = vmatprep.mubr.bf16.mxu0 0
      %4530 = vmatmul.mubr.bf16.gmra.mrb[0].mxu0 %v4372
      %v4531 = vpop.f32.mrb[0].mxu0
      %v4532 = vadd.f32 0.0, %v4531
      %v4533 = vpop.f32.mrb[0].mxu0
      %v4534 = vpop.f32.mrb[0].mxu0
      %v4535 = vadd.f32 0.0, %v4534
      %v4536 = vpop.f32.mrb[0].mxu0
      %4537 = vdwg.mxu0
      %v4538 = vadd.f32 %v4337, %v4412
      %v4539 = vadd.f32 %v4338, %v4415
      %v4540 = vadd.f32 %v4339, %v4420
      %v4541 = vadd.f32 %v4340, %v4423
      %v4542 = vadd.f32 %v4341, %v4428
      %v4543 = vadd.f32 %v4342, %v4431
      %v4544 = vadd.f32 %v4343, %v4436
      %v4545 = vadd.f32 %v4344, %v4439
      %v4546 = vadd.f32 %v4345, %v4444
      %v4547 = vadd.f32 %v4346, %v4447
      %v4548 = vadd.f32 %v4347, %v4452
      %v4549 = vadd.f32 %v4348, %v4455
      %v4550 = vadd.f32 %v4349, %v4460
      %v4551 = vadd.f32 %v4350, %v4463
      %v4552 = vadd.f32 %v4351, %v4468
      %v4553 = vadd.f32 %v4352, %v4471
      %v4554 = vadd.f32 %v4353, %v4476
      %v4555 = vadd.f32 %v4354, %v4479
      %v4556 = vadd.f32 %v4355, %v4484
      %v4557 = vadd.f32 %v4356, %v4487
      %v4558 = vadd.f32 %v4357, %v4492
      %v4559 = vadd.f32 %v4358, %v4495
      %v4560 = vadd.f32 %v4359, %v4500
      %v4561 = vadd.f32 %v4360, %v4503
      %v4562 = vadd.f32 %v4361, %v4508
      %v4563 = vadd.f32 %v4362, %v4511
      %v4564 = vadd.f32 %v4363, %v4516
      %v4565 = vadd.f32 %v4364, %v4519
      %v4566 = vadd.f32 %v4365, %v4524
      %v4567 = vadd.f32 %v4366, %v4527
      %v4568 = vadd.f32 %v4367, %v4532
      %v4569 = vadd.f32 %v4368, %v4535
      %v4570 = vshrl.u32 %v3463, 16
      %v4572 = vshll.u32 %v3463, 16
      %v4574 = vrot.slane %v4572, 1
      %v4575 = vor.u32 %v4570, %v4574
      %v4577 = vshll.u32 %v3464, 16
      %v4579 = vrot.slane %v4577, 1
      %v4580 = vsel %vm724, %v4575, %v4579
      %s4581 = scalar_lea.vmem %s3, 16
      %v4582 = vld [vmem:[%s4581] sm:$0xf]
      %v4584 = vsel %vm907, %v4580, 0
      %v4587 = vsel %vm953, %v4582, 0
      %4589 = vmatprep.subr.bf16.mxu0 0
      %4590 = vmatpush1.bf16.msra.mxu0 %v4587
      %4591 = vmatprep.subr.bf16.mxu0 0
      %4592 = vmatpush1.bf16.msra.mxu0 0
      %4593 = vmatprep.subr.bf16.mxu0 0
      %4594 = vmatpush1.bf16.msra.mxu0 0
      %4595 = vmatprep.subr.bf16.mxu0 0
      %4596 = vmatpush1.bf16.msra.mxu0 0
      %4597 = vmatprep.subr.bf16.mxu0 0
      %4598 = vmatpush1.bf16.msra.mxu0 0
      %4599 = vmatprep.subr.bf16.mxu0 0
      %4600 = vmatpush1.bf16.msra.mxu0 0
      %4601 = vmatprep.subr.bf16.mxu0 0
      %4602 = vmatpush1.bf16.msra.mxu0 0
      %4603 = vmatprep.subr.bf16.mxu0 0
      %4604 = vmatpush1.bf16.msra.mxu0 0
      %4605 = vmatprep.subr.bf16.mxu0 0
      %4606 = vmatpush1.bf16.msra.mxu0 0
      %4607 = vmatprep.subr.bf16.mxu0 0
      %4608 = vmatpush1.bf16.msra.mxu0 0
      %4609 = vmatprep.subr.bf16.mxu0 0
      %4610 = vmatpush1.bf16.msra.mxu0 0
      %4611 = vmatprep.subr.bf16.mxu0 0
      %4612 = vmatpush1.bf16.msra.mxu0 0
      %4613 = vmatprep.subr.bf16.mxu0 0
      %4614 = vmatpush1.bf16.msra.mxu0 0
      %4615 = vmatprep.subr.bf16.mxu0 0
      %4616 = vmatpush1.bf16.msra.mxu0 0
      %4617 = vmatprep.subr.bf16.mxu0 0
      %4618 = vmatpush1.bf16.msra.mxu0 0
      %4619 = vmatprep.subr.bf16.mxu0 0
      %4620 = vmatpush1.bf16.msra.mxu0 0
      %4621 = vmatprep.mubr.bf16.mxu0 0
      %4622 = vmatmul.mubr.bf16.gmra.mrb[0].mxu0 %v3652
      %v4623 = vpop.f32.mrb[0].mxu0
      %v4624 = vadd.f32 0.0, %v4623
      %v4625 = vpop.f32.mrb[0].mxu0
      %v4626 = vpop.f32.mrb[0].mxu0
      %v4627 = vadd.f32 0.0, %v4626
      %v4628 = vpop.f32.mrb[0].mxu0
      %4629 = vmatprep.mubr.bf16.mxu0 0
      %4630 = vmatmul.mubr.bf16.gmra.mrb[0].mxu0 %v3649
      %v4631 = vpop.f32.mrb[0].mxu0
      %v4632 = vadd.f32 0.0, %v4631
      %v4633 = vpop.f32.mrb[0].mxu0
      %v4634 = vpop.f32.mrb[0].mxu0
      %v4635 = vadd.f32 0.0, %v4634
      %v4636 = vpop.f32.mrb[0].mxu0
      %4637 = vmatprep.mubr.bf16.mxu0 0
      %4638 = vmatmul.mubr.bf16.gmra.mrb[0].mxu0 %v3655
      %v4639 = vpop.f32.mrb[0].mxu0
      %v4640 = vadd.f32 0.0, %v4639
      %v4641 = vpop.f32.mrb[0].mxu0
      %v4642 = vpop.f32.mrb[0].mxu0
      %v4643 = vadd.f32 0.0, %v4642
      %v4644 = vpop.f32.mrb[0].mxu0
      %4645 = vmatprep.mubr.bf16.mxu0 0
      %4646 = vmatmul.mubr.bf16.gmra.mrb[0].mxu0 %v3658
      %v4647 = vpop.f32.mrb[0].mxu0
      %v4648 = vadd.f32 0.0, %v4647
      %v4649 = vpop.f32.mrb[0].mxu0
      %v4650 = vpop.f32.mrb[0].mxu0
      %v4651 = vadd.f32 0.0, %v4650
      %v4652 = vpop.f32.mrb[0].mxu0
      %4653 = vmatprep.mubr.bf16.mxu0 0
      %4654 = vmatmul.mubr.bf16.gmra.mrb[0].mxu0 %v3661
      %v4655 = vpop.f32.mrb[0].mxu0
      %v4656 = vadd.f32 0.0, %v4655
      %v4657 = vpop.f32.mrb[0].mxu0
      %v4658 = vpop.f32.mrb[0].mxu0
      %v4659 = vadd.f32 0.0, %v4658
      %v4660 = vpop.f32.mrb[0].mxu0
      %4661 = vmatprep.mubr.bf16.mxu0 0
      %4662 = vmatmul.mubr.bf16.gmra.mrb[0].mxu0 %v3664
      %v4663 = vpop.f32.mrb[0].mxu0
      %v4664 = vadd.f32 0.0, %v4663
      %v4665 = vpop.f32.mrb[0].mxu0
      %v4666 = vpop.f32.mrb[0].mxu0
      %v4667 = vadd.f32 0.0, %v4666
      %v4668 = vpop.f32.mrb[0].mxu0
      %4669 = vmatprep.mubr.bf16.mxu0 0
      %4670 = vmatmul.mubr.bf16.gmra.mrb[0].mxu0 %v3667
      %v4671 = vpop.f32.mrb[0].mxu0
      %v4672 = vadd.f32 0.0, %v4671
      %v4673 = vpop.f32.mrb[0].mxu0
      %v4674 = vpop.f32.mrb[0].mxu0
      %v4675 = vadd.f32 0.0, %v4674
      %v4676 = vpop.f32.mrb[0].mxu0
      %4677 = vmatprep.mubr.bf16.mxu0 0
      %4678 = vmatmul.mubr.bf16.gmra.mrb[0].mxu0 %v3670
      %v4679 = vpop.f32.mrb[0].mxu0
      %v4680 = vadd.f32 0.0, %v4679
      %v4681 = vpop.f32.mrb[0].mxu0
      %v4682 = vpop.f32.mrb[0].mxu0
      %v4683 = vadd.f32 0.0, %v4682
      %v4684 = vpop.f32.mrb[0].mxu0
      %4685 = vmatprep.mubr.bf16.mxu0 0
      %4686 = vmatmul.mubr.bf16.gmra.mrb[0].mxu0 %v3673
      %v4687 = vpop.f32.mrb[0].mxu0
      %v4688 = vadd.f32 0.0, %v4687
      %v4689 = vpop.f32.mrb[0].mxu0
      %v4690 = vpop.f32.mrb[0].mxu0
      %v4691 = vadd.f32 0.0, %v4690
      %v4692 = vpop.f32.mrb[0].mxu0
      %4693 = vmatprep.mubr.bf16.mxu0 0
      %4694 = vmatmul.mubr.bf16.gmra.mrb[0].mxu0 %v3676
      %v4695 = vpop.f32.mrb[0].mxu0
      %v4696 = vadd.f32 0.0, %v4695
      %v4697 = vpop.f32.mrb[0].mxu0
      %v4698 = vpop.f32.mrb[0].mxu0
      %v4699 = vadd.f32 0.0, %v4698
      %v4700 = vpop.f32.mrb[0].mxu0
      %4701 = vmatprep.mubr.bf16.mxu0 0
      %4702 = vmatmul.mubr.bf16.gmra.mrb[0].mxu0 %v3679
      %v4703 = vpop.f32.mrb[0].mxu0
      %v4704 = vadd.f32 0.0, %v4703
      %v4705 = vpop.f32.mrb[0].mxu0
      %v4706 = vpop.f32.mrb[0].mxu0
      %v4707 = vadd.f32 0.0, %v4706
      %v4708 = vpop.f32.mrb[0].mxu0
      %4709 = vmatprep.mubr.bf16.mxu0 0
      %4710 = vmatmul.mubr.bf16.gmra.mrb[0].mxu0 %v3682
      %v4711 = vpop.f32.mrb[0].mxu0
      %v4712 = vadd.f32 0.0, %v4711
      %v4713 = vpop.f32.mrb[0].mxu0
      %v4714 = vpop.f32.mrb[0].mxu0
      %v4715 = vadd.f32 0.0, %v4714
      %v4716 = vpop.f32.mrb[0].mxu0
      %4717 = vmatprep.mubr.bf16.mxu0 0
      %4718 = vmatmul.mubr.bf16.gmra.mrb[0].mxu0 %v3685
      %v4719 = vpop.f32.mrb[0].mxu0
      %v4720 = vadd.f32 0.0, %v4719
      %v4721 = vpop.f32.mrb[0].mxu0
      %v4722 = vpop.f32.mrb[0].mxu0
      %v4723 = vadd.f32 0.0, %v4722
      %v4724 = vpop.f32.mrb[0].mxu0
      %4725 = vmatprep.mubr.bf16.mxu0 0
      %4726 = vmatmul.mubr.bf16.gmra.mrb[0].mxu0 %v3688
      %v4727 = vpop.f32.mrb[0].mxu0
      %v4728 = vadd.f32 0.0, %v4727
      %v4729 = vpop.f32.mrb[0].mxu0
      %v4730 = vpop.f32.mrb[0].mxu0
      %v4731 = vadd.f32 0.0, %v4730
      %v4732 = vpop.f32.mrb[0].mxu0
      %4733 = vmatprep.mubr.bf16.mxu0 0
      %4734 = vmatmul.mubr.bf16.gmra.mrb[0].mxu0 %v3691
      %v4735 = vpop.f32.mrb[0].mxu0
      %v4736 = vadd.f32 0.0, %v4735
      %v4737 = vpop.f32.mrb[0].mxu0
      %v4738 = vpop.f32.mrb[0].mxu0
      %v4739 = vadd.f32 0.0, %v4738
      %v4740 = vpop.f32.mrb[0].mxu0
      %4741 = vmatprep.mubr.bf16.mxu0 0
      %4742 = vmatmul.mubr.bf16.gmra.mrb[0].mxu0 %v4584
      %v4743 = vpop.f32.mrb[0].mxu0
      %v4744 = vadd.f32 0.0, %v4743
      %v4745 = vpop.f32.mrb[0].mxu0
      %v4746 = vpop.f32.mrb[0].mxu0
      %v4747 = vadd.f32 0.0, %v4746
      %v4748 = vpop.f32.mrb[0].mxu0
      %4749 = vdwg.mxu0
      %v4750 = vadd.f32 %v4538, %v4624
      %v4751 = vadd.f32 %v4539, %v4627
      %v4752 = vadd.f32 %v4540, %v4632
      %v4753 = vadd.f32 %v4541, %v4635
      %v4754 = vadd.f32 %v4542, %v4640
      %v4755 = vadd.f32 %v4543, %v4643
      %v4756 = vadd.f32 %v4544, %v4648
      %v4757 = vadd.f32 %v4545, %v4651
      %v4758 = vadd.f32 %v4546, %v4656
      %v4759 = vadd.f32 %v4547, %v4659
      %v4760 = vadd.f32 %v4548, %v4664
      %v4761 = vadd.f32 %v4549, %v4667
      %v4762 = vadd.f32 %v4550, %v4672
      %v4763 = vadd.f32 %v4551, %v4675
      %v4764 = vadd.f32 %v4552, %v4680
      %v4765 = vadd.f32 %v4553, %v4683
      %v4766 = vadd.f32 %v4554, %v4688
      %v4767 = vadd.f32 %v4555, %v4691
      %v4768 = vadd.f32 %v4556, %v4696
      %v4769 = vadd.f32 %v4557, %v4699
      %v4770 = vadd.f32 %v4558, %v4704
      %v4771 = vadd.f32 %v4559, %v4707
      %v4772 = vadd.f32 %v4560, %v4712
      %v4773 = vadd.f32 %v4561, %v4715
      %v4774 = vadd.f32 %v4562, %v4720
      %v4775 = vadd.f32 %v4563, %v4723
      %v4776 = vadd.f32 %v4564, %v4728
      %v4777 = vadd.f32 %v4565, %v4731
      %v4778 = vadd.f32 %v4566, %v4736
      %v4779 = vadd.f32 %v4567, %v4739
      %v4780 = vadd.f32 %v4568, %v4744
      %v4781 = vadd.f32 %v4569, %v4747
      %v4784 = vrot.slane %v3463, 1
      %v4785 = vrot.slane %v3464, 1
      %v4786 = vsel %vm1342, %v4784, %v4785
      %s4787 = scalar_lea.vmem %s3, 20
      %v4788 = vld [vmem:[%s4787] sm:$0xf]
      %v4790 = vsel %vm907, %v4786, 0
      %v4793 = vsel %vm953, %v4788, 0
      %4795 = vmatprep.subr.bf16.mxu0 0
      %4796 = vmatpush1.bf16.msra.mxu0 %v4793
      %4797 = vmatprep.subr.bf16.mxu0 0
      %4798 = vmatpush1.bf16.msra.mxu0 0
      %4799 = vmatprep.subr.bf16.mxu0 0
      %4800 = vmatpush1.bf16.msra.mxu0 0
      %4801 = vmatprep.subr.bf16.mxu0 0
      %4802 = vmatpush1.bf16.msra.mxu0 0
      %4803 = vmatprep.subr.bf16.mxu0 0
      %4804 = vmatpush1.bf16.msra.mxu0 0
      %4805 = vmatprep.subr.bf16.mxu0 0
      %4806 = vmatpush1.bf16.msra.mxu0 0
      %4807 = vmatprep.subr.bf16.mxu0 0
      %4808 = vmatpush1.bf16.msra.mxu0 0
      %4809 = vmatprep.subr.bf16.mxu0 0
      %4810 = vmatpush1.bf16.msra.mxu0 0
      %4811 = vmatprep.subr.bf16.mxu0 0
      %4812 = vmatpush1.bf16.msra.mxu0 0
      %4813 = vmatprep.subr.bf16.mxu0 0
      %4814 = vmatpush1.bf16.msra.mxu0 0
      %4815 = vmatprep.subr.bf16.mxu0 0
      %4816 = vmatpush1.bf16.msra.mxu0 0
      %4817 = vmatprep.subr.bf16.mxu0 0
      %4818 = vmatpush1.bf16.msra.mxu0 0
      %4819 = vmatprep.subr.bf16.mxu0 0
      %4820 = vmatpush1.bf16.msra.mxu0 0
      %4821 = vmatprep.subr.bf16.mxu0 0
      %4822 = vmatpush1.bf16.msra.mxu0 0
      %4823 = vmatprep.subr.bf16.mxu0 0
      %4824 = vmatpush1.bf16.msra.mxu0 0
      %4825 = vmatprep.subr.bf16.mxu0 0
      %4826 = vmatpush1.bf16.msra.mxu0 0
      %4827 = vmatprep.mubr.bf16.mxu0 0
      %4828 = vmatmul.mubr.bf16.gmra.mrb[0].mxu0 %v4132
      %v4829 = vpop.f32.mrb[0].mxu0
      %v4830 = vadd.f32 0.0, %v4829
      %v4831 = vpop.f32.mrb[0].mxu0
      %v4832 = vpop.f32.mrb[0].mxu0
      %v4833 = vadd.f32 0.0, %v4832
      %v4834 = vpop.f32.mrb[0].mxu0
      %4835 = vmatprep.mubr.bf16.mxu0 0
      %4836 = vmatmul.mubr.bf16.gmra.mrb[0].mxu0 %v4129
      %v4837 = vpop.f32.mrb[0].mxu0
      %v4838 = vadd.f32 0.0, %v4837
      %v4839 = vpop.f32.mrb[0].mxu0
      %v4840 = vpop.f32.mrb[0].mxu0
      %v4841 = vadd.f32 0.0, %v4840
      %v4842 = vpop.f32.mrb[0].mxu0
      %4843 = vmatprep.mubr.bf16.mxu0 0
      %4844 = vmatmul.mubr.bf16.gmra.mrb[0].mxu0 %v4135
      %v4845 = vpop.f32.mrb[0].mxu0
      %v4846 = vadd.f32 0.0, %v4845
      %v4847 = vpop.f32.mrb[0].mxu0
      %v4848 = vpop.f32.mrb[0].mxu0
      %v4849 = vadd.f32 0.0, %v4848
      %v4850 = vpop.f32.mrb[0].mxu0
      %4851 = vmatprep.mubr.bf16.mxu0 0
      %4852 = vmatmul.mubr.bf16.gmra.mrb[0].mxu0 %v4138
      %v4853 = vpop.f32.mrb[0].mxu0
      %v4854 = vadd.f32 0.0, %v4853
      %v4855 = vpop.f32.mrb[0].mxu0
      %v4856 = vpop.f32.mrb[0].mxu0
      %v4857 = vadd.f32 0.0, %v4856
      %v4858 = vpop.f32.mrb[0].mxu0
      %4859 = vmatprep.mubr.bf16.mxu0 0
      %4860 = vmatmul.mubr.bf16.gmra.mrb[0].mxu0 %v4141
      %v4861 = vpop.f32.mrb[0].mxu0
      %v4862 = vadd.f32 0.0, %v4861
      %v4863 = vpop.f32.mrb[0].mxu0
      %v4864 = vpop.f32.mrb[0].mxu0
      %v4865 = vadd.f32 0.0, %v4864
      %v4866 = vpop.f32.mrb[0].mxu0
      %4867 = vmatprep.mubr.bf16.mxu0 0
      %4868 = vmatmul.mubr.bf16.gmra.mrb[0].mxu0 %v4144
      %v4869 = vpop.f32.mrb[0].mxu0
      %v4870 = vadd.f32 0.0, %v4869
      %v4871 = vpop.f32.mrb[0].mxu0
      %v4872 = vpop.f32.mrb[0].mxu0
      %v4873 = vadd.f32 0.0, %v4872
      %v4874 = vpop.f32.mrb[0].mxu0
      %4875 = vmatprep.mubr.bf16.mxu0 0
      %4876 = vmatmul.mubr.bf16.gmra.mrb[0].mxu0 %v4147
      %v4877 = vpop.f32.mrb[0].mxu0
      %v4878 = vadd.f32 0.0, %v4877
      %v4879 = vpop.f32.mrb[0].mxu0
      %v4880 = vpop.f32.mrb[0].mxu0
      %v4881 = vadd.f32 0.0, %v4880
      %v4882 = vpop.f32.mrb[0].mxu0
      %4883 = vmatprep.mubr.bf16.mxu0 0
      %4884 = vmatmul.mubr.bf16.gmra.mrb[0].mxu0 %v4150
      %v4885 = vpop.f32.mrb[0].mxu0
      %v4886 = vadd.f32 0.0, %v4885
      %v4887 = vpop.f32.mrb[0].mxu0
      %v4888 = vpop.f32.mrb[0].mxu0
      %v4889 = vadd.f32 0.0, %v4888
      %v4890 = vpop.f32.mrb[0].mxu0
      %4891 = vmatprep.mubr.bf16.mxu0 0
      %4892 = vmatmul.mubr.bf16.gmra.mrb[0].mxu0 %v4153
      %v4893 = vpop.f32.mrb[0].mxu0
      %v4894 = vadd.f32 0.0, %v4893
      %v4895 = vpop.f32.mrb[0].mxu0
      %v4896 = vpop.f32.mrb[0].mxu0
      %v4897 = vadd.f32 0.0, %v4896
      %v4898 = vpop.f32.mrb[0].mxu0
      %4899 = vmatprep.mubr.bf16.mxu0 0
      %4900 = vmatmul.mubr.bf16.gmra.mrb[0].mxu0 %v4156
      %v4901 = vpop.f32.mrb[0].mxu0
      %v4902 = vadd.f32 0.0, %v4901
      %v4903 = vpop.f32.mrb[0].mxu0
      %v4904 = vpop.f32.mrb[0].mxu0
      %v4905 = vadd.f32 0.0, %v4904
      %v4906 = vpop.f32.mrb[0].mxu0
      %4907 = vmatprep.mubr.bf16.mxu0 0
      %4908 = vmatmul.mubr.bf16.gmra.mrb[0].mxu0 %v4159
      %v4909 = vpop.f32.mrb[0].mxu0
      %v4910 = vadd.f32 0.0, %v4909
      %v4911 = vpop.f32.mrb[0].mxu0
      %v4912 = vpop.f32.mrb[0].mxu0
      %v4913 = vadd.f32 0.0, %v4912
      %v4914 = vpop.f32.mrb[0].mxu0
      %4915 = vmatprep.mubr.bf16.mxu0 0
      %4916 = vmatmul.mubr.bf16.gmra.mrb[0].mxu0 %v4162
      %v4917 = vpop.f32.mrb[0].mxu0
      %v4918 = vadd.f32 0.0, %v4917
      %v4919 = vpop.f32.mrb[0].mxu0
      %v4920 = vpop.f32.mrb[0].mxu0
      %v4921 = vadd.f32 0.0, %v4920
      %v4922 = vpop.f32.mrb[0].mxu0
      %4923 = vmatprep.mubr.bf16.mxu0 0
      %4924 = vmatmul.mubr.bf16.gmra.mrb[0].mxu0 %v4165
      %v4925 = vpop.f32.mrb[0].mxu0
      %v4926 = vadd.f32 0.0, %v4925
      %v4927 = vpop.f32.mrb[0].mxu0
      %v4928 = vpop.f32.mrb[0].mxu0
      %v4929 = vadd.f32 0.0, %v4928
      %v4930 = vpop.f32.mrb[0].mxu0
      %4931 = vmatprep.mubr.bf16.mxu0 0
      %4932 = vmatmul.mubr.bf16.gmra.mrb[0].mxu0 %v4168
      %v4933 = vpop.f32.mrb[0].mxu0
      %v4934 = vadd.f32 0.0, %v4933
      %v4935 = vpop.f32.mrb[0].mxu0
      %v4936 = vpop.f32.mrb[0].mxu0
      %v4937 = vadd.f32 0.0, %v4936
      %v4938 = vpop.f32.mrb[0].mxu0
      %4939 = vmatprep.mubr.bf16.mxu0 0
      %4940 = vmatmul.mubr.bf16.gmra.mrb[0].mxu0 %v4171
      %v4941 = vpop.f32.mrb[0].mxu0
      %v4942 = vadd.f32 0.0, %v4941
      %v4943 = vpop.f32.mrb[0].mxu0
      %v4944 = vpop.f32.mrb[0].mxu0
      %v4945 = vadd.f32 0.0, %v4944
      %v4946 = vpop.f32.mrb[0].mxu0
      %4947 = vmatprep.mubr.bf16.mxu0 0
      %4948 = vmatmul.mubr.bf16.gmra.mrb[0].mxu0 %v4790
      %v4949 = vpop.f32.mrb[0].mxu0
      %v4950 = vadd.f32 0.0, %v4949
      %v4951 = vpop.f32.mrb[0].mxu0
      %v4952 = vpop.f32.mrb[0].mxu0
      %v4953 = vadd.f32 0.0, %v4952
      %v4954 = vpop.f32.mrb[0].mxu0
      %4955 = vdwg.mxu0
      %v4956 = vadd.f32 %v4750, %v4830
      %v4957 = vadd.f32 %v4751, %v4833
      %v4958 = vadd.f32 %v4752, %v4838
      %v4959 = vadd.f32 %v4753, %v4841
      %v4960 = vadd.f32 %v4754, %v4846
      %v4961 = vadd.f32 %v4755, %v4849
      %v4962 = vadd.f32 %v4756, %v4854
      %v4963 = vadd.f32 %v4757, %v4857
      %v4964 = vadd.f32 %v4758, %v4862
      %v4965 = vadd.f32 %v4759, %v4865
      %v4966 = vadd.f32 %v4760, %v4870
      %v4967 = vadd.f32 %v4761, %v4873
      %v4968 = vadd.f32 %v4762, %v4878
      %v4969 = vadd.f32 %v4763, %v4881
      %v4970 = vadd.f32 %v4764, %v4886
      %v4971 = vadd.f32 %v4765, %v4889
      %v4972 = vadd.f32 %v4766, %v4894
      %v4973 = vadd.f32 %v4767, %v4897
      %v4974 = vadd.f32 %v4768, %v4902
      %v4975 = vadd.f32 %v4769, %v4905
      %v4976 = vadd.f32 %v4770, %v4910
      %v4977 = vadd.f32 %v4771, %v4913
      %v4978 = vadd.f32 %v4772, %v4918
      %v4979 = vadd.f32 %v4773, %v4921
      %v4980 = vadd.f32 %v4774, %v4926
      %v4981 = vadd.f32 %v4775, %v4929
      %v4982 = vadd.f32 %v4776, %v4934
      %v4983 = vadd.f32 %v4777, %v4937
      %v4984 = vadd.f32 %v4778, %v4942
      %v4985 = vadd.f32 %v4779, %v4945
      %v4986 = vadd.f32 %v4780, %v4950
      %v4987 = vadd.f32 %v4781, %v4953
      %s4988 = scalar_lea.vmem %s3, 24
      %v4989 = vld [vmem:[%s4988] sm:$0xf]
      %v4991 = vsel %vm953, %v4989, 0
      %4993 = vmatprep.subr.bf16.mxu0 0
      %4994 = vmatpush1.bf16.msra.mxu0 %v4991
      %4995 = vmatprep.subr.bf16.mxu0 0
      %4996 = vmatpush1.bf16.msra.mxu0 0
      %4997 = vmatprep.subr.bf16.mxu0 0
      %4998 = vmatpush1.bf16.msra.mxu0 0
      %4999 = vmatprep.subr.bf16.mxu0 0
      %5000 = vmatpush1.bf16.msra.mxu0 0
      %5001 = vmatprep.subr.bf16.mxu0 0
      %5002 = vmatpush1.bf16.msra.mxu0 0
      %5003 = vmatprep.subr.bf16.mxu0 0
      %5004 = vmatpush1.bf16.msra.mxu0 0
      %5005 = vmatprep.subr.bf16.mxu0 0
      %5006 = vmatpush1.bf16.msra.mxu0 0
      %5007 = vmatprep.subr.bf16.mxu0 0
      %5008 = vmatpush1.bf16.msra.mxu0 0
      %5009 = vmatprep.subr.bf16.mxu0 0
      %5010 = vmatpush1.bf16.msra.mxu0 0
      %5011 = vmatprep.subr.bf16.mxu0 0
      %5012 = vmatpush1.bf16.msra.mxu0 0
      %5013 = vmatprep.subr.bf16.mxu0 0
      %5014 = vmatpush1.bf16.msra.mxu0 0
      %5015 = vmatprep.subr.bf16.mxu0 0
      %5016 = vmatpush1.bf16.msra.mxu0 0
      %5017 = vmatprep.subr.bf16.mxu0 0
      %5018 = vmatpush1.bf16.msra.mxu0 0
      %5019 = vmatprep.subr.bf16.mxu0 0
      %5020 = vmatpush1.bf16.msra.mxu0 0
      %5021 = vmatprep.subr.bf16.mxu0 0
      %5022 = vmatpush1.bf16.msra.mxu0 0
      %5023 = vmatprep.subr.bf16.mxu0 0
      %5024 = vmatpush1.bf16.msra.mxu0 0
      %5025 = vmatprep.mubr.bf16.mxu0 0
      %5026 = vmatmul.mubr.bf16.gmra.mrb[0].mxu0 %v3857
      %v5027 = vpop.f32.mrb[0].mxu0
      %v5028 = vadd.f32 0.0, %v5027
      %v5029 = vpop.f32.mrb[0].mxu0
      %v5030 = vpop.f32.mrb[0].mxu0
      %v5031 = vadd.f32 0.0, %v5030
      %v5032 = vpop.f32.mrb[0].mxu0
      %5033 = vmatprep.mubr.bf16.mxu0 0
      %5034 = vmatmul.mubr.bf16.gmra.mrb[0].mxu0 %v3861
      %v5035 = vpop.f32.mrb[0].mxu0
      %v5036 = vadd.f32 0.0, %v5035
      %v5037 = vpop.f32.mrb[0].mxu0
      %v5038 = vpop.f32.mrb[0].mxu0
      %v5039 = vadd.f32 0.0, %v5038
      %v5040 = vpop.f32.mrb[0].mxu0
      %5041 = vmatprep.mubr.bf16.mxu0 0
      %5042 = vmatmul.mubr.bf16.gmra.mrb[0].mxu0 %v3863
      %v5043 = vpop.f32.mrb[0].mxu0
      %v5044 = vadd.f32 0.0, %v5043
      %v5045 = vpop.f32.mrb[0].mxu0
      %v5046 = vpop.f32.mrb[0].mxu0
      %v5047 = vadd.f32 0.0, %v5046
      %v5048 = vpop.f32.mrb[0].mxu0
      %5049 = vmatprep.mubr.bf16.mxu0 0
      %5050 = vmatmul.mubr.bf16.gmra.mrb[0].mxu0 %v3865
      %v5051 = vpop.f32.mrb[0].mxu0
      %v5052 = vadd.f32 0.0, %v5051
      %v5053 = vpop.f32.mrb[0].mxu0
      %v5054 = vpop.f32.mrb[0].mxu0
      %v5055 = vadd.f32 0.0, %v5054
      %v5056 = vpop.f32.mrb[0].mxu0
      %5057 = vmatprep.mubr.bf16.mxu0 0
      %5058 = vmatmul.mubr.bf16.gmra.mrb[0].mxu0 %v3867
      %v5059 = vpop.f32.mrb[0].mxu0
      %v5060 = vadd.f32 0.0, %v5059
      %v5061 = vpop.f32.mrb[0].mxu0
      %v5062 = vpop.f32.mrb[0].mxu0
      %v5063 = vadd.f32 0.0, %v5062
      %v5064 = vpop.f32.mrb[0].mxu0
      %5065 = vmatprep.mubr.bf16.mxu0 0
      %5066 = vmatmul.mubr.bf16.gmra.mrb[0].mxu0 %v3869
      %v5067 = vpop.f32.mrb[0].mxu0
      %v5068 = vadd.f32 0.0, %v5067
      %v5069 = vpop.f32.mrb[0].mxu0
      %v5070 = vpop.f32.mrb[0].mxu0
      %v5071 = vadd.f32 0.0, %v5070
      %v5072 = vpop.f32.mrb[0].mxu0
      %5073 = vmatprep.mubr.bf16.mxu0 0
      %5074 = vmatmul.mubr.bf16.gmra.mrb[0].mxu0 %v3871
      %v5075 = vpop.f32.mrb[0].mxu0
      %v5076 = vadd.f32 0.0, %v5075
      %v5077 = vpop.f32.mrb[0].mxu0
      %v5078 = vpop.f32.mrb[0].mxu0
      %v5079 = vadd.f32 0.0, %v5078
      %v5080 = vpop.f32.mrb[0].mxu0
      %5081 = vmatprep.mubr.bf16.mxu0 0
      %5082 = vmatmul.mubr.bf16.gmra.mrb[0].mxu0 %v3873
      %v5083 = vpop.f32.mrb[0].mxu0
      %v5084 = vadd.f32 0.0, %v5083
      %v5085 = vpop.f32.mrb[0].mxu0
      %v5086 = vpop.f32.mrb[0].mxu0
      %v5087 = vadd.f32 0.0, %v5086
      %v5088 = vpop.f32.mrb[0].mxu0
      %5089 = vmatprep.mubr.bf16.mxu0 0
      %5090 = vmatmul.mubr.bf16.gmra.mrb[0].mxu0 %v3875
      %v5091 = vpop.f32.mrb[0].mxu0
      %v5092 = vadd.f32 0.0, %v5091
      %v5093 = vpop.f32.mrb[0].mxu0
      %v5094 = vpop.f32.mrb[0].mxu0
      %v5095 = vadd.f32 0.0, %v5094
      %v5096 = vpop.f32.mrb[0].mxu0
      %5097 = vmatprep.mubr.bf16.mxu0 0
      %5098 = vmatmul.mubr.bf16.gmra.mrb[0].mxu0 %v3877
      %v5099 = vpop.f32.mrb[0].mxu0
      %v5100 = vadd.f32 0.0, %v5099
      %v5101 = vpop.f32.mrb[0].mxu0
      %v5102 = vpop.f32.mrb[0].mxu0
      %v5103 = vadd.f32 0.0, %v5102
      %v5104 = vpop.f32.mrb[0].mxu0
      %5105 = vmatprep.mubr.bf16.mxu0 0
      %5106 = vmatmul.mubr.bf16.gmra.mrb[0].mxu0 %v3879
      %v5107 = vpop.f32.mrb[0].mxu0
      %v5108 = vadd.f32 0.0, %v5107
      %v5109 = vpop.f32.mrb[0].mxu0
      %v5110 = vpop.f32.mrb[0].mxu0
      %v5111 = vadd.f32 0.0, %v5110
      %v5112 = vpop.f32.mrb[0].mxu0
      %5113 = vmatprep.mubr.bf16.mxu0 0
      %5114 = vmatmul.mubr.bf16.gmra.mrb[0].mxu0 %v3881
      %v5115 = vpop.f32.mrb[0].mxu0
      %v5116 = vadd.f32 0.0, %v5115
      %v5117 = vpop.f32.mrb[0].mxu0
      %v5118 = vpop.f32.mrb[0].mxu0
      %v5119 = vadd.f32 0.0, %v5118
      %v5120 = vpop.f32.mrb[0].mxu0
      %5121 = vmatprep.mubr.bf16.mxu0 0
      %5122 = vmatmul.mubr.bf16.gmra.mrb[0].mxu0 %v3883
      %v5123 = vpop.f32.mrb[0].mxu0
      %v5124 = vadd.f32 0.0, %v5123
      %v5125 = vpop.f32.mrb[0].mxu0
      %v5126 = vpop.f32.mrb[0].mxu0
      %v5127 = vadd.f32 0.0, %v5126
      %v5128 = vpop.f32.mrb[0].mxu0
      %5129 = vmatprep.mubr.bf16.mxu0 0
      %5130 = vmatmul.mubr.bf16.gmra.mrb[0].mxu0 %v3885
      %v5131 = vpop.f32.mrb[0].mxu0
      %v5132 = vadd.f32 0.0, %v5131
      %v5133 = vpop.f32.mrb[0].mxu0
      %v5134 = vpop.f32.mrb[0].mxu0
      %v5135 = vadd.f32 0.0, %v5134
      %v5136 = vpop.f32.mrb[0].mxu0
      %5137 = vmatprep.mubr.bf16.mxu0 0
      %5138 = vmatmul.mubr.bf16.gmra.mrb[0].mxu0 %v4372
      %v5139 = vpop.f32.mrb[0].mxu0
      %v5140 = vadd.f32 0.0, %v5139
      %v5141 = vpop.f32.mrb[0].mxu0
      %v5142 = vpop.f32.mrb[0].mxu0
      %v5143 = vadd.f32 0.0, %v5142
      %v5144 = vpop.f32.mrb[0].mxu0
      %5145 = vmatprep.mubr.bf16.mxu0 0
      %5146 = vmatmul.mubr.bf16.gmra.mrb[0].mxu0 %v3885
      %v5147 = vpop.f32.mrb[0].mxu0
      %v5148 = vadd.f32 0.0, %v5147
      %v5149 = vpop.f32.mrb[0].mxu0
      %v5150 = vpop.f32.mrb[0].mxu0
      %v5151 = vadd.f32 0.0, %v5150
      %v5152 = vpop.f32.mrb[0].mxu0
      %5153 = vdwg.mxu0
      %v5154 = vadd.f32 %v4956, %v5028
      %v5155 = vadd.f32 %v4957, %v5031
      %v5156 = vadd.f32 %v4958, %v5036
      %v5157 = vadd.f32 %v4959, %v5039
      %v5158 = vadd.f32 %v4960, %v5044
      %v5159 = vadd.f32 %v4961, %v5047
      %v5160 = vadd.f32 %v4962, %v5052
      %v5161 = vadd.f32 %v4963, %v5055
      %v5162 = vadd.f32 %v4964, %v5060
      %v5163 = vadd.f32 %v4965, %v5063
      %v5164 = vadd.f32 %v4966, %v5068
      %v5165 = vadd.f32 %v4967, %v5071
      %v5166 = vadd.f32 %v4968, %v5076
      %v5167 = vadd.f32 %v4969, %v5079
      %v5168 = vadd.f32 %v4970, %v5084
      %v5169 = vadd.f32 %v4971, %v5087
      %v5170 = vadd.f32 %v4972, %v5092
      %v5171 = vadd.f32 %v4973, %v5095
      %v5172 = vadd.f32 %v4974, %v5100
      %v5173 = vadd.f32 %v4975, %v5103
      %v5174 = vadd.f32 %v4976, %v5108
      %v5175 = vadd.f32 %v4977, %v5111
      %v5176 = vadd.f32 %v4978, %v5116
      %v5177 = vadd.f32 %v4979, %v5119
      %v5178 = vadd.f32 %v4980, %v5124
      %v5179 = vadd.f32 %v4981, %v5127
      %v5180 = vadd.f32 %v4982, %v5132
      %v5181 = vadd.f32 %v4983, %v5135
      %v5182 = vadd.f32 %v4984, %v5140
      %v5183 = vadd.f32 %v4985, %v5143
      %v5184 = vadd.f32 %v4986, %v5148
      %v5185 = vadd.f32 %v4987, %v5151
      %s5186 = scalar_lea.vmem %s3, 28
      %v5187 = vld [vmem:[%s5186] sm:$0xf]
      %v5189 = vsel %vm953, %v5187, 0
      %5191 = vmatprep.subr.bf16.mxu0 0
      %5192 = vmatpush1.bf16.msra.mxu0 %v5189
      %5193 = vmatprep.subr.bf16.mxu0 0
      %5194 = vmatpush1.bf16.msra.mxu0 0
      %5195 = vmatprep.subr.bf16.mxu0 0
      %5196 = vmatpush1.bf16.msra.mxu0 0
      %5197 = vmatprep.subr.bf16.mxu0 0
      %5198 = vmatpush1.bf16.msra.mxu0 0
      %5199 = vmatprep.subr.bf16.mxu0 0
      %5200 = vmatpush1.bf16.msra.mxu0 0
      %5201 = vmatprep.subr.bf16.mxu0 0
      %5202 = vmatpush1.bf16.msra.mxu0 0
      %5203 = vmatprep.subr.bf16.mxu0 0
      %5204 = vmatpush1.bf16.msra.mxu0 0
      %5205 = vmatprep.subr.bf16.mxu0 0
      %5206 = vmatpush1.bf16.msra.mxu0 0
      %5207 = vmatprep.subr.bf16.mxu0 0
      %5208 = vmatpush1.bf16.msra.mxu0 0
      %5209 = vmatprep.subr.bf16.mxu0 0
      %5210 = vmatpush1.bf16.msra.mxu0 0
      %5211 = vmatprep.subr.bf16.mxu0 0
      %5212 = vmatpush1.bf16.msra.mxu0 0
      %5213 = vmatprep.subr.bf16.mxu0 0
      %5214 = vmatpush1.bf16.msra.mxu0 0
      %5215 = vmatprep.subr.bf16.mxu0 0
      %5216 = vmatpush1.bf16.msra.mxu0 0
      %5217 = vmatprep.subr.bf16.mxu0 0
      %5218 = vmatpush1.bf16.msra.mxu0 0
      %5219 = vmatprep.subr.bf16.mxu0 0
      %5220 = vmatpush1.bf16.msra.mxu0 0
      %5221 = vmatprep.subr.bf16.mxu0 0
      %5222 = vmatpush1.bf16.msra.mxu0 0
      %5223 = vmatprep.mubr.bf16.mxu0 0
      %5224 = vmatmul.mubr.bf16.gmra.mrb[0].mxu0 %v3649
      %v5225 = vpop.f32.mrb[0].mxu0
      %v5226 = vadd.f32 0.0, %v5225
      %v5227 = vpop.f32.mrb[0].mxu0
      %v5228 = vpop.f32.mrb[0].mxu0
      %v5229 = vadd.f32 0.0, %v5228
      %v5230 = vpop.f32.mrb[0].mxu0
      %5231 = vmatprep.mubr.bf16.mxu0 0
      %5232 = vmatmul.mubr.bf16.gmra.mrb[0].mxu0 %v3655
      %v5233 = vpop.f32.mrb[0].mxu0
      %v5234 = vadd.f32 0.0, %v5233
      %v5235 = vpop.f32.mrb[0].mxu0
      %v5236 = vpop.f32.mrb[0].mxu0
      %v5237 = vadd.f32 0.0, %v5236
      %v5238 = vpop.f32.mrb[0].mxu0
      %5239 = vmatprep.mubr.bf16.mxu0 0
      %5240 = vmatmul.mubr.bf16.gmra.mrb[0].mxu0 %v3658
      %v5241 = vpop.f32.mrb[0].mxu0
      %v5242 = vadd.f32 0.0, %v5241
      %v5243 = vpop.f32.mrb[0].mxu0
      %v5244 = vpop.f32.mrb[0].mxu0
      %v5245 = vadd.f32 0.0, %v5244
      %v5246 = vpop.f32.mrb[0].mxu0
      %5247 = vmatprep.mubr.bf16.mxu0 0
      %5248 = vmatmul.mubr.bf16.gmra.mrb[0].mxu0 %v3661
      %v5249 = vpop.f32.mrb[0].mxu0
      %v5250 = vadd.f32 0.0, %v5249
      %v5251 = vpop.f32.mrb[0].mxu0
      %v5252 = vpop.f32.mrb[0].mxu0
      %v5253 = vadd.f32 0.0, %v5252
      %v5254 = vpop.f32.mrb[0].mxu0
      %5255 = vmatprep.mubr.bf16.mxu0 0
      %5256 = vmatmul.mubr.bf16.gmra.mrb[0].mxu0 %v3664
      %v5257 = vpop.f32.mrb[0].mxu0
      %v5258 = vadd.f32 0.0, %v5257
      %v5259 = vpop.f32.mrb[0].mxu0
      %v5260 = vpop.f32.mrb[0].mxu0
      %v5261 = vadd.f32 0.0, %v5260
      %v5262 = vpop.f32.mrb[0].mxu0
      %5263 = vmatprep.mubr.bf16.mxu0 0
      %5264 = vmatmul.mubr.bf16.gmra.mrb[0].mxu0 %v3667
      %v5265 = vpop.f32.mrb[0].mxu0
      %v5266 = vadd.f32 0.0, %v5265
      %v5267 = vpop.f32.mrb[0].mxu0
      %v5268 = vpop.f32.mrb[0].mxu0
      %v5269 = vadd.f32 0.0, %v5268
      %v5270 = vpop.f32.mrb[0].mxu0
      %5271 = vmatprep.mubr.bf16.mxu0 0
      %5272 = vmatmul.mubr.bf16.gmra.mrb[0].mxu0 %v3670
      %v5273 = vpop.f32.mrb[0].mxu0
      %v5274 = vadd.f32 0.0, %v5273
      %v5275 = vpop.f32.mrb[0].mxu0
      %v5276 = vpop.f32.mrb[0].mxu0
      %v5277 = vadd.f32 0.0, %v5276
      %v5278 = vpop.f32.mrb[0].mxu0
      %5279 = vmatprep.mubr.bf16.mxu0 0
      %5280 = vmatmul.mubr.bf16.gmra.mrb[0].mxu0 %v3673
      %v5281 = vpop.f32.mrb[0].mxu0
      %v5282 = vadd.f32 0.0, %v5281
      %v5283 = vpop.f32.mrb[0].mxu0
      %v5284 = vpop.f32.mrb[0].mxu0
      %v5285 = vadd.f32 0.0, %v5284
      %v5286 = vpop.f32.mrb[0].mxu0
      %5287 = vmatprep.mubr.bf16.mxu0 0
      %5288 = vmatmul.mubr.bf16.gmra.mrb[0].mxu0 %v3676
      %v5289 = vpop.f32.mrb[0].mxu0
      %v5290 = vadd.f32 0.0, %v5289
      %v5291 = vpop.f32.mrb[0].mxu0
      %v5292 = vpop.f32.mrb[0].mxu0
      %v5293 = vadd.f32 0.0, %v5292
      %v5294 = vpop.f32.mrb[0].mxu0
      %5295 = vmatprep.mubr.bf16.mxu0 0
      %5296 = vmatmul.mubr.bf16.gmra.mrb[0].mxu0 %v3679
      %v5297 = vpop.f32.mrb[0].mxu0
      %v5298 = vadd.f32 0.0, %v5297
      %v5299 = vpop.f32.mrb[0].mxu0
      %v5300 = vpop.f32.mrb[0].mxu0
      %v5301 = vadd.f32 0.0, %v5300
      %v5302 = vpop.f32.mrb[0].mxu0
      %5303 = vmatprep.mubr.bf16.mxu0 0
      %5304 = vmatmul.mubr.bf16.gmra.mrb[0].mxu0 %v3682
      %v5305 = vpop.f32.mrb[0].mxu0
      %v5306 = vadd.f32 0.0, %v5305
      %v5307 = vpop.f32.mrb[0].mxu0
      %v5308 = vpop.f32.mrb[0].mxu0
      %v5309 = vadd.f32 0.0, %v5308
      %v5310 = vpop.f32.mrb[0].mxu0
      %5311 = vmatprep.mubr.bf16.mxu0 0
      %5312 = vmatmul.mubr.bf16.gmra.mrb[0].mxu0 %v3685
      %v5313 = vpop.f32.mrb[0].mxu0
      %v5314 = vadd.f32 0.0, %v5313
      %v5315 = vpop.f32.mrb[0].mxu0
      %v5316 = vpop.f32.mrb[0].mxu0
      %v5317 = vadd.f32 0.0, %v5316
      %v5318 = vpop.f32.mrb[0].mxu0
      %5319 = vmatprep.mubr.bf16.mxu0 0
      %5320 = vmatmul.mubr.bf16.gmra.mrb[0].mxu0 %v3688
      %v5321 = vpop.f32.mrb[0].mxu0
      %v5322 = vadd.f32 0.0, %v5321
      %v5323 = vpop.f32.mrb[0].mxu0
      %v5324 = vpop.f32.mrb[0].mxu0
      %v5325 = vadd.f32 0.0, %v5324
      %v5326 = vpop.f32.mrb[0].mxu0
      %5327 = vmatprep.mubr.bf16.mxu0 0
      %5328 = vmatmul.mubr.bf16.gmra.mrb[0].mxu0 %v3691
      %v5329 = vpop.f32.mrb[0].mxu0
      %v5330 = vadd.f32 0.0, %v5329
      %v5331 = vpop.f32.mrb[0].mxu0
      %v5332 = vpop.f32.mrb[0].mxu0
      %v5333 = vadd.f32 0.0, %v5332
      %v5334 = vpop.f32.mrb[0].mxu0
      %5335 = vmatprep.mubr.bf16.mxu0 0
      %5336 = vmatmul.mubr.bf16.gmra.mrb[0].mxu0 %v4584
      %v5337 = vpop.f32.mrb[0].mxu0
      %v5338 = vadd.f32 0.0, %v5337
      %v5339 = vpop.f32.mrb[0].mxu0
      %v5340 = vpop.f32.mrb[0].mxu0
      %v5341 = vadd.f32 0.0, %v5340
      %v5342 = vpop.f32.mrb[0].mxu0
      %5343 = vmatprep.mubr.bf16.mxu0 0
      %5344 = vmatmul.mubr.bf16.gmra.mrb[0].mxu0 %v3691
      %v5345 = vpop.f32.mrb[0].mxu0
      %v5346 = vadd.f32 0.0, %v5345
      %v5347 = vpop.f32.mrb[0].mxu0
      %v5348 = vpop.f32.mrb[0].mxu0
      %v5349 = vadd.f32 0.0, %v5348
      %v5350 = vpop.f32.mrb[0].mxu0
      %5351 = vdwg.mxu0
      %v5352 = vadd.f32 %v5154, %v5226
      %v5353 = vadd.f32 %v5155, %v5229
      %v5354 = vadd.f32 %v5156, %v5234
      %v5355 = vadd.f32 %v5157, %v5237
      %v5356 = vadd.f32 %v5158, %v5242
      %v5357 = vadd.f32 %v5159, %v5245
      %v5358 = vadd.f32 %v5160, %v5250
      %v5359 = vadd.f32 %v5161, %v5253
      %v5360 = vadd.f32 %v5162, %v5258
      %v5361 = vadd.f32 %v5163, %v5261
      %v5362 = vadd.f32 %v5164, %v5266
      %v5363 = vadd.f32 %v5165, %v5269
      %v5364 = vadd.f32 %v5166, %v5274
      %v5365 = vadd.f32 %v5167, %v5277
      %v5366 = vadd.f32 %v5168, %v5282
      %v5367 = vadd.f32 %v5169, %v5285
      %v5368 = vadd.f32 %v5170, %v5290
      %v5369 = vadd.f32 %v5171, %v5293
      %v5370 = vadd.f32 %v5172, %v5298
      %v5371 = vadd.f32 %v5173, %v5301
      %v5372 = vadd.f32 %v5174, %v5306
      %v5373 = vadd.f32 %v5175, %v5309
      %v5374 = vadd.f32 %v5176, %v5314
      %v5375 = vadd.f32 %v5177, %v5317
      %v5376 = vadd.f32 %v5178, %v5322
      %v5377 = vadd.f32 %v5179, %v5325
      %v5378 = vadd.f32 %v5180, %v5330
      %v5379 = vadd.f32 %v5181, %v5333
      %v5380 = vadd.f32 %v5182, %v5338
      %v5381 = vadd.f32 %v5183, %v5341
      %v5382 = vadd.f32 %v5184, %v5346
      %v5383 = vadd.f32 %v5185, %v5349
      %s5384 = scalar_lea.vmem %s3, 32
      %v5385 = vld [vmem:[%s5384] sm:$0xf]
      %v5387 = vsel %vm953, %v5385, 0
      %5389 = vmatprep.subr.bf16.mxu0 0
      %5390 = vmatpush1.bf16.msra.mxu0 %v5387
      %5391 = vmatprep.subr.bf16.mxu0 0
      %5392 = vmatpush1.bf16.msra.mxu0 0
      %5393 = vmatprep.subr.bf16.mxu0 0
      %5394 = vmatpush1.bf16.msra.mxu0 0
      %5395 = vmatprep.subr.bf16.mxu0 0
      %5396 = vmatpush1.bf16.msra.mxu0 0
      %5397 = vmatprep.subr.bf16.mxu0 0
      %5398 = vmatpush1.bf16.msra.mxu0 0
      %5399 = vmatprep.subr.bf16.mxu0 0
      %5400 = vmatpush1.bf16.msra.mxu0 0
      %5401 = vmatprep.subr.bf16.mxu0 0
      %5402 = vmatpush1.bf16.msra.mxu0 0
      %5403 = vmatprep.subr.bf16.mxu0 0
      %5404 = vmatpush1.bf16.msra.mxu0 0
      %5405 = vmatprep.subr.bf16.mxu0 0
      %5406 = vmatpush1.bf16.msra.mxu0 0
      %5407 = vmatprep.subr.bf16.mxu0 0
      %5408 = vmatpush1.bf16.msra.mxu0 0
      %5409 = vmatprep.subr.bf16.mxu0 0
      %5410 = vmatpush1.bf16.msra.mxu0 0
      %5411 = vmatprep.subr.bf16.mxu0 0
      %5412 = vmatpush1.bf16.msra.mxu0 0
      %5413 = vmatprep.subr.bf16.mxu0 0
      %5414 = vmatpush1.bf16.msra.mxu0 0
      %5415 = vmatprep.subr.bf16.mxu0 0
      %5416 = vmatpush1.bf16.msra.mxu0 0
      %5417 = vmatprep.subr.bf16.mxu0 0
      %5418 = vmatpush1.bf16.msra.mxu0 0
      %5419 = vmatprep.subr.bf16.mxu0 0
      %5420 = vmatpush1.bf16.msra.mxu0 0
      %5421 = vmatprep.mubr.bf16.mxu0 0
      %5422 = vmatmul.mubr.bf16.gmra.mrb[0].mxu0 %v4129
      %v5423 = vpop.f32.mrb[0].mxu0
      %v5424 = vadd.f32 0.0, %v5423
      %v5425 = vpop.f32.mrb[0].mxu0
      %v5426 = vpop.f32.mrb[0].mxu0
      %v5427 = vadd.f32 0.0, %v5426
      %v5428 = vpop.f32.mrb[0].mxu0
      %5429 = vmatprep.mubr.bf16.mxu0 0
      %5430 = vmatmul.mubr.bf16.gmra.mrb[0].mxu0 %v4135
      %v5431 = vpop.f32.mrb[0].mxu0
      %v5432 = vadd.f32 0.0, %v5431
      %v5433 = vpop.f32.mrb[0].mxu0
      %v5434 = vpop.f32.mrb[0].mxu0
      %v5435 = vadd.f32 0.0, %v5434
      %v5436 = vpop.f32.mrb[0].mxu0
      %5437 = vmatprep.mubr.bf16.mxu0 0
      %5438 = vmatmul.mubr.bf16.gmra.mrb[0].mxu0 %v4138
      %v5439 = vpop.f32.mrb[0].mxu0
      %v5440 = vadd.f32 0.0, %v5439
      %v5441 = vpop.f32.mrb[0].mxu0
      %v5442 = vpop.f32.mrb[0].mxu0
      %v5443 = vadd.f32 0.0, %v5442
      %v5444 = vpop.f32.mrb[0].mxu0
      %5445 = vmatprep.mubr.bf16.mxu0 0
      %5446 = vmatmul.mubr.bf16.gmra.mrb[0].mxu0 %v4141
      %v5447 = vpop.f32.mrb[0].mxu0
      %v5448 = vadd.f32 0.0, %v5447
      %v5449 = vpop.f32.mrb[0].mxu0
      %v5450 = vpop.f32.mrb[0].mxu0
      %v5451 = vadd.f32 0.0, %v5450
      %v5452 = vpop.f32.mrb[0].mxu0
      %5453 = vmatprep.mubr.bf16.mxu0 0
      %5454 = vmatmul.mubr.bf16.gmra.mrb[0].mxu0 %v4144
      %v5455 = vpop.f32.mrb[0].mxu0
      %v5456 = vadd.f32 0.0, %v5455
      %v5457 = vpop.f32.mrb[0].mxu0
      %v5458 = vpop.f32.mrb[0].mxu0
      %v5459 = vadd.f32 0.0, %v5458
      %v5460 = vpop.f32.mrb[0].mxu0
      %5461 = vmatprep.mubr.bf16.mxu0 0
      %5462 = vmatmul.mubr.bf16.gmra.mrb[0].mxu0 %v4147
      %v5463 = vpop.f32.mrb[0].mxu0
      %v5464 = vadd.f32 0.0, %v5463
      %v5465 = vpop.f32.mrb[0].mxu0
      %v5466 = vpop.f32.mrb[0].mxu0
      %v5467 = vadd.f32 0.0, %v5466
      %v5468 = vpop.f32.mrb[0].mxu0
      %5469 = vmatprep.mubr.bf16.mxu0 0
      %5470 = vmatmul.mubr.bf16.gmra.mrb[0].mxu0 %v4150
      %v5471 = vpop.f32.mrb[0].mxu0
      %v5472 = vadd.f32 0.0, %v5471
      %v5473 = vpop.f32.mrb[0].mxu0
      %v5474 = vpop.f32.mrb[0].mxu0
      %v5475 = vadd.f32 0.0, %v5474
      %v5476 = vpop.f32.mrb[0].mxu0
      %5477 = vmatprep.mubr.bf16.mxu0 0
      %5478 = vmatmul.mubr.bf16.gmra.mrb[0].mxu0 %v4153
      %v5479 = vpop.f32.mrb[0].mxu0
      %v5480 = vadd.f32 0.0, %v5479
      %v5481 = vpop.f32.mrb[0].mxu0
      %v5482 = vpop.f32.mrb[0].mxu0
      %v5483 = vadd.f32 0.0, %v5482
      %v5484 = vpop.f32.mrb[0].mxu0
      %5485 = vmatprep.mubr.bf16.mxu0 0
      %5486 = vmatmul.mubr.bf16.gmra.mrb[0].mxu0 %v4156
      %v5487 = vpop.f32.mrb[0].mxu0
      %v5488 = vadd.f32 0.0, %v5487
      %v5489 = vpop.f32.mrb[0].mxu0
      %v5490 = vpop.f32.mrb[0].mxu0
      %v5491 = vadd.f32 0.0, %v5490
      %v5492 = vpop.f32.mrb[0].mxu0
      %5493 = vmatprep.mubr.bf16.mxu0 0
      %5494 = vmatmul.mubr.bf16.gmra.mrb[0].mxu0 %v4159
      %v5495 = vpop.f32.mrb[0].mxu0
      %v5496 = vadd.f32 0.0, %v5495
      %v5497 = vpop.f32.mrb[0].mxu0
      %v5498 = vpop.f32.mrb[0].mxu0
      %v5499 = vadd.f32 0.0, %v5498
      %v5500 = vpop.f32.mrb[0].mxu0
      %5501 = vmatprep.mubr.bf16.mxu0 0
      %5502 = vmatmul.mubr.bf16.gmra.mrb[0].mxu0 %v4162
      %v5503 = vpop.f32.mrb[0].mxu0
      %v5504 = vadd.f32 0.0, %v5503
      %v5505 = vpop.f32.mrb[0].mxu0
      %v5506 = vpop.f32.mrb[0].mxu0
      %v5507 = vadd.f32 0.0, %v5506
      %v5508 = vpop.f32.mrb[0].mxu0
      %5509 = vmatprep.mubr.bf16.mxu0 0
      %5510 = vmatmul.mubr.bf16.gmra.mrb[0].mxu0 %v4165
      %v5511 = vpop.f32.mrb[0].mxu0
      %v5512 = vadd.f32 0.0, %v5511
      %v5513 = vpop.f32.mrb[0].mxu0
      %v5514 = vpop.f32.mrb[0].mxu0
      %v5515 = vadd.f32 0.0, %v5514
      %v5516 = vpop.f32.mrb[0].mxu0
      %5517 = vmatprep.mubr.bf16.mxu0 0
      %5518 = vmatmul.mubr.bf16.gmra.mrb[0].mxu0 %v4168
      %v5519 = vpop.f32.mrb[0].mxu0
      %v5520 = vadd.f32 0.0, %v5519
      %v5521 = vpop.f32.mrb[0].mxu0
      %v5522 = vpop.f32.mrb[0].mxu0
      %v5523 = vadd.f32 0.0, %v5522
      %v5524 = vpop.f32.mrb[0].mxu0
      %5525 = vmatprep.mubr.bf16.mxu0 0
      %5526 = vmatmul.mubr.bf16.gmra.mrb[0].mxu0 %v4171
      %v5527 = vpop.f32.mrb[0].mxu0
      %v5528 = vadd.f32 0.0, %v5527
      %v5529 = vpop.f32.mrb[0].mxu0
      %v5530 = vpop.f32.mrb[0].mxu0
      %v5531 = vadd.f32 0.0, %v5530
      %v5532 = vpop.f32.mrb[0].mxu0
      %5533 = vmatprep.mubr.bf16.mxu0 0
      %5534 = vmatmul.mubr.bf16.gmra.mrb[0].mxu0 %v4790
      %v5535 = vpop.f32.mrb[0].mxu0
      %v5536 = vadd.f32 0.0, %v5535
      %v5537 = vpop.f32.mrb[0].mxu0
      %v5538 = vpop.f32.mrb[0].mxu0
      %v5539 = vadd.f32 0.0, %v5538
      %v5540 = vpop.f32.mrb[0].mxu0
      %5541 = vmatprep.mubr.bf16.mxu0 0
      %5542 = vmatmul.mubr.bf16.gmra.mrb[0].mxu0 %v4171
      %v5543 = vpop.f32.mrb[0].mxu0
      %v5544 = vadd.f32 0.0, %v5543
      %v5545 = vpop.f32.mrb[0].mxu0
      %v5546 = vpop.f32.mrb[0].mxu0
      %v5547 = vadd.f32 0.0, %v5546
      %v5548 = vpop.f32.mrb[0].mxu0
      %5549 = vdwg.mxu0
      %v5550 = vadd.f32 %v5352, %v5424
      %v5551 = vadd.f32 %v5353, %v5427
      %v5552 = vadd.f32 %v5354, %v5432
      %v5553 = vadd.f32 %v5355, %v5435
      %v5554 = vadd.f32 %v5356, %v5440
      %v5555 = vadd.f32 %v5357, %v5443
      %v5556 = vadd.f32 %v5358, %v5448
      %v5557 = vadd.f32 %v5359, %v5451
      %v5558 = vadd.f32 %v5360, %v5456
      %v5559 = vadd.f32 %v5361, %v5459
      %v5560 = vadd.f32 %v5362, %v5464
      %v5561 = vadd.f32 %v5363, %v5467
      %v5562 = vadd.f32 %v5364, %v5472
      %v5563 = vadd.f32 %v5365, %v5475
      %v5564 = vadd.f32 %v5366, %v5480
      %v5565 = vadd.f32 %v5367, %v5483
      %v5566 = vadd.f32 %v5368, %v5488
      %v5567 = vadd.f32 %v5369, %v5491
      %v5568 = vadd.f32 %v5370, %v5496
      %v5569 = vadd.f32 %v5371, %v5499
      %v5570 = vadd.f32 %v5372, %v5504
      %v5571 = vadd.f32 %v5373, %v5507
      %v5572 = vadd.f32 %v5374, %v5512
      %v5573 = vadd.f32 %v5375, %v5515
      %v5574 = vadd.f32 %v5376, %v5520
      %v5575 = vadd.f32 %v5377, %v5523
      %v5576 = vadd.f32 %v5378, %v5528
      %v5577 = vadd.f32 %v5379, %v5531
      %v5578 = vadd.f32 %v5380, %v5536
      %v5579 = vadd.f32 %v5381, %v5539
      %v5580 = vadd.f32 %v5382, %v5544
      %v5581 = vadd.f32 %v5383, %v5547
      %v5582 = vld [vmem:[%s4] sm:$0x1]
      %v5584 = vlaneseq
      %v5585 = vshrl.u32 %v5584, 7
      %v5586 = vsub.s32 0, %v5585
      %v5587 = vrot.slane %v5582, %v5586
      %v5589 = vadd.f32 %v5550, %v5587
      %v5590 = vadd.f32 %v5551, %v5587
      %v5591 = vadd.f32 %v5552, %v5587
      %v5592 = vadd.f32 %v5553, %v5587
      %v5593 = vadd.f32 %v5554, %v5587
      %v5594 = vadd.f32 %v5555, %v5587
      %v5595 = vadd.f32 %v5556, %v5587
      %v5596 = vadd.f32 %v5557, %v5587
      %v5597 = vadd.f32 %v5558, %v5587
      %v5598 = vadd.f32 %v5559, %v5587
      %v5599 = vadd.f32 %v5560, %v5587
      %v5600 = vadd.f32 %v5561, %v5587
      %v5601 = vadd.f32 %v5562, %v5587
      %v5602 = vadd.f32 %v5563, %v5587
      %v5603 = vadd.f32 %v5564, %v5587
      %v5604 = vadd.f32 %v5565, %v5587
      %v5605 = vadd.f32 %v5566, %v5587
      %v5606 = vadd.f32 %v5567, %v5587
      %v5607 = vadd.f32 %v5568, %v5587
      %v5608 = vadd.f32 %v5569, %v5587
      %v5609 = vadd.f32 %v5570, %v5587
      %v5610 = vadd.f32 %v5571, %v5587
      %v5611 = vadd.f32 %v5572, %v5587
      %v5612 = vadd.f32 %v5573, %v5587
      %v5613 = vadd.f32 %v5574, %v5587
      %v5614 = vadd.f32 %v5575, %v5587
      %v5615 = vadd.f32 %v5576, %v5587
      %v5616 = vadd.f32 %v5577, %v5587
      %v5617 = vadd.f32 %v5578, %v5587
      %v5618 = vadd.f32 %v5579, %v5587
      %v5619 = vadd.f32 %v5580, %v5587
      %v5620 = vadd.f32 %v5581, %v5587
      %5621 = vxpose.xlu0.b32.start [1/16] %v5589, 128
      %5622 = vxpose.xlu0.b32.cont [2/16] %v5590, 128
      %5623 = vxpose.xlu0.b32.cont [3/16] %v5591, 128
      %5624 = vxpose.xlu0.b32.cont [4/16] %v5592, 128
      %5625 = vxpose.xlu0.b32.cont [5/16] %v5593, 128
      %5626 = vxpose.xlu0.b32.cont [6/16] %v5594, 128
      %5627 = vxpose.xlu0.b32.cont [7/16] %v5595, 128
      %5628 = vxpose.xlu0.b32.cont [8/16] %v5596, 128
      %5629 = vxpose.xlu0.b32.cont [9/16] %v5597, 128
      %5630 = vxpose.xlu0.b32.cont [10/16] %v5598, 128
      %5631 = vxpose.xlu0.b32.cont [11/16] %v5599, 128
      %5632 = vxpose.xlu0.b32.cont [12/16] %v5600, 128
      %5633 = vxpose.xlu0.b32.cont [13/16] %v5601, 128
      %5634 = vxpose.xlu0.b32.cont [14/16] %v5602, 128
      %5635 = vxpose.xlu0.b32.cont [15/16] %v5603, 128
      %5636 = vxpose.xlu0.b32.end [16/16] %v5604, 128
      %v5637 = vpop.trf.xlu0
      %v5638 = vpop.trf.xlu0
      %v5639 = vpop.trf.xlu0
      %v5640 = vpop.trf.xlu0
      %v5641 = vpop.trf.xlu0
      %v5642 = vpop.trf.xlu0
      %v5643 = vpop.trf.xlu0
      %v5644 = vpop.trf.xlu0
      %v5645 = vpop.trf.xlu0
      %v5646 = vpop.trf.xlu0
      %v5647 = vpop.trf.xlu0
      %v5648 = vpop.trf.xlu0
      %v5649 = vpop.trf.xlu0
      %v5650 = vpop.trf.xlu0
      %v5651 = vpop.trf.xlu0
      %v5652 = vpop.trf.xlu0
      %5653 = vxpose.xlu0.b32.start [1/16] %v5605, 128
      %5654 = vxpose.xlu0.b32.cont [2/16] %v5606, 128
      %5655 = vxpose.xlu0.b32.cont [3/16] %v5607, 128
      %5656 = vxpose.xlu0.b32.cont [4/16] %v5608, 128
      %5657 = vxpose.xlu0.b32.cont [5/16] %v5609, 128
      %5658 = vxpose.xlu0.b32.cont [6/16] %v5610, 128
      %5659 = vxpose.xlu0.b32.cont [7/16] %v5611, 128
      %5660 = vxpose.xlu0.b32.cont [8/16] %v5612, 128
      %5661 = vxpose.xlu0.b32.cont [9/16] %v5613, 128
      %5662 = vxpose.xlu0.b32.cont [10/16] %v5614, 128
      %5663 = vxpose.xlu0.b32.cont [11/16] %v5615, 128
      %5664 = vxpose.xlu0.b32.cont [12/16] %v5616, 128
      %5665 = vxpose.xlu0.b32.cont [13/16] %v5617, 128
      %5666 = vxpose.xlu0.b32.cont [14/16] %v5618, 128
      %5667 = vxpose.xlu0.b32.cont [15/16] %v5619, 128
      %5668 = vxpose.xlu0.b32.end [16/16] %v5620, 128
      %v5669 = vpop.trf.xlu0
      %v5670 = vpop.trf.xlu0
      %v5671 = vpop.trf.xlu0
      %v5672 = vpop.trf.xlu0
      %v5673 = vpop.trf.xlu0
      %v5674 = vpop.trf.xlu0
      %v5675 = vpop.trf.xlu0
      %v5676 = vpop.trf.xlu0
      %v5677 = vpop.trf.xlu0
      %v5678 = vpop.trf.xlu0
      %v5679 = vpop.trf.xlu0
      %v5680 = vpop.trf.xlu0
      %v5681 = vpop.trf.xlu0
      %v5682 = vpop.trf.xlu0
      %v5683 = vpop.trf.xlu0
      %v5684 = vpop.trf.xlu0
      %v5685 = vadd.f32 %v5637, %v5669
      %5686 = vadd.xlane.f32.xlu0 %v5685
      %v5687 = vpop.xlane.xlu0 %5686
      %v5688 = vmul.f32 %v5687, %v2952
      %v5689 = vsub.f32 %v5637, %v5688
      %v5690 = vsub.f32 %v5669, %v5688
      %v5691 = vmul.f32 %v5689, %v5689
      %v5692 = vmul.f32 %v5690, %v5690
      %v5693 = vadd.f32 %v5691, %v5692
      %5694 = vadd.xlane.f32.xlu0 %v5693
      %v5695 = vpop.xlane.xlu0 %5694
      %v5696 = vmul.f32 %v5695, %v3087
      %v5697 = vrsqrt.pop %v5696
      %v5698 = vmul.f32 %v5696, %v5697
      %vm5699 = vcmp.eq.f32.partialorder %v5696, inf
      %v5700 = vsel %vm5699, %v5696, %v5698
      %vm5701 = vcmp.eq.f32.partialorder %v5696, 0.0
      %v5702 = vand.u32 %v5696, 2147483648
      %v5703 = vsel %vm5701, %v5702, %v5700
      %v5704 = vadd.f32 %v5703, 1e-05
      %v5705 = vrcp.pop %v5704
      %v5706 = vmul.f32 %v399, %v5705
      %v5707 = vmul.f32 %v5688, %v5706
      %v5708 = vsub.f32 %v398, %v5707
      %5710 = vset.pattern.permute.xlu0 0
      %5711 = vperm.xlu0 %5710, %v5706
      %v5712 = vpop.permute.xlu0 %5711
      %v5714 = vmul.f32 %v5637, %v5712
      %v5715 = vmul.f32 %v5669, %v5712
      %5717 = vset.pattern.permute.xlu0 0
      %5718 = vperm.xlu0 %5717, %v5708
      %v5719 = vpop.permute.xlu0 %5718
      %v5721 = vadd.f32 %v5714, %v5719
      %v5722 = vadd.f32 %v5715, %v5719
      %v5723 = vadd.f32 %v5721, %v400
      %v5724 = vadd.f32 %v5722, %v401
      %5725 = vst [vmem:[%s394] sm:$0xff] %v5723
      %5726 = vst [vmem:[%s394 + $0x8] sm:$0xff] %v5724
      %p5727 = scmp.lt.s32.totalorder %s20, 1
      %s5728 = scalar_select %p5727, %s20, 1
      %s5729 = smul.addr %s5728, 2
      %s5730 = smul.addr %s5729, 8
      %s5731 = scalar_lea.vmem %s9, %s5730
      // Predicated region
      $region57: #{adaptive_residual_block.1} parent=55 // pred_check
        %p5732 = pneg %p252
      $region58: #{adaptive_residual_block.1} parent=55 // pred_check_branch
        %5734 = sbr.rel (%p5732) target = $region60
      $region59: #{adaptive_residual_block.1} parent=55 // pred_region
        _
      $region60: #{adaptive_residual_block.1} parent=55 // pred_fallthru
        _
    $region56: #{adaptive_residual_block.1} parent=5 // pred_fallthru
      _
    %p5735 = scmp.le.s32.totalorder 2, %s15
    // Predicated region
    $region61: #{adaptive_residual_block.1} parent=5 // pred_check
      %p5736 = pneg %p5735
    $region62: #{adaptive_residual_block.1} parent=5 // pred_check_branch
      %5738 = sbr.rel (%p5736) target = $region64
    $region63: #{adaptive_residual_block.1} parent=5 // pred_region
      %s5739 = ssub.s32 %s15, 2
      // Predicated region
      $region65: #{adaptive_residual_block.1} parent=63 // pred_check
        %p5740 = pneg %p258
      $region66: #{adaptive_residual_block.1} parent=63 // pred_check_branch
        %5742 = sbr.rel (%p5740) target = $region68
      $region67: #{adaptive_residual_block.1} parent=63 // pred_region
        %p5743 = scmp.lt.s32.totalorder %s21, 1
        %s5744 = scalar_select %p5743, %s21, 1
        %s5745 = smul.addr %s5744, 2
        %s5746 = smul.addr %s5745, 8
        %s5747 = scalar_lea.vmem %s9, %s5746
      $region68: #{adaptive_residual_block.1} parent=63 // pred_fallthru
        _
    $region64: #{adaptive_residual_block.1} parent=5 // pred_fallthru
      _
  $region6: #{adaptive_residual_block.1} parent=0 // loop_footer
    %s19 = sadd.s32 1, %s15
  $region7: #{adaptive_residual_block.1} parent=0 // loop_footer_branch
    %14 = sbr.rel target = $region3
  $region8: #{adaptive_residual_block.1} parent=0 // loop_exit
    _

</llo_original>
